<compile_context>
chip_gen: v5e
topology: v5e:2x2
jax: 0.10.0
libtpu: 0.0.40
codegen_flags: <defaults>
</compile_context>

<pallas_src>
import jax
import jax.numpy as jnp
from jax.experimental import pallas as pl
from jax.experimental.pallas import tpu as pltpu


def _basic_block_kernel(x_ref, w1_ref, b1_ref, w2_ref, b2_ref, o_ref, xpad_ref):
    """One grid step = one batch element.  Everything after the input DMA stays in VMEM.

    x_ref:    (1, H, W, C)   NHWC input tile (also the residual)
    w1_ref:   (9*C, C)       conv1 weights, flattened (ky,kx,cin)->rows, BN1 scale folded in
    b1_ref:   (1, C)         folded BN1 bias
    w2_ref:   (9*C, C)       conv2 weights, BN2 scale folded in
    b2_ref:   (1, C)         folded BN2 bias
    o_ref:    (1, H, W, C)   output tile
    xpad_ref: (H+2, W+2, C)  f32 VMEM scratch, halo-padded, reused for both convs
    """
    H, W, C = o_ref.shape[1], o_ref.shape[2], o_ref.shape[3]

    def conv3x3_im2col(w_flat):
        # Build the (H*W, 9*C) im2col patch matrix from the halo-padded scratch
        # and contract against the flattened weights in ONE MXU matmul.
        taps = []
        for dy in range(3):
            for dx in range(3):
                taps.append(xpad_ref[dy:dy + H, dx:dx + W, :].reshape(H * W, C))
        patches = jnp.concatenate(taps, axis=-1)          # (H*W, 9*C)
        return jnp.dot(patches, w_flat, preferred_element_type=jnp.float32)

    # Zero the halo in VMEM (replaces the wrapper-side jnp.pad HBM round-trip)
    # and place the input tile in the interior.
    xpad_ref[...] = jnp.zeros_like(xpad_ref)
    x = x_ref[0].astype(jnp.float32)                      # (H, W, C), reused as residual
    xpad_ref[1:H + 1, 1:W + 1, :] = x

    # conv1 (BN1 scale already folded into w1) -> +bias -> ReLU20.
    mid = jnp.clip(conv3x3_im2col(w1_ref[...]) + b1_ref[0], 0.0, 20.0)

    # Stage the intermediate back into the same halo-padded scratch
    # (halo stays zero); it never round-trips through HBM.
    xpad_ref[1:H + 1, 1:W + 1, :] = mid.reshape(H, W, C)

    # conv2 (BN2 scale folded) -> +bias -> +residual -> ReLU20.
    out = conv3x3_im2col(w2_ref[...]) + b2_ref[0]
    out = out + x.reshape(H * W, C)
    o_ref[0] = jnp.clip(out, 0.0, 20.0).reshape(H, W, C).astype(o_ref.dtype)


def _fold_bn(gamma, beta, mean, var, eps=1e-5):
    scale = gamma * jax.lax.rsqrt(var + eps)
    return scale, beta - mean * scale


def basic_block_forward_nhwc(x_nhwc, params):
    """BasicBlock forward, NHWC in / NHWC out (stride=1, no downsample)."""
    B, H, W, C = x_nhwc.shape
    assert params["w1"].shape == (3, 3, C, C), "BasicBlock w/o downsample needs Cin == Cout"
    assert params["w2"].shape == (3, 3, C, C)

    s1, b1 = _fold_bn(params["bn1_gamma"], params["bn1_beta"],
                      params["bn1_mean"], params["bn1_var"])
    s2, b2 = _fold_bn(params["bn2_gamma"], params["bn2_beta"],
                      params["bn2_mean"], params["bn2_var"])

    # Fold BN scale into the conv weights (per output channel) and flatten
    # (3, 3, Cin, Cout) -> (9*Cin, Cout) for the single im2col matmul.
    w1 = (params["w1"] * s1[None, None, None, :]).reshape(9 * C, C).astype(jnp.float32)
    w2 = (params["w2"] * s2[None, None, None, :]).reshape(9 * C, C).astype(jnp.float32)
    b1 = b1.reshape(1, C).astype(jnp.float32)
    b2 = b2.reshape(1, C).astype(jnp.float32)

    return pl.pallas_call(
        _basic_block_kernel,
        out_shape=jax.ShapeDtypeStruct((B, H, W, C), x_nhwc.dtype),
        grid_spec=pltpu.PrefetchScalarGridSpec(
            num_scalar_prefetch=0,
            grid=(B,),
            in_specs=[
                pl.BlockSpec((1, H, W, C), lambda b: (b, 0, 0, 0)),
                pl.BlockSpec((9 * C, C), lambda b: (0, 0)),   # constant index_map -> resident
                pl.BlockSpec((1, C), lambda b: (0, 0)),
                pl.BlockSpec((9 * C, C), lambda b: (0, 0)),
                pl.BlockSpec((1, C), lambda b: (0, 0)),
            ],
            out_specs=pl.BlockSpec((1, H, W, C), lambda b: (b, 0, 0, 0)),
            scratch_shapes=[pltpu.VMEM((H + 2, W + 2, C), jnp.float32)],
        ),
        compiler_params=pltpu.CompilerParams(
            dimension_semantics=("parallel",)),   # B>=2 feeds both v7x TensorCores
    )(x_nhwc, w1, b1, w2, b2)


def basic_block_forward(x_nchw, params):
    """NCHW adapter matching the PyTorch module interface.

    Prefer basic_block_forward_nhwc and keeping the model NHWC end-to-end; the
    two transposes here are only for parity with the NCHW reference/spec.
    """
    x = jnp.transpose(x_nchw, (0, 2, 3, 1))      # NCHW -> NHWC
    out = basic_block_forward_nhwc(x, params)
    return jnp.transpose(out, (0, 3, 1, 2))      # NHWC -> NCHW


def _reference_forward(x_nchw, params):
    """Plain-JAX reference (lax conv) for a correctness check."""
    def conv(x, w_hwio):
        return jax.lax.conv_general_dilated(
            x, w_hwio, window_strides=(1, 1), padding=((1, 1), (1, 1)),
            dimension_numbers=("NCHW", "HWIO", "NCHW"))

    def bn(x, g, b, m, v, eps=1e-5):
        g, b, m, v = (a.reshape(1, -1, 1, 1) for a in (g, b, m, v))
        return (x - m) * g * jax.lax.rsqrt(v + eps) + b

    relu20 = lambda x: jnp.clip(x, 0.0, 20.0)
    out = relu20(bn(conv(x_nchw, params["w1"]), params["bn1_gamma"],
                    params["bn1_beta"], params["bn1_mean"], params["bn1_var"]))
    out = bn(conv(out, params["w2"]), params["bn2_gamma"],
             params["bn2_beta"], params["bn2_mean"], params["bn2_var"])
    return relu20(out + x_nchw)


if __name__ == "__main__":
    B, C, H, W = 2, 4, 16, 16  # in_channels = channels = 4, stride=1, no downsample

    key = jax.random.PRNGKey(0)
    kx, kw1, kw2, kg1, kb1, kg2, kb2 = jax.random.split(key, 7)

    x = jax.random.normal(kx, (B, C, H, W), dtype=jnp.float32)

    # Deterministic parameter init. Conv weights stored HWIO (3, 3, Cin, Cout).
    params = {
        "w1": 0.1 * jax.random.normal(kw1, (3, 3, C, C), dtype=jnp.float32),
        "w2": 0.1 * jax.random.normal(kw2, (3, 3, C, C), dtype=jnp.float32),
        "bn1_gamma": 1.0 + 0.1 * jax.random.normal(kg1, (C,), dtype=jnp.float32),
        "bn1_beta": 0.1 * jax.random.normal(kb1, (C,), dtype=jnp.float32),
        "bn1_mean": jnp.zeros((C,), jnp.float32),
        "bn1_var": jnp.ones((C,), jnp.float32),
        "bn2_gamma": 1.0 + 0.1 * jax.random.normal(kg2, (C,), dtype=jnp.float32),
        "bn2_beta": 0.1 * jax.random.normal(kb2, (C,), dtype=jnp.float32),
        "bn2_mean": jnp.zeros((C,), jnp.float32),
        "bn2_var": jnp.ones((C,), jnp.float32),
    }

    out = jax.block_until_ready(basic_block_forward(x, params))
    ref = jax.block_until_ready(_reference_forward(x, params))

    assert out.shape == (B, C, H, W)
    assert jnp.allclose(out, ref, atol=1e-4, rtol=1e-4)
    print("KERNEL_OK")
</pallas_src>

<mosaic_0001>
module attributes {stable_mosaic.version = 11 : i64} {
  func.func @_basic_block_kernel(%arg0: i32, %arg1: memref<1x16x16x4xf32, #tpu.memory_space<vmem>>, %arg2: memref<36x4xf32, #tpu.memory_space<vmem>>, %arg3: memref<1x4xf32, #tpu.memory_space<vmem>>, %arg4: memref<36x4xf32, #tpu.memory_space<vmem>>, %arg5: memref<1x4xf32, #tpu.memory_space<vmem>>, %arg6: memref<1x16x16x4xf32, #tpu.memory_space<vmem>>, %arg7: memref<18x18x4xf32, #tpu.memory_space<vmem>>) attributes {dimension_semantics = [#tpu.dimension_semantics<parallel>], iteration_bounds = array<i64: 2>, scalar_prefetch = 0 : i64, scratch_operands = 1 : i64, tpu.core_type = #tpu.core_type<tc>, window_params = [{transform_indices = @transform_0, window_bounds = array<i64: 1, 16, 16, 4>}, {pipeline_mode = #tpu.pipeline_mode<synchronous>, transform_indices = @transform_1, window_bounds = array<i64: 36, 4>}, {pipeline_mode = #tpu.pipeline_mode<synchronous>, transform_indices = @transform_2, window_bounds = array<i64: 1, 4>}, {pipeline_mode = #tpu.pipeline_mode<synchronous>, transform_indices = @transform_3, window_bounds = array<i64: 36, 4>}, {pipeline_mode = #tpu.pipeline_mode<synchronous>, transform_indices = @transform_4, window_bounds = array<i64: 1, 4>}, {transform_indices = @transform_5, window_bounds = array<i64: 1, 16, 16, 4>}]} {
    %cst = arith.constant 0.000000e+00 : f32
    %0 = vector.broadcast %cst : f32 to vector<18x18x4xf32>
    %c0 = arith.constant 0 : index
    %c0_0 = arith.constant 0 : index
    %c0_1 = arith.constant 0 : index
    %1 = vector.load %arg7[%c0, %c0_0, %c0_1] : memref<18x18x4xf32, #tpu.memory_space<vmem>>, vector<18x18x4xf32>
    tpu.vector_store %arg7[%c0, %c0_0, %c0_1], %0 {strides = array<i32>} : memref<18x18x4xf32, #tpu.memory_space<vmem>>, vector<18x18x4xf32>,
    %c0_2 = arith.constant 0 : index
    %c0_3 = arith.constant 0 : index
    %c0_4 = arith.constant 0 : index
    %c0_5 = arith.constant 0 : index
    %2 = vector.load %arg1[%c0_2, %c0_3, %c0_4, %c0_5] : memref<1x16x16x4xf32, #tpu.memory_space<vmem>>, vector<1x16x16x4xf32>
    %3 = vector.shape_cast %2 : vector<1x16x16x4xf32> to vector<16x16x4xf32>
    %c1 = arith.constant 1 : index
    %c1_6 = arith.constant 1 : index
    %c0_7 = arith.constant 0 : index
    %4 = vector.load %arg7[%c1, %c1_6, %c0_7] : memref<18x18x4xf32, #tpu.memory_space<vmem>>, vector<16x16x4xf32>
    tpu.vector_store %arg7[%c1, %c1_6, %c0_7], %3 {strides = array<i32>} : memref<18x18x4xf32, #tpu.memory_space<vmem>>, vector<16x16x4xf32>,
    %c0_8 = arith.constant 0 : index
    %c0_9 = arith.constant 0 : index
    %5 = vector.load %arg2[%c0_8, %c0_9] : memref<36x4xf32, #tpu.memory_space<vmem>>, vector<36x4xf32>
    %c0_10 = arith.constant 0 : index
    %c0_11 = arith.constant 0 : index
    %c0_12 = arith.constant 0 : index
    %6 = vector.load %arg7[%c0_10, %c0_11, %c0_12] : memref<18x18x4xf32, #tpu.memory_space<vmem>>, vector<16x16x4xf32>
    %7 = vector.shape_cast %6 : vector<16x16x4xf32> to vector<256x4xf32>
    %c0_13 = arith.constant 0 : index
    %c1_14 = arith.constant 1 : index
    %c0_15 = arith.constant 0 : index
    %8 = vector.load %arg7[%c0_13, %c1_14, %c0_15] : memref<18x18x4xf32, #tpu.memory_space<vmem>>, vector<16x16x4xf32>
    %9 = vector.shape_cast %8 : vector<16x16x4xf32> to vector<256x4xf32>
    %c0_16 = arith.constant 0 : index
    %c2 = arith.constant 2 : index
    %c0_17 = arith.constant 0 : index
    %10 = vector.load %arg7[%c0_16, %c2, %c0_17] : memref<18x18x4xf32, #tpu.memory_space<vmem>>, vector<16x16x4xf32>
    %11 = vector.shape_cast %10 : vector<16x16x4xf32> to vector<256x4xf32>
    %c1_18 = arith.constant 1 : index
    %c0_19 = arith.constant 0 : index
    %c0_20 = arith.constant 0 : index
    %12 = vector.load %arg7[%c1_18, %c0_19, %c0_20] : memref<18x18x4xf32, #tpu.memory_space<vmem>>, vector<16x16x4xf32>
    %13 = vector.shape_cast %12 : vector<16x16x4xf32> to vector<256x4xf32>
    %c1_21 = arith.constant 1 : index
    %c1_22 = arith.constant 1 : index
    %c0_23 = arith.constant 0 : index
    %14 = vector.load %arg7[%c1_21, %c1_22, %c0_23] : memref<18x18x4xf32, #tpu.memory_space<vmem>>, vector<16x16x4xf32>
    %15 = vector.shape_cast %14 : vector<16x16x4xf32> to vector<256x4xf32>
    %c1_24 = arith.constant 1 : index
    %c2_25 = arith.constant 2 : index
    %c0_26 = arith.constant 0 : index
    %16 = vector.load %arg7[%c1_24, %c2_25, %c0_26] : memref<18x18x4xf32, #tpu.memory_space<vmem>>, vector<16x16x4xf32>
    %17 = vector.shape_cast %16 : vector<16x16x4xf32> to vector<256x4xf32>
    %c2_27 = arith.constant 2 : index
    %c0_28 = arith.constant 0 : index
    %c0_29 = arith.constant 0 : index
    %18 = vector.load %arg7[%c2_27, %c0_28, %c0_29] : memref<18x18x4xf32, #tpu.memory_space<vmem>>, vector<16x16x4xf32>
    %19 = vector.shape_cast %18 : vector<16x16x4xf32> to vector<256x4xf32>
    %c2_30 = arith.constant 2 : index
    %c1_31 = arith.constant 1 : index
    %c0_32 = arith.constant 0 : index
    %20 = vector.load %arg7[%c2_30, %c1_31, %c0_32] : memref<18x18x4xf32, #tpu.memory_space<vmem>>, vector<16x16x4xf32>
    %21 = vector.shape_cast %20 : vector<16x16x4xf32> to vector<256x4xf32>
    %c2_33 = arith.constant 2 : index
    %c2_34 = arith.constant 2 : index
    %c0_35 = arith.constant 0 : index
    %22 = vector.load %arg7[%c2_33, %c2_34, %c0_35] : memref<18x18x4xf32, #tpu.memory_space<vmem>>, vector<16x16x4xf32>
    %23 = vector.shape_cast %22 : vector<16x16x4xf32> to vector<256x4xf32>
    %24 = tpu.concatenate %7, %9, %11, %13, %15, %17, %19, %21, %23 in 1 : vector<256x4xf32>, vector<256x4xf32>, vector<256x4xf32>, vector<256x4xf32>, vector<256x4xf32>, vector<256x4xf32>, vector<256x4xf32>, vector<256x4xf32>, vector<256x4xf32> -> vector<256x36xf32>
    %cst_36 = arith.constant dense<0.000000e+00> : vector<256x4xf32>
    %25 = tpu.matmul %24, %5, %cst_36 {dimension_numbers = #tpu.dot_dimension_numbers<[1], [0], [0], [1], [0, 0, 1, 1], [], []>} : vector<256x36xf32>, vector<36x4xf32>, vector<256x4xf32> -> vector<256x4xf32>
    %c0_37 = arith.constant 0 : index
    %c0_38 = arith.constant 0 : index
    %26 = vector.load %arg3[%c0_37, %c0_38] : memref<1x4xf32, #tpu.memory_space<vmem>>, vector<1x4xf32>
    %27 = vector.shape_cast %26 : vector<1x4xf32> to vector<4xf32>
    %28 = vector.shape_cast %27 : vector<4xf32> to vector<1x4xf32>
    %29 = vector.broadcast %28 : vector<1x4xf32> to vector<256x4xf32>
    %30 = arith.addf %25, %29 : vector<256x4xf32>
    %cst_39 = arith.constant 0.000000e+00 : f32
    %cst_40 = arith.constant 2.000000e+01 : f32
    %31 = vector.broadcast %cst_39 : f32 to vector<256x4xf32>
    %32 = arith.maximumf %31, %30 : vector<256x4xf32>
    %33 = vector.broadcast %cst_40 : f32 to vector<256x4xf32>
    %34 = arith.minimumf %33, %32 : vector<256x4xf32>
    %35 = vector.shape_cast %34 : vector<256x4xf32> to vector<16x16x4xf32>
    %c1_41 = arith.constant 1 : index
    %c1_42 = arith.constant 1 : index
    %c0_43 = arith.constant 0 : index
    %36 = vector.load %arg7[%c1_41, %c1_42, %c0_43] : memref<18x18x4xf32, #tpu.memory_space<vmem>>, vector<16x16x4xf32>
    tpu.vector_store %arg7[%c1_41, %c1_42, %c0_43], %35 {strides = array<i32>} : memref<18x18x4xf32, #tpu.memory_space<vmem>>, vector<16x16x4xf32>,
    %c0_44 = arith.constant 0 : index
    %c0_45 = arith.constant 0 : index
    %37 = vector.load %arg4[%c0_44, %c0_45] : memref<36x4xf32, #tpu.memory_space<vmem>>, vector<36x4xf32>
    %c0_46 = arith.constant 0 : index
    %c0_47 = arith.constant 0 : index
    %c0_48 = arith.constant 0 : index
    %38 = vector.load %arg7[%c0_46, %c0_47, %c0_48] : memref<18x18x4xf32, #tpu.memory_space<vmem>>, vector<16x16x4xf32>
    %39 = vector.shape_cast %38 : vector<16x16x4xf32> to vector<256x4xf32>
    %c0_49 = arith.constant 0 : index
    %c1_50 = arith.constant 1 : index
    %c0_51 = arith.constant 0 : index
    %40 = vector.load %arg7[%c0_49, %c1_50, %c0_51] : memref<18x18x4xf32, #tpu.memory_space<vmem>>, vector<16x16x4xf32>
    %41 = vector.shape_cast %40 : vector<16x16x4xf32> to vector<256x4xf32>
    %c0_52 = arith.constant 0 : index
    %c2_53 = arith.constant 2 : index
    %c0_54 = arith.constant 0 : index
    %42 = vector.load %arg7[%c0_52, %c2_53, %c0_54] : memref<18x18x4xf32, #tpu.memory_space<vmem>>, vector<16x16x4xf32>
    %43 = vector.shape_cast %42 : vector<16x16x4xf32> to vector<256x4xf32>
    %c1_55 = arith.constant 1 : index
    %c0_56 = arith.constant 0 : index
    %c0_57 = arith.constant 0 : index
    %44 = vector.load %arg7[%c1_55, %c0_56, %c0_57] : memref<18x18x4xf32, #tpu.memory_space<vmem>>, vector<16x16x4xf32>
    %45 = vector.shape_cast %44 : vector<16x16x4xf32> to vector<256x4xf32>
    %c1_58 = arith.constant 1 : index
    %c1_59 = arith.constant 1 : index
    %c0_60 = arith.constant 0 : index
    %46 = vector.load %arg7[%c1_58, %c1_59, %c0_60] : memref<18x18x4xf32, #tpu.memory_space<vmem>>, vector<16x16x4xf32>
    %47 = vector.shape_cast %46 : vector<16x16x4xf32> to vector<256x4xf32>
    %c1_61 = arith.constant 1 : index
    %c2_62 = arith.constant 2 : index
    %c0_63 = arith.constant 0 : index
    %48 = vector.load %arg7[%c1_61, %c2_62, %c0_63] : memref<18x18x4xf32, #tpu.memory_space<vmem>>, vector<16x16x4xf32>
    %49 = vector.shape_cast %48 : vector<16x16x4xf32> to vector<256x4xf32>
    %c2_64 = arith.constant 2 : index
    %c0_65 = arith.constant 0 : index
    %c0_66 = arith.constant 0 : index
    %50 = vector.load %arg7[%c2_64, %c0_65, %c0_66] : memref<18x18x4xf32, #tpu.memory_space<vmem>>, vector<16x16x4xf32>
    %51 = vector.shape_cast %50 : vector<16x16x4xf32> to vector<256x4xf32>
    %c2_67 = arith.constant 2 : index
    %c1_68 = arith.constant 1 : index
    %c0_69 = arith.constant 0 : index
    %52 = vector.load %arg7[%c2_67, %c1_68, %c0_69] : memref<18x18x4xf32, #tpu.memory_space<vmem>>, vector<16x16x4xf32>
    %53 = vector.shape_cast %52 : vector<16x16x4xf32> to vector<256x4xf32>
    %c2_70 = arith.constant 2 : index
    %c2_71 = arith.constant 2 : index
    %c0_72 = arith.constant 0 : index
    %54 = vector.load %arg7[%c2_70, %c2_71, %c0_72] : memref<18x18x4xf32, #tpu.memory_space<vmem>>, vector<16x16x4xf32>
    %55 = vector.shape_cast %54 : vector<16x16x4xf32> to vector<256x4xf32>
    %56 = tpu.concatenate %39, %41, %43, %45, %47, %49, %51, %53, %55 in 1 : vector<256x4xf32>, vector<256x4xf32>, vector<256x4xf32>, vector<256x4xf32>, vector<256x4xf32>, vector<256x4xf32>, vector<256x4xf32>, vector<256x4xf32>, vector<256x4xf32> -> vector<256x36xf32>
    %cst_73 = arith.constant dense<0.000000e+00> : vector<256x4xf32>
    %57 = tpu.matmul %56, %37, %cst_73 {dimension_numbers = #tpu.dot_dimension_numbers<[1], [0], [0], [1], [0, 0, 1, 1], [], []>} : vector<256x36xf32>, vector<36x4xf32>, vector<256x4xf32> -> vector<256x4xf32>
    %c0_74 = arith.constant 0 : index
    %c0_75 = arith.constant 0 : index
    %58 = vector.load %arg5[%c0_74, %c0_75] : memref<1x4xf32, #tpu.memory_space<vmem>>, vector<1x4xf32>
    %59 = vector.shape_cast %58 : vector<1x4xf32> to vector<4xf32>
    %60 = vector.shape_cast %59 : vector<4xf32> to vector<1x4xf32>
    %61 = vector.broadcast %60 : vector<1x4xf32> to vector<256x4xf32>
    %62 = arith.addf %57, %61 : vector<256x4xf32>
    %63 = vector.shape_cast %3 : vector<16x16x4xf32> to vector<256x4xf32>
    %64 = arith.addf %62, %63 : vector<256x4xf32>
    %cst_76 = arith.constant 0.000000e+00 : f32
    %cst_77 = arith.constant 2.000000e+01 : f32
    %65 = vector.broadcast %cst_76 : f32 to vector<256x4xf32>
    %66 = arith.maximumf %65, %64 : vector<256x4xf32>
    %67 = vector.broadcast %cst_77 : f32 to vector<256x4xf32>
    %68 = arith.minimumf %67, %66 : vector<256x4xf32>
    %69 = vector.shape_cast %68 : vector<256x4xf32> to vector<16x16x4xf32>
    %c0_78 = arith.constant 0 : index
    %c0_79 = arith.constant 0 : index
    %c0_80 = arith.constant 0 : index
    %c0_81 = arith.constant 0 : index
    %70 = vector.load %arg6[%c0_78, %c0_79, %c0_80, %c0_81] : memref<1x16x16x4xf32, #tpu.memory_space<vmem>>, vector<1x16x16x4xf32>
    %71 = vector.shape_cast %70 : vector<1x16x16x4xf32> to vector<16x16x4xf32>
    %72 = vector.shape_cast %69 : vector<16x16x4xf32> to vector<1x16x16x4xf32>
    tpu.vector_store %arg6[%c0_78, %c0_79, %c0_80, %c0_81], %72 {strides = array<i32>} : memref<1x16x16x4xf32, #tpu.memory_space<vmem>>, vector<1x16x16x4xf32>,
    return
  }
  func.func @transform_0(%arg0: i32) -> (i32, i32, i32, i32) {
    %c0_i32 = arith.constant 0 : i32
    %c0_i32_0 = arith.constant 0 : i32
    %c0_i32_1 = arith.constant 0 : i32
    %c0_i32_2 = arith.constant 0 : i32
    return %arg0, %c0_i32, %c0_i32_0, %c0_i32_1 : i32, i32, i32, i32
  }
  func.func @transform_1(%arg0: i32) -> (i32, i32) {
    %c0_i32 = arith.constant 0 : i32
    %c0_i32_0 = arith.constant 0 : i32
    %c0_i32_1 = arith.constant 0 : i32
    return %c0_i32, %c0_i32_0 : i32, i32
  }
  func.func @transform_2(%arg0: i32) -> (i32, i32) {
    %c0_i32 = arith.constant 0 : i32
    %c0_i32_0 = arith.constant 0 : i32
    %c0_i32_1 = arith.constant 0 : i32
    return %c0_i32, %c0_i32_0 : i32, i32
  }
  func.func @transform_3(%arg0: i32) -> (i32, i32) {
    %c0_i32 = arith.constant 0 : i32
    %c0_i32_0 = arith.constant 0 : i32
    %c0_i32_1 = arith.constant 0 : i32
    return %c0_i32, %c0_i32_0 : i32, i32
  }
  func.func @transform_4(%arg0: i32) -> (i32, i32) {
    %c0_i32 = arith.constant 0 : i32
    %c0_i32_0 = arith.constant 0 : i32
    %c0_i32_1 = arith.constant 0 : i32
    return %c0_i32, %c0_i32_0 : i32, i32
  }
  func.func @transform_5(%arg0: i32) -> (i32, i32, i32, i32) {
    %c0_i32 = arith.constant 0 : i32
    %c0_i32_0 = arith.constant 0 : i32
    %c0_i32_1 = arith.constant 0 : i32
    %c0_i32_2 = arith.constant 0 : i32
    return %arg0, %c0_i32, %c0_i32_0, %c0_i32_1 : i32, i32, i32, i32
  }
}

</mosaic_0001>

<llo_original>
// kernel: tpu_custom_call.1
$region0: #{tpu_custom_call.1}
  #allocation0 [shape = 'u32[]', space=smem, size = 0x4, offset = 0x4, fixed_abs, tag = 'smem constant byte address 0x4 - core index']
  #allocation1 [shape = 'u32[72,128]{1,0:T(1,128)}', space=vmem, size = 0x9000, scoped, tag = 'internal scratch']
  #allocation2 [shape = 'f32[18,18,4]{2,1,0:T(8,128)}', space=vmem, size = 0x36000, scoped, tag = 'scratch operand']
  %s0 = inlined_call_operand.vmem [shape: f32[2,16,16,4], index: 0, kind: input, shape index: {}]
  %s1 = inlined_call_operand.vmem [shape: f32[36,4], index: 1, kind: input, shape index: {}]
  %s2 = inlined_call_operand.vmem [shape: f32[1,4], index: 2, kind: input, shape index: {}]
  %s3 = inlined_call_operand.vmem [shape: f32[36,4], index: 3, kind: input, shape index: {}]
  %s4 = inlined_call_operand.vmem [shape: f32[1,4], index: 4, kind: input, shape index: {}]
  %s5 = inlined_call_operand.vmem [shape: f32[2,16,16,4], index: 5, kind: output, shape index: {}]
  %s6 = sld [smem:[#allocation0]]
  $region53: #{tpu_custom_call.1} parent=0
    _
  %s8 = ssub.s32 1, %s6
  %s9 = scalar_select 0, %s8, %s6
  loop: start=0, step=1, limit=4
  $region2: #{tpu_custom_call.1} parent=0 // loop_pre_header
    _
  $region3: #{tpu_custom_call.1} parent=0 // loop_header
    %s11 = sphi 0, %s15
    %p12 = scmp.ge.s32.totalorder %s11, 4
    %s21 = sphi 0, %s23
    %s24 = sphi 0, %s21
    %s25 = sphi 0, %s24
    %s41 = sphi 0, %s25
    %s45 = sphi 0, %s45
    %s47 = sphi 0, %s45
    %s48 = sphi 0, %s47
    %s62 = sphi 0, %s48
    %s66 = sphi 0, %s66
    %s68 = sphi 0, %s66
    %s69 = sphi 0, %s68
    %s83 = sphi 0, %s69
    %s87 = sphi 0, %s87
    %s89 = sphi 0, %s87
    %s90 = sphi 0, %s89
    %s104 = sphi 0, %s90
    %s108 = sphi 0, %s108
    %s110 = sphi 0, %s108
    %s111 = sphi 0, %s110
    %s125 = sphi 0, %s111
    %s131 = sphi 0, %s133
    %s134 = sphi 0, %s131
    %s135 = sphi 0, %s134
    %s151 = sphi 0, %s135
  $region4: #{tpu_custom_call.1} parent=0 // loop_header_branch
    %14 = sbr.rel (%p12) target = $region8
  $region5: #{tpu_custom_call.1} parent=0 // loop_body
    %s16 = ssub.s32 %s11, 1
    %s17 = ssub.s32 %s11, 2
    %s18 = sadd.s32 %s11, 1
    %s19 = ssub.s32 %s11, %s18
    %p20 = scmp.eq.s32.totalorder %s19, 0
    %s22 = sadd.s32 %s21, 1
    %s23 = scalar_select %p20, %s21, %s22
    %p26 = pneg %p20
    %p27 = scmp.eq.s32.totalorder %s11, 1
    %p28 = por %p26, %p27
    %p29 = scmp.ne.s32.totalorder %s21, %s24
    %p30 = scmp.eq.s32.totalorder %s11, 0
    %p31 = por %p29, %p30
    %p32 = scmp.ne.s32.totalorder %s21, %s24
    %p33 = scmp.eq.s32.totalorder %s16, 1
    %p34 = por %p32, %p33
    %p35 = scmp.ne.s32.totalorder %s24, %s25
    %p36 = scmp.eq.s32.totalorder %s16, 0
    %p37 = por %p35, %p36
    %p38 = scmp.ne.s32.totalorder %s24, %s25
    %p39 = scmp.eq.s32.totalorder %s17, 1
    %p40 = por %p38, %p39
    %p42 = scmp.ne.s32.totalorder %s25, %s41
    %p43 = scmp.eq.s32.totalorder %s17, 0
    %p44 = por %p42, %p43
    %s46 = sadd.s32 %s45, 1
    %p49 = scmp.eq.s32.totalorder %s11, 1
    %p50 = scmp.ne.s32.totalorder %s45, %s47
    %p51 = scmp.eq.s32.totalorder %s11, 0
    %p52 = por %p50, %p51
    %p53 = scmp.ne.s32.totalorder %s45, %s47
    %p54 = scmp.eq.s32.totalorder %s16, 1
    %p55 = por %p53, %p54
    %p56 = scmp.ne.s32.totalorder %s47, %s48
    %p57 = scmp.eq.s32.totalorder %s16, 0
    %p58 = por %p56, %p57
    %p59 = scmp.ne.s32.totalorder %s47, %s48
    %p60 = scmp.eq.s32.totalorder %s17, 1
    %p61 = por %p59, %p60
    %p63 = scmp.ne.s32.totalorder %s48, %s62
    %p64 = scmp.eq.s32.totalorder %s17, 0
    %p65 = por %p63, %p64
    %s67 = sadd.s32 %s66, 1
    %p70 = scmp.eq.s32.totalorder %s11, 1
    %p71 = scmp.ne.s32.totalorder %s66, %s68
    %p72 = scmp.eq.s32.totalorder %s11, 0
    %p73 = por %p71, %p72
    %p74 = scmp.ne.s32.totalorder %s66, %s68
    %p75 = scmp.eq.s32.totalorder %s16, 1
    %p76 = por %p74, %p75
    %p77 = scmp.ne.s32.totalorder %s68, %s69
    %p78 = scmp.eq.s32.totalorder %s16, 0
    %p79 = por %p77, %p78
    %p80 = scmp.ne.s32.totalorder %s68, %s69
    %p81 = scmp.eq.s32.totalorder %s17, 1
    %p82 = por %p80, %p81
    %p84 = scmp.ne.s32.totalorder %s69, %s83
    %p85 = scmp.eq.s32.totalorder %s17, 0
    %p86 = por %p84, %p85
    %s88 = sadd.s32 %s87, 1
    %p91 = scmp.eq.s32.totalorder %s11, 1
    %p92 = scmp.ne.s32.totalorder %s87, %s89
    %p93 = scmp.eq.s32.totalorder %s11, 0
    %p94 = por %p92, %p93
    %p95 = scmp.ne.s32.totalorder %s87, %s89
    %p96 = scmp.eq.s32.totalorder %s16, 1
    %p97 = por %p95, %p96
    %p98 = scmp.ne.s32.totalorder %s89, %s90
    %p99 = scmp.eq.s32.totalorder %s16, 0
    %p100 = por %p98, %p99
    %p101 = scmp.ne.s32.totalorder %s89, %s90
    %p102 = scmp.eq.s32.totalorder %s17, 1
    %p103 = por %p101, %p102
    %p105 = scmp.ne.s32.totalorder %s90, %s104
    %p106 = scmp.eq.s32.totalorder %s17, 0
    %p107 = por %p105, %p106
    %s109 = sadd.s32 %s108, 1
    %p112 = scmp.eq.s32.totalorder %s11, 1
    %p113 = scmp.ne.s32.totalorder %s108, %s110
    %p114 = scmp.eq.s32.totalorder %s11, 0
    %p115 = por %p113, %p114
    %p116 = scmp.ne.s32.totalorder %s108, %s110
    %p117 = scmp.eq.s32.totalorder %s16, 1
    %p118 = por %p116, %p117
    %p119 = scmp.ne.s32.totalorder %s110, %s111
    %p120 = scmp.eq.s32.totalorder %s16, 0
    %p121 = por %p119, %p120
    %p122 = scmp.ne.s32.totalorder %s110, %s111
    %p123 = scmp.eq.s32.totalorder %s17, 1
    %p124 = por %p122, %p123
    %p126 = scmp.ne.s32.totalorder %s111, %s125
    %p127 = scmp.eq.s32.totalorder %s17, 0
    %p128 = por %p126, %p127
    %s129 = ssub.s32 %s11, %s18
    %p130 = scmp.eq.s32.totalorder %s129, 0
    %s132 = sadd.s32 %s131, 1
    %s133 = scalar_select %p130, %s131, %s132
    %p136 = pneg %p130
    %p137 = scmp.eq.s32.totalorder %s11, 1
    %p138 = por %p136, %p137
    %p139 = scmp.ne.s32.totalorder %s131, %s134
    %p140 = scmp.eq.s32.totalorder %s11, 0
    %p141 = por %p139, %p140
    %p142 = scmp.ne.s32.totalorder %s131, %s134
    %p143 = scmp.eq.s32.totalorder %s16, 1
    %p144 = por %p142, %p143
    %p145 = scmp.ne.s32.totalorder %s134, %s135
    %p146 = scmp.eq.s32.totalorder %s16, 0
    %p147 = por %p145, %p146
    %p148 = scmp.ne.s32.totalorder %s134, %s135
    %p149 = scmp.eq.s32.totalorder %s17, 1
    %p150 = por %p148, %p149
    %p152 = scmp.ne.s32.totalorder %s135, %s151
    %p153 = scmp.eq.s32.totalorder %s17, 0
    %p154 = por %p152, %p153
    %p155 = scmp.le.s32.totalorder 1, %s11
    %p156 = scmp.lt.s32.totalorder %s11, 3
    %p157 = pnand %p155, %p156
    %p158 = pneg %p157
    // Predicated region
    $region9: #{tpu_custom_call.1} parent=5 // pred_check
      _
    $region10: #{tpu_custom_call.1} parent=5 // pred_check_branch
      %160 = sbr.rel (%p157) target = $region12
    $region11: #{tpu_custom_call.1} parent=5 // pred_region
      %s161 = ssub.s32 %s11, 1
      // Predicated region
      $region13: #{tpu_custom_call.1} parent=11 // pred_check
        %p162 = pneg %p58
      $region14: #{tpu_custom_call.1} parent=11 // pred_check_branch
        %164 = sbr.rel (%p162) target = $region16
      $region15: #{tpu_custom_call.1} parent=11 // pred_region
        _
      $region16: #{tpu_custom_call.1} parent=11 // pred_fallthru
        _
      // Predicated region
      $region17: #{tpu_custom_call.1} parent=11 // pred_check
        %p165 = pneg %p79
      $region18: #{tpu_custom_call.1} parent=11 // pred_check_branch
        %167 = sbr.rel (%p165) target = $region20
      $region19: #{tpu_custom_call.1} parent=11 // pred_region
        _
      $region20: #{tpu_custom_call.1} parent=11 // pred_fallthru
        _
      // Predicated region
      $region21: #{tpu_custom_call.1} parent=11 // pred_check
        %p168 = pneg %p100
      $region22: #{tpu_custom_call.1} parent=11 // pred_check_branch
        %170 = sbr.rel (%p168) target = $region24
      $region23: #{tpu_custom_call.1} parent=11 // pred_region
        _
      $region24: #{tpu_custom_call.1} parent=11 // pred_fallthru
        _
      // Predicated region
      $region25: #{tpu_custom_call.1} parent=11 // pred_check
        %p171 = pneg %p121
      $region26: #{tpu_custom_call.1} parent=11 // pred_check_branch
        %173 = sbr.rel (%p171) target = $region28
      $region27: #{tpu_custom_call.1} parent=11 // pred_region
        _
      $region28: #{tpu_custom_call.1} parent=11 // pred_fallthru
        _
    $region12: #{tpu_custom_call.1} parent=5 // pred_fallthru
      _
    %p174 = scmp.lt.s32.totalorder %s11, 2
    // Predicated region
    $region29: #{tpu_custom_call.1} parent=5 // pred_check
      %p175 = pneg %p174
    $region30: #{tpu_custom_call.1} parent=5 // pred_check_branch
      %177 = sbr.rel (%p175) target = $region32
    $region31: #{tpu_custom_call.1} parent=5 // pred_region
      // Predicated region
      $region33: #{tpu_custom_call.1} parent=31 // pred_check
        %p178 = pneg %p31
      $region34: #{tpu_custom_call.1} parent=31 // pred_check_branch
        %180 = sbr.rel (%p178) target = $region36
      $region35: #{tpu_custom_call.1} parent=31 // pred_region
        %p181 = scmp.lt.s32.totalorder %s11, 1
        %s182 = scalar_select %p181, %s11, 1
        %s183 = smul.addr %s182, 32
        %s184 = smul.addr %s183, 8
        %s185 = scalar_lea.vmem %s0, %s184
      $region36: #{tpu_custom_call.1} parent=31 // pred_fallthru
        _
    $region32: #{tpu_custom_call.1} parent=5 // pred_fallthru
      _
    %p186 = scmp.le.s32.totalorder 1, %s11
    %p187 = scmp.lt.s32.totalorder %s11, 3
    %p188 = pnand %p186, %p187
    %p189 = pneg %p188
    // Predicated region
    $region37: #{tpu_custom_call.1} parent=5 // pred_check
      _
    $region38: #{tpu_custom_call.1} parent=5 // pred_check_branch
      %191 = sbr.rel (%p188) target = $region40
    $region39: #{tpu_custom_call.1} parent=5 // pred_region
      %s192 = ssub.s32 %s11, 1
      %p193 = scmp.lt.s32.totalorder %s16, 1
      %s194 = scalar_select %p193, %s16, 1
      %s195 = smul.addr %s194, 32
      %s196 = smul.addr %s195, 8
      %s197 = scalar_lea.vmem %s0, %s196
      %p198 = pneg %p37
      %p199 = pneg %p34
      %p200 = pneg %p58
      %p201 = pneg %p55
      %p202 = pneg %p79
      %p203 = pneg %p76
      %p204 = pneg %p100
      %p205 = pneg %p97
      %p206 = pneg %p121
      %p207 = pneg %p118
      %p208 = pneg %p147
      %p209 = pneg %p144
      %p210 = scmp.lt.s32.totalorder %s16, 1
      %s211 = scalar_select %p210, %s16, 1
      %s212 = smul.addr %s211, 32
      %s213 = smul.addr %s212, 8
      %s214 = scalar_lea.vmem %s5, %s213
      %p215 = scmp.lt.s32.totalorder %s16, 1
      %s216 = scalar_select %p215, %s16, 1
      %s217 = smul.addr %s216, 32
      %s218 = smul.addr %s217, 8
      %s219 = scalar_lea.vmem %s0, %s218
      %p220 = scmp.lt.s32.totalorder %s16, 1
      %s221 = scalar_select %p220, %s16, 1
      %s222 = smul.addr %s221, 32
      %s223 = smul.addr %s222, 8
      %s224 = scalar_lea.vmem %s5, %s223
      %vm225 = vcmask 31744
      %226 = vst.msk [vmem:[#allocation2] sm:$0xff] %vm225, 0.0
      %227 = vst.msk [vmem:[#allocation2 + $0x8] sm:$0xff] %vm225, 0.0
      %vm228 = vcmask 25600
      %229 = vst.msk [vmem:[#allocation2 + $0x10] sm:$0x3] %vm228, 0.0
      %230 = vst.msk [vmem:[#allocation2 + $0x18] sm:$0xff] %vm225, 0.0
      %231 = vst.msk [vmem:[#allocation2 + $0x20] sm:$0xff] %vm225, 0.0
      %232 = vst.msk [vmem:[#allocation2 + $0x28] sm:$0x3] %vm228, 0.0
      %233 = vst.msk [vmem:[#allocation2 + $0x30] sm:$0xff] %vm225, 0.0
      %234 = vst.msk [vmem:[#allocation2 + $0x38] sm:$0xff] %vm225, 0.0
      %235 = vst.msk [vmem:[#allocation2 + $0x40] sm:$0x3] %vm228, 0.0
      %236 = vst.msk [vmem:[#allocation2 + $0x48] sm:$0xff] %vm225, 0.0
      %237 = vst.msk [vmem:[#allocation2 + $0x50] sm:$0xff] %vm225, 0.0
      %238 = vst.msk [vmem:[#allocation2 + $0x58] sm:$0x3] %vm228, 0.0
      %239 = vst.msk [vmem:[#allocation2 + $0x60] sm:$0xff] %vm225, 0.0
      %240 = vst.msk [vmem:[#allocation2 + $0x68] sm:$0xff] %vm225, 0.0
      %241 = vst.msk [vmem:[#allocation2 + $0x70] sm:$0x3] %vm228, 0.0
      %242 = vst.msk [vmem:[#allocation2 + $0x78] sm:$0xff] %vm225, 0.0
      %243 = vst.msk [vmem:[#allocation2 + $0x80] sm:$0xff] %vm225, 0.0
      %244 = vst.msk [vmem:[#allocation2 + $0x88] sm:$0x3] %vm228, 0.0
      %245 = vst.msk [vmem:[#allocation2 + $0x90] sm:$0xff] %vm225, 0.0
      %246 = vst.msk [vmem:[#allocation2 + $0x98] sm:$0xff] %vm225, 0.0
      %247 = vst.msk [vmem:[#allocation2 + $0xa0] sm:$0x3] %vm228, 0.0
      %248 = vst.msk [vmem:[#allocation2 + $0xa8] sm:$0xff] %vm225, 0.0
      %249 = vst.msk [vmem:[#allocation2 + $0xb0] sm:$0xff] %vm225, 0.0
      %250 = vst.msk [vmem:[#allocation2 + $0xb8] sm:$0x3] %vm228, 0.0
      %251 = vst.msk [vmem:[#allocation2 + $0xc0] sm:$0xff] %vm225, 0.0
      %252 = vst.msk [vmem:[#allocation2 + $0xc8] sm:$0xff] %vm225, 0.0
      %253 = vst.msk [vmem:[#allocation2 + $0xd0] sm:$0x3] %vm228, 0.0
      %254 = vst.msk [vmem:[#allocation2 + $0xd8] sm:$0xff] %vm225, 0.0
      %255 = vst.msk [vmem:[#allocation2 + $0xe0] sm:$0xff] %vm225, 0.0
      %256 = vst.msk [vmem:[#allocation2 + $0xe8] sm:$0x3] %vm228, 0.0
      %257 = vst.msk [vmem:[#allocation2 + $0xf0] sm:$0xff] %vm225, 0.0
      %258 = vst.msk [vmem:[#allocation2 + $0xf8] sm:$0xff] %vm225, 0.0
      %259 = vst.msk [vmem:[#allocation2 + $0x100] sm:$0x3] %vm228, 0.0
      %260 = vst.msk [vmem:[#allocation2 + $0x108] sm:$0xff] %vm225, 0.0
      %261 = vst.msk [vmem:[#allocation2 + $0x110] sm:$0xff] %vm225, 0.0
      %262 = vst.msk [vmem:[#allocation2 + $0x118] sm:$0x3] %vm228, 0.0
      %263 = vst.msk [vmem:[#allocation2 + $0x120] sm:$0xff] %vm225, 0.0
      %264 = vst.msk [vmem:[#allocation2 + $0x128] sm:$0xff] %vm225, 0.0
      %265 = vst.msk [vmem:[#allocation2 + $0x130] sm:$0x3] %vm228, 0.0
      %266 = vst.msk [vmem:[#allocation2 + $0x138] sm:$0xff] %vm225, 0.0
      %267 = vst.msk [vmem:[#allocation2 + $0x140] sm:$0xff] %vm225, 0.0
      %268 = vst.msk [vmem:[#allocation2 + $0x148] sm:$0x3] %vm228, 0.0
      %269 = vst.msk [vmem:[#allocation2 + $0x150] sm:$0xff] %vm225, 0.0
      %270 = vst.msk [vmem:[#allocation2 + $0x158] sm:$0xff] %vm225, 0.0
      %271 = vst.msk [vmem:[#allocation2 + $0x160] sm:$0x3] %vm228, 0.0
      %272 = vst.msk [vmem:[#allocation2 + $0x168] sm:$0xff] %vm225, 0.0
      %273 = vst.msk [vmem:[#allocation2 + $0x170] sm:$0xff] %vm225, 0.0
      %274 = vst.msk [vmem:[#allocation2 + $0x178] sm:$0x3] %vm228, 0.0
      %275 = vst.msk [vmem:[#allocation2 + $0x180] sm:$0xff] %vm225, 0.0
      %276 = vst.msk [vmem:[#allocation2 + $0x188] sm:$0xff] %vm225, 0.0
      %277 = vst.msk [vmem:[#allocation2 + $0x190] sm:$0x3] %vm228, 0.0
      %278 = vst.msk [vmem:[#allocation2 + $0x198] sm:$0xff] %vm225, 0.0
      %279 = vst.msk [vmem:[#allocation2 + $0x1a0] sm:$0xff] %vm225, 0.0
      %280 = vst.msk [vmem:[#allocation2 + $0x1a8] sm:$0x3] %vm228, 0.0
      %v281 = vld [vmem:[%s219] sm:$0xff]
      %v282 = vld [vmem:[%s219 + $0x8] sm:$0xff]
      %v283 = vld [vmem:[%s219 + $0x10] sm:$0xff]
      %v284 = vld [vmem:[%s219 + $0x18] sm:$0xff]
      %v285 = vld [vmem:[%s219 + $0x20] sm:$0xff]
      %v286 = vld [vmem:[%s219 + $0x28] sm:$0xff]
      %v287 = vld [vmem:[%s219 + $0x30] sm:$0xff]
      %v288 = vld [vmem:[%s219 + $0x38] sm:$0xff]
      %v289 = vld [vmem:[%s219 + $0x40] sm:$0xff]
      %v290 = vld [vmem:[%s219 + $0x48] sm:$0xff]
      %v291 = vld [vmem:[%s219 + $0x50] sm:$0xff]
      %v292 = vld [vmem:[%s219 + $0x58] sm:$0xff]
      %v293 = vld [vmem:[%s219 + $0x60] sm:$0xff]
      %v294 = vld [vmem:[%s219 + $0x68] sm:$0xff]
      %v295 = vld [vmem:[%s219 + $0x70] sm:$0xff]
      %v296 = vld [vmem:[%s219 + $0x78] sm:$0xff]
      %v297 = vld [vmem:[%s219 + $0x80] sm:$0xff]
      %v298 = vld [vmem:[%s219 + $0x88] sm:$0xff]
      %v299 = vld [vmem:[%s219 + $0x90] sm:$0xff]
      %v300 = vld [vmem:[%s219 + $0x98] sm:$0xff]
      %v301 = vld [vmem:[%s219 + $0xa0] sm:$0xff]
      %v302 = vld [vmem:[%s219 + $0xa8] sm:$0xff]
      %v303 = vld [vmem:[%s219 + $0xb0] sm:$0xff]
      %v304 = vld [vmem:[%s219 + $0xb8] sm:$0xff]
      %v305 = vld [vmem:[%s219 + $0xc0] sm:$0xff]
      %v306 = vld [vmem:[%s219 + $0xc8] sm:$0xff]
      %v307 = vld [vmem:[%s219 + $0xd0] sm:$0xff]
      %v308 = vld [vmem:[%s219 + $0xd8] sm:$0xff]
      %v309 = vld [vmem:[%s219 + $0xe0] sm:$0xff]
      %v310 = vld [vmem:[%s219 + $0xe8] sm:$0xff]
      %v311 = vld [vmem:[%s219 + $0xf0] sm:$0xff]
      %v312 = vld [vmem:[%s219 + $0xf8] sm:$0xff]
      %s313 = scalar_lea.vmem [#allocation2], 24
      %314 = vst.msk [vmem:[%s313 + $0x1] sm:$0xff] %vm225, %v281
      %315 = vst.msk [vmem:[%s313 + $0x9] sm:$0xff] %vm225, %v282
      %316 = vst.msk [vmem:[%s313 + $0x19] sm:$0xff] %vm225, %v283
      %317 = vst.msk [vmem:[%s313 + $0x21] sm:$0xff] %vm225, %v284
      %318 = vst.msk [vmem:[%s313 + $0x31] sm:$0xff] %vm225, %v285
      %319 = vst.msk [vmem:[%s313 + $0x39] sm:$0xff] %vm225, %v286
      %320 = vst.msk [vmem:[%s313 + $0x49] sm:$0xff] %vm225, %v287
      %321 = vst.msk [vmem:[%s313 + $0x51] sm:$0xff] %vm225, %v288
      %322 = vst.msk [vmem:[%s313 + $0x61] sm:$0xff] %vm225, %v289
      %323 = vst.msk [vmem:[%s313 + $0x69] sm:$0xff] %vm225, %v290
      %324 = vst.msk [vmem:[%s313 + $0x79] sm:$0xff] %vm225, %v291
      %325 = vst.msk [vmem:[%s313 + $0x81] sm:$0xff] %vm225, %v292
      %326 = vst.msk [vmem:[%s313 + $0x91] sm:$0xff] %vm225, %v293
      %327 = vst.msk [vmem:[%s313 + $0x99] sm:$0xff] %vm225, %v294
      %328 = vst.msk [vmem:[%s313 + $0xa9] sm:$0xff] %vm225, %v295
      %329 = vst.msk [vmem:[%s313 + $0xb1] sm:$0xff] %vm225, %v296
      %330 = vst.msk [vmem:[%s313 + $0xc1] sm:$0xff] %vm225, %v297
      %331 = vst.msk [vmem:[%s313 + $0xc9] sm:$0xff] %vm225, %v298
      %332 = vst.msk [vmem:[%s313 + $0xd9] sm:$0xff] %vm225, %v299
      %333 = vst.msk [vmem:[%s313 + $0xe1] sm:$0xff] %vm225, %v300
      %334 = vst.msk [vmem:[%s313 + $0xf1] sm:$0xff] %vm225, %v301
      %335 = vst.msk [vmem:[%s313 + $0xf9] sm:$0xff] %vm225, %v302
      %336 = vst.msk [vmem:[%s313 + $0x109] sm:$0xff] %vm225, %v303
      %337 = vst.msk [vmem:[%s313 + $0x111] sm:$0xff] %vm225, %v304
      %338 = vst.msk [vmem:[%s313 + $0x121] sm:$0xff] %vm225, %v305
      %339 = vst.msk [vmem:[%s313 + $0x129] sm:$0xff] %vm225, %v306
      %340 = vst.msk [vmem:[%s313 + $0x139] sm:$0xff] %vm225, %v307
      %341 = vst.msk [vmem:[%s313 + $0x141] sm:$0xff] %vm225, %v308
      %342 = vst.msk [vmem:[%s313 + $0x151] sm:$0xff] %vm225, %v309
      %343 = vst.msk [vmem:[%s313 + $0x159] sm:$0xff] %vm225, %v310
      %344 = vst.msk [vmem:[%s313 + $0x169] sm:$0xff] %vm225, %v311
      %345 = vst.msk [vmem:[%s313 + $0x171] sm:$0xff] %vm225, %v312
      %v346 = vld [vmem:[%s1] sm:$0xff]
      %v347 = vld [vmem:[%s1 + $0x8] sm:$0xff]
      %v348 = vld [vmem:[%s1 + $0x10] sm:$0xff]
      %v349 = vld [vmem:[%s1 + $0x18] sm:$0xff]
      %v350 = vld [vmem:[%s1 + $0x20] sm:$0xf]
      %v351 = vld [vmem:[#allocation2] sm:$0xff]
      %v352 = vld [vmem:[#allocation2 + $0x8] sm:$0xff]
      %v353 = vld [vmem:[#allocation2 + $0x18] sm:$0xff]
      %v354 = vld [vmem:[#allocation2 + $0x20] sm:$0xff]
      %v355 = vld [vmem:[#allocation2 + $0x30] sm:$0xff]
      %v356 = vld [vmem:[#allocation2 + $0x38] sm:$0xff]
      %v357 = vld [vmem:[#allocation2 + $0x48] sm:$0xff]
      %v358 = vld [vmem:[#allocation2 + $0x50] sm:$0xff]
      %v359 = vld [vmem:[#allocation2 + $0x60] sm:$0xff]
      %v360 = vld [vmem:[#allocation2 + $0x68] sm:$0xff]
      %v361 = vld [vmem:[#allocation2 + $0x78] sm:$0xff]
      %v362 = vld [vmem:[#allocation2 + $0x80] sm:$0xff]
      %v363 = vld [vmem:[#allocation2 + $0x90] sm:$0xff]
      %v364 = vld [vmem:[#allocation2 + $0x98] sm:$0xff]
      %v365 = vld [vmem:[#allocation2 + $0xa8] sm:$0xff]
      %v366 = vld [vmem:[#allocation2 + $0xb0] sm:$0xff]
      %v367 = vld [vmem:[#allocation2 + $0xc0] sm:$0xff]
      %v368 = vld [vmem:[#allocation2 + $0xc8] sm:$0xff]
      %v369 = vld [vmem:[#allocation2 + $0xd8] sm:$0xff]
      %v370 = vld [vmem:[#allocation2 + $0xe0] sm:$0xff]
      %v371 = vld [vmem:[#allocation2 + $0xf0] sm:$0xff]
      %v372 = vld [vmem:[#allocation2 + $0xf8] sm:$0xff]
      %v373 = vld [vmem:[#allocation2 + $0x108] sm:$0xff]
      %v374 = vld [vmem:[#allocation2 + $0x110] sm:$0xff]
      %v375 = vld [vmem:[#allocation2 + $0x120] sm:$0xff]
      %v376 = vld [vmem:[#allocation2 + $0x128] sm:$0xff]
      %v377 = vld [vmem:[#allocation2 + $0x138] sm:$0xff]
      %v378 = vld [vmem:[#allocation2 + $0x140] sm:$0xff]
      %v379 = vld [vmem:[#allocation2 + $0x150] sm:$0xff]
      %v380 = vld [vmem:[#allocation2 + $0x158] sm:$0xff]
      %v381 = vld [vmem:[#allocation2 + $0x168] sm:$0xff]
      %v382 = vld [vmem:[#allocation2 + $0x170] sm:$0xff]
      %v383 = vld [vmem:[#allocation2 + $0x1] sm:$0xff]
      %v384 = vld [vmem:[#allocation2 + $0x9] sm:$0xff]
      %v385 = vld [vmem:[#allocation2 + $0x19] sm:$0xff]
      %v386 = vld [vmem:[#allocation2 + $0x21] sm:$0xff]
      %v387 = vld [vmem:[#allocation2 + $0x31] sm:$0xff]
      %v388 = vld [vmem:[#allocation2 + $0x39] sm:$0xff]
      %v389 = vld [vmem:[#allocation2 + $0x49] sm:$0xff]
      %v390 = vld [vmem:[#allocation2 + $0x51] sm:$0xff]
      %v391 = vld [vmem:[#allocation2 + $0x61] sm:$0xff]
      %v392 = vld [vmem:[#allocation2 + $0x69] sm:$0xff]
      %v393 = vld [vmem:[#allocation2 + $0x79] sm:$0xff]
      %v394 = vld [vmem:[#allocation2 + $0x81] sm:$0xff]
      %v395 = vld [vmem:[#allocation2 + $0x91] sm:$0xff]
      %v396 = vld [vmem:[#allocation2 + $0x99] sm:$0xff]
      %v397 = vld [vmem:[#allocation2 + $0xa9] sm:$0xff]
      %v398 = vld [vmem:[#allocation2 + $0xb1] sm:$0xff]
      %v399 = vld [vmem:[#allocation2 + $0xc1] sm:$0xff]
      %v400 = vld [vmem:[#allocation2 + $0xc9] sm:$0xff]
      %v401 = vld [vmem:[#allocation2 + $0xd9] sm:$0xff]
      %v402 = vld [vmem:[#allocation2 + $0xe1] sm:$0xff]
      %v403 = vld [vmem:[#allocation2 + $0xf1] sm:$0xff]
      %v404 = vld [vmem:[#allocation2 + $0xf9] sm:$0xff]
      %v405 = vld [vmem:[#allocation2 + $0x109] sm:$0xff]
      %v406 = vld [vmem:[#allocation2 + $0x111] sm:$0xff]
      %v407 = vld [vmem:[#allocation2 + $0x121] sm:$0xff]
      %v408 = vld [vmem:[#allocation2 + $0x129] sm:$0xff]
      %v409 = vld [vmem:[#allocation2 + $0x139] sm:$0xff]
      %v410 = vld [vmem:[#allocation2 + $0x141] sm:$0xff]
      %v411 = vld [vmem:[#allocation2 + $0x151] sm:$0xff]
      %v412 = vld [vmem:[#allocation2 + $0x159] sm:$0xff]
      %v413 = vld [vmem:[#allocation2 + $0x169] sm:$0xff]
      %v414 = vld [vmem:[#allocation2 + $0x171] sm:$0xff]
      %v415 = vld [vmem:[#allocation2 + $0x2] sm:$0xff]
      %v416 = vld [vmem:[#allocation2 + $0xa] sm:$0xff]
      %v417 = vld [vmem:[#allocation2 + $0x1a] sm:$0xff]
      %v418 = vld [vmem:[#allocation2 + $0x22] sm:$0xff]
      %v419 = vld [vmem:[#allocation2 + $0x32] sm:$0xff]
      %v420 = vld [vmem:[#allocation2 + $0x3a] sm:$0xff]
      %v421 = vld [vmem:[#allocation2 + $0x4a] sm:$0xff]
      %v422 = vld [vmem:[#allocation2 + $0x52] sm:$0xff]
      %v423 = vld [vmem:[#allocation2 + $0x62] sm:$0xff]
      %v424 = vld [vmem:[#allocation2 + $0x6a] sm:$0xff]
      %v425 = vld [vmem:[#allocation2 + $0x7a] sm:$0xff]
      %v426 = vld [vmem:[#allocation2 + $0x82] sm:$0xff]
      %v427 = vld [vmem:[#allocation2 + $0x92] sm:$0xff]
      %v428 = vld [vmem:[#allocation2 + $0x9a] sm:$0xff]
      %v429 = vld [vmem:[#allocation2 + $0xaa] sm:$0xff]
      %v430 = vld [vmem:[#allocation2 + $0xb2] sm:$0xff]
      %v431 = vld [vmem:[#allocation2 + $0xc2] sm:$0xff]
      %v432 = vld [vmem:[#allocation2 + $0xca] sm:$0xff]
      %v433 = vld [vmem:[#allocation2 + $0xda] sm:$0xff]
      %v434 = vld [vmem:[#allocation2 + $0xe2] sm:$0xff]
      %v435 = vld [vmem:[#allocation2 + $0xf2] sm:$0xff]
      %v436 = vld [vmem:[#allocation2 + $0xfa] sm:$0xff]
      %v437 = vld [vmem:[#allocation2 + $0x10a] sm:$0xff]
      %v438 = vld [vmem:[#allocation2 + $0x112] sm:$0xff]
      %v439 = vld [vmem:[#allocation2 + $0x122] sm:$0xff]
      %v440 = vld [vmem:[#allocation2 + $0x12a] sm:$0xff]
      %v441 = vld [vmem:[#allocation2 + $0x13a] sm:$0xff]
      %v442 = vld [vmem:[#allocation2 + $0x142] sm:$0xff]
      %v443 = vld [vmem:[#allocation2 + $0x152] sm:$0xff]
      %v444 = vld [vmem:[#allocation2 + $0x15a] sm:$0xff]
      %v445 = vld [vmem:[#allocation2 + $0x16a] sm:$0xff]
      %v446 = vld [vmem:[#allocation2 + $0x172] sm:$0xff]
      %v447 = vld [vmem:[%s313] sm:$0xff]
      %v448 = vld [vmem:[%s313 + $0x8] sm:$0xff]
      %v449 = vld [vmem:[%s313 + $0x18] sm:$0xff]
      %v450 = vld [vmem:[%s313 + $0x20] sm:$0xff]
      %v451 = vld [vmem:[%s313 + $0x30] sm:$0xff]
      %v452 = vld [vmem:[%s313 + $0x38] sm:$0xff]
      %v453 = vld [vmem:[%s313 + $0x48] sm:$0xff]
      %v454 = vld [vmem:[%s313 + $0x50] sm:$0xff]
      %v455 = vld [vmem:[%s313 + $0x60] sm:$0xff]
      %v456 = vld [vmem:[%s313 + $0x68] sm:$0xff]
      %v457 = vld [vmem:[%s313 + $0x78] sm:$0xff]
      %v458 = vld [vmem:[%s313 + $0x80] sm:$0xff]
      %v459 = vld [vmem:[%s313 + $0x90] sm:$0xff]
      %v460 = vld [vmem:[%s313 + $0x98] sm:$0xff]
      %v461 = vld [vmem:[%s313 + $0xa8] sm:$0xff]
      %v462 = vld [vmem:[%s313 + $0xb0] sm:$0xff]
      %v463 = vld [vmem:[%s313 + $0xc0] sm:$0xff]
      %v464 = vld [vmem:[%s313 + $0xc8] sm:$0xff]
      %v465 = vld [vmem:[%s313 + $0xd8] sm:$0xff]
      %v466 = vld [vmem:[%s313 + $0xe0] sm:$0xff]
      %v467 = vld [vmem:[%s313 + $0xf0] sm:$0xff]
      %v468 = vld [vmem:[%s313 + $0xf8] sm:$0xff]
      %v469 = vld [vmem:[%s313 + $0x108] sm:$0xff]
      %v470 = vld [vmem:[%s313 + $0x110] sm:$0xff]
      %v471 = vld [vmem:[%s313 + $0x120] sm:$0xff]
      %v472 = vld [vmem:[%s313 + $0x128] sm:$0xff]
      %v473 = vld [vmem:[%s313 + $0x138] sm:$0xff]
      %v474 = vld [vmem:[%s313 + $0x140] sm:$0xff]
      %v475 = vld [vmem:[%s313 + $0x150] sm:$0xff]
      %v476 = vld [vmem:[%s313 + $0x158] sm:$0xff]
      %v477 = vld [vmem:[%s313 + $0x168] sm:$0xff]
      %v478 = vld [vmem:[%s313 + $0x170] sm:$0xff]
      %v479 = vld [vmem:[%s313 + $0x1] sm:$0xff]
      %v480 = vld [vmem:[%s313 + $0x9] sm:$0xff]
      %v481 = vld [vmem:[%s313 + $0x19] sm:$0xff]
      %v482 = vld [vmem:[%s313 + $0x21] sm:$0xff]
      %v483 = vld [vmem:[%s313 + $0x31] sm:$0xff]
      %v484 = vld [vmem:[%s313 + $0x39] sm:$0xff]
      %v485 = vld [vmem:[%s313 + $0x49] sm:$0xff]
      %v486 = vld [vmem:[%s313 + $0x51] sm:$0xff]
      %v487 = vld [vmem:[%s313 + $0x61] sm:$0xff]
      %v488 = vld [vmem:[%s313 + $0x69] sm:$0xff]
      %v489 = vld [vmem:[%s313 + $0x79] sm:$0xff]
      %v490 = vld [vmem:[%s313 + $0x81] sm:$0xff]
      %v491 = vld [vmem:[%s313 + $0x91] sm:$0xff]
      %v492 = vld [vmem:[%s313 + $0x99] sm:$0xff]
      %v493 = vld [vmem:[%s313 + $0xa9] sm:$0xff]
      %v494 = vld [vmem:[%s313 + $0xb1] sm:$0xff]
      %v495 = vld [vmem:[%s313 + $0xc1] sm:$0xff]
      %v496 = vld [vmem:[%s313 + $0xc9] sm:$0xff]
      %v497 = vld [vmem:[%s313 + $0xd9] sm:$0xff]
      %v498 = vld [vmem:[%s313 + $0xe1] sm:$0xff]
      %v499 = vld [vmem:[%s313 + $0xf1] sm:$0xff]
      %v500 = vld [vmem:[%s313 + $0xf9] sm:$0xff]
      %v501 = vld [vmem:[%s313 + $0x109] sm:$0xff]
      %v502 = vld [vmem:[%s313 + $0x111] sm:$0xff]
      %v503 = vld [vmem:[%s313 + $0x121] sm:$0xff]
      %v504 = vld [vmem:[%s313 + $0x129] sm:$0xff]
      %v505 = vld [vmem:[%s313 + $0x139] sm:$0xff]
      %v506 = vld [vmem:[%s313 + $0x141] sm:$0xff]
      %v507 = vld [vmem:[%s313 + $0x151] sm:$0xff]
      %v508 = vld [vmem:[%s313 + $0x159] sm:$0xff]
      %v509 = vld [vmem:[%s313 + $0x169] sm:$0xff]
      %v510 = vld [vmem:[%s313 + $0x171] sm:$0xff]
      %v511 = vld [vmem:[%s313 + $0x2] sm:$0xff]
      %v512 = vld [vmem:[%s313 + $0xa] sm:$0xff]
      %v513 = vld [vmem:[%s313 + $0x1a] sm:$0xff]
      %v514 = vld [vmem:[%s313 + $0x22] sm:$0xff]
      %v515 = vld [vmem:[%s313 + $0x32] sm:$0xff]
      %v516 = vld [vmem:[%s313 + $0x3a] sm:$0xff]
      %v517 = vld [vmem:[%s313 + $0x4a] sm:$0xff]
      %v518 = vld [vmem:[%s313 + $0x52] sm:$0xff]
      %v519 = vld [vmem:[%s313 + $0x62] sm:$0xff]
      %v520 = vld [vmem:[%s313 + $0x6a] sm:$0xff]
      %v521 = vld [vmem:[%s313 + $0x7a] sm:$0xff]
      %v522 = vld [vmem:[%s313 + $0x82] sm:$0xff]
      %v523 = vld [vmem:[%s313 + $0x92] sm:$0xff]
      %v524 = vld [vmem:[%s313 + $0x9a] sm:$0xff]
      %v525 = vld [vmem:[%s313 + $0xaa] sm:$0xff]
      %v526 = vld [vmem:[%s313 + $0xb2] sm:$0xff]
      %v527 = vld [vmem:[%s313 + $0xc2] sm:$0xff]
      %v528 = vld [vmem:[%s313 + $0xca] sm:$0xff]
      %v529 = vld [vmem:[%s313 + $0xda] sm:$0xff]
      %v530 = vld [vmem:[%s313 + $0xe2] sm:$0xff]
      %v531 = vld [vmem:[%s313 + $0xf2] sm:$0xff]
      %v532 = vld [vmem:[%s313 + $0xfa] sm:$0xff]
      %v533 = vld [vmem:[%s313 + $0x10a] sm:$0xff]
      %v534 = vld [vmem:[%s313 + $0x112] sm:$0xff]
      %v535 = vld [vmem:[%s313 + $0x122] sm:$0xff]
      %v536 = vld [vmem:[%s313 + $0x12a] sm:$0xff]
      %v537 = vld [vmem:[%s313 + $0x13a] sm:$0xff]
      %v538 = vld [vmem:[%s313 + $0x142] sm:$0xff]
      %v539 = vld [vmem:[%s313 + $0x152] sm:$0xff]
      %v540 = vld [vmem:[%s313 + $0x15a] sm:$0xff]
      %v541 = vld [vmem:[%s313 + $0x16a] sm:$0xff]
      %v542 = vld [vmem:[%s313 + $0x172] sm:$0xff]
      %s543 = scalar_lea.vmem [#allocation2], 48
      %v544 = vld [vmem:[%s543] sm:$0xff]
      %v545 = vld [vmem:[%s543 + $0x8] sm:$0xff]
      %v546 = vld [vmem:[%s543 + $0x18] sm:$0xff]
      %v547 = vld [vmem:[%s543 + $0x20] sm:$0xff]
      %v548 = vld [vmem:[%s543 + $0x30] sm:$0xff]
      %v549 = vld [vmem:[%s543 + $0x38] sm:$0xff]
      %v550 = vld [vmem:[%s543 + $0x48] sm:$0xff]
      %v551 = vld [vmem:[%s543 + $0x50] sm:$0xff]
      %v552 = vld [vmem:[%s543 + $0x60] sm:$0xff]
      %v553 = vld [vmem:[%s543 + $0x68] sm:$0xff]
      %v554 = vld [vmem:[%s543 + $0x78] sm:$0xff]
      %v555 = vld [vmem:[%s543 + $0x80] sm:$0xff]
      %v556 = vld [vmem:[%s543 + $0x90] sm:$0xff]
      %v557 = vld [vmem:[%s543 + $0x98] sm:$0xff]
      %v558 = vld [vmem:[%s543 + $0xa8] sm:$0xff]
      %v559 = vld [vmem:[%s543 + $0xb0] sm:$0xff]
      %v560 = vld [vmem:[%s543 + $0xc0] sm:$0xff]
      %v561 = vld [vmem:[%s543 + $0xc8] sm:$0xff]
      %v562 = vld [vmem:[%s543 + $0xd8] sm:$0xff]
      %v563 = vld [vmem:[%s543 + $0xe0] sm:$0xff]
      %v564 = vld [vmem:[%s543 + $0xf0] sm:$0xff]
      %v565 = vld [vmem:[%s543 + $0xf8] sm:$0xff]
      %v566 = vld [vmem:[%s543 + $0x108] sm:$0xff]
      %v567 = vld [vmem:[%s543 + $0x110] sm:$0xff]
      %v568 = vld [vmem:[%s543 + $0x120] sm:$0xff]
      %v569 = vld [vmem:[%s543 + $0x128] sm:$0xff]
      %v570 = vld [vmem:[%s543 + $0x138] sm:$0xff]
      %v571 = vld [vmem:[%s543 + $0x140] sm:$0xff]
      %v572 = vld [vmem:[%s543 + $0x150] sm:$0xff]
      %v573 = vld [vmem:[%s543 + $0x158] sm:$0xff]
      %v574 = vld [vmem:[%s543 + $0x168] sm:$0xff]
      %v575 = vld [vmem:[%s543 + $0x170] sm:$0xff]
      %v576 = vld [vmem:[%s543 + $0x1] sm:$0xff]
      %v577 = vld [vmem:[%s543 + $0x9] sm:$0xff]
      %v578 = vld [vmem:[%s543 + $0x19] sm:$0xff]
      %v579 = vld [vmem:[%s543 + $0x21] sm:$0xff]
      %v580 = vld [vmem:[%s543 + $0x31] sm:$0xff]
      %v581 = vld [vmem:[%s543 + $0x39] sm:$0xff]
      %v582 = vld [vmem:[%s543 + $0x49] sm:$0xff]
      %v583 = vld [vmem:[%s543 + $0x51] sm:$0xff]
      %v584 = vld [vmem:[%s543 + $0x61] sm:$0xff]
      %v585 = vld [vmem:[%s543 + $0x69] sm:$0xff]
      %v586 = vld [vmem:[%s543 + $0x79] sm:$0xff]
      %v587 = vld [vmem:[%s543 + $0x81] sm:$0xff]
      %v588 = vld [vmem:[%s543 + $0x91] sm:$0xff]
      %v589 = vld [vmem:[%s543 + $0x99] sm:$0xff]
      %v590 = vld [vmem:[%s543 + $0xa9] sm:$0xff]
      %v591 = vld [vmem:[%s543 + $0xb1] sm:$0xff]
      %v592 = vld [vmem:[%s543 + $0xc1] sm:$0xff]
      %v593 = vld [vmem:[%s543 + $0xc9] sm:$0xff]
      %v594 = vld [vmem:[%s543 + $0xd9] sm:$0xff]
      %v595 = vld [vmem:[%s543 + $0xe1] sm:$0xff]
      %v596 = vld [vmem:[%s543 + $0xf1] sm:$0xff]
      %v597 = vld [vmem:[%s543 + $0xf9] sm:$0xff]
      %v598 = vld [vmem:[%s543 + $0x109] sm:$0xff]
      %v599 = vld [vmem:[%s543 + $0x111] sm:$0xff]
      %v600 = vld [vmem:[%s543 + $0x121] sm:$0xff]
      %v601 = vld [vmem:[%s543 + $0x129] sm:$0xff]
      %v602 = vld [vmem:[%s543 + $0x139] sm:$0xff]
      %v603 = vld [vmem:[%s543 + $0x141] sm:$0xff]
      %v604 = vld [vmem:[%s543 + $0x151] sm:$0xff]
      %v605 = vld [vmem:[%s543 + $0x159] sm:$0xff]
      %v606 = vld [vmem:[%s543 + $0x169] sm:$0xff]
      %v607 = vld [vmem:[%s543 + $0x171] sm:$0xff]
      %v608 = vld [vmem:[%s543 + $0x2] sm:$0xff]
      %v609 = vld [vmem:[%s543 + $0xa] sm:$0xff]
      %v610 = vld [vmem:[%s543 + $0x1a] sm:$0xff]
      %v611 = vld [vmem:[%s543 + $0x22] sm:$0xff]
      %v612 = vld [vmem:[%s543 + $0x32] sm:$0xff]
      %v613 = vld [vmem:[%s543 + $0x3a] sm:$0xff]
      %v614 = vld [vmem:[%s543 + $0x4a] sm:$0xff]
      %v615 = vld [vmem:[%s543 + $0x52] sm:$0xff]
      %v616 = vld [vmem:[%s543 + $0x62] sm:$0xff]
      %v617 = vld [vmem:[%s543 + $0x6a] sm:$0xff]
      %v618 = vld [vmem:[%s543 + $0x7a] sm:$0xff]
      %v619 = vld [vmem:[%s543 + $0x82] sm:$0xff]
      %v620 = vld [vmem:[%s543 + $0x92] sm:$0xff]
      %v621 = vld [vmem:[%s543 + $0x9a] sm:$0xff]
      %v622 = vld [vmem:[%s543 + $0xaa] sm:$0xff]
      %v623 = vld [vmem:[%s543 + $0xb2] sm:$0xff]
      %v624 = vld [vmem:[%s543 + $0xc2] sm:$0xff]
      %v625 = vld [vmem:[%s543 + $0xca] sm:$0xff]
      %v626 = vld [vmem:[%s543 + $0xda] sm:$0xff]
      %v627 = vld [vmem:[%s543 + $0xe2] sm:$0xff]
      %v628 = vld [vmem:[%s543 + $0xf2] sm:$0xff]
      %v629 = vld [vmem:[%s543 + $0xfa] sm:$0xff]
      %v630 = vld [vmem:[%s543 + $0x10a] sm:$0xff]
      %v631 = vld [vmem:[%s543 + $0x112] sm:$0xff]
      %v632 = vld [vmem:[%s543 + $0x122] sm:$0xff]
      %v633 = vld [vmem:[%s543 + $0x12a] sm:$0xff]
      %v634 = vld [vmem:[%s543 + $0x13a] sm:$0xff]
      %v635 = vld [vmem:[%s543 + $0x142] sm:$0xff]
      %v636 = vld [vmem:[%s543 + $0x152] sm:$0xff]
      %v637 = vld [vmem:[%s543 + $0x15a] sm:$0xff]
      %v638 = vld [vmem:[%s543 + $0x16a] sm:$0xff]
      %v639 = vld [vmem:[%s543 + $0x172] sm:$0xff]
      %672 = vrot.lane.b32.xlu0 %v383, 4
      %v673 = vpop.permute.xlu0 %672
      %674 = vrot.lane.b32.xlu0 %v384, 4
      %v675 = vpop.permute.xlu0 %674
      %676 = vrot.lane.b32.xlu0 %v385, 4
      %v677 = vpop.permute.xlu0 %676
      %678 = vrot.lane.b32.xlu0 %v386, 4
      %v679 = vpop.permute.xlu0 %678
      %680 = vrot.lane.b32.xlu0 %v387, 4
      %v681 = vpop.permute.xlu0 %680
      %682 = vrot.lane.b32.xlu0 %v388, 4
      %v683 = vpop.permute.xlu0 %682
      %684 = vrot.lane.b32.xlu0 %v389, 4
      %v685 = vpop.permute.xlu0 %684
      %686 = vrot.lane.b32.xlu0 %v390, 4
      %v687 = vpop.permute.xlu0 %686
      %688 = vrot.lane.b32.xlu0 %v391, 4
      %v689 = vpop.permute.xlu0 %688
      %690 = vrot.lane.b32.xlu0 %v392, 4
      %v691 = vpop.permute.xlu0 %690
      %692 = vrot.lane.b32.xlu0 %v393, 4
      %v693 = vpop.permute.xlu0 %692
      %694 = vrot.lane.b32.xlu0 %v394, 4
      %v695 = vpop.permute.xlu0 %694
      %696 = vrot.lane.b32.xlu0 %v395, 4
      %v697 = vpop.permute.xlu0 %696
      %698 = vrot.lane.b32.xlu0 %v396, 4
      %v699 = vpop.permute.xlu0 %698
      %700 = vrot.lane.b32.xlu0 %v397, 4
      %v701 = vpop.permute.xlu0 %700
      %702 = vrot.lane.b32.xlu0 %v398, 4
      %v703 = vpop.permute.xlu0 %702
      %704 = vrot.lane.b32.xlu0 %v399, 4
      %v705 = vpop.permute.xlu0 %704
      %706 = vrot.lane.b32.xlu0 %v400, 4
      %v707 = vpop.permute.xlu0 %706
      %708 = vrot.lane.b32.xlu0 %v401, 4
      %v709 = vpop.permute.xlu0 %708
      %710 = vrot.lane.b32.xlu0 %v402, 4
      %v711 = vpop.permute.xlu0 %710
      %712 = vrot.lane.b32.xlu0 %v403, 4
      %v713 = vpop.permute.xlu0 %712
      %714 = vrot.lane.b32.xlu0 %v404, 4
      %v715 = vpop.permute.xlu0 %714
      %716 = vrot.lane.b32.xlu0 %v405, 4
      %v717 = vpop.permute.xlu0 %716
      %718 = vrot.lane.b32.xlu0 %v406, 4
      %v719 = vpop.permute.xlu0 %718
      %720 = vrot.lane.b32.xlu0 %v407, 4
      %v721 = vpop.permute.xlu0 %720
      %722 = vrot.lane.b32.xlu0 %v408, 4
      %v723 = vpop.permute.xlu0 %722
      %724 = vrot.lane.b32.xlu0 %v409, 4
      %v725 = vpop.permute.xlu0 %724
      %726 = vrot.lane.b32.xlu0 %v410, 4
      %v727 = vpop.permute.xlu0 %726
      %728 = vrot.lane.b32.xlu0 %v411, 4
      %v729 = vpop.permute.xlu0 %728
      %730 = vrot.lane.b32.xlu0 %v412, 4
      %v731 = vpop.permute.xlu0 %730
      %732 = vrot.lane.b32.xlu0 %v413, 4
      %v733 = vpop.permute.xlu0 %732
      %734 = vrot.lane.b32.xlu0 %v414, 4
      %v735 = vpop.permute.xlu0 %734
      %800 = vrot.lane.b32.xlu0 %v415, 8
      %v801 = vpop.permute.xlu0 %800
      %802 = vrot.lane.b32.xlu0 %v416, 8
      %v803 = vpop.permute.xlu0 %802
      %804 = vrot.lane.b32.xlu0 %v417, 8
      %v805 = vpop.permute.xlu0 %804
      %806 = vrot.lane.b32.xlu0 %v418, 8
      %v807 = vpop.permute.xlu0 %806
      %808 = vrot.lane.b32.xlu0 %v419, 8
      %v809 = vpop.permute.xlu0 %808
      %810 = vrot.lane.b32.xlu0 %v420, 8
      %v811 = vpop.permute.xlu0 %810
      %812 = vrot.lane.b32.xlu0 %v421, 8
      %v813 = vpop.permute.xlu0 %812
      %814 = vrot.lane.b32.xlu0 %v422, 8
      %v815 = vpop.permute.xlu0 %814
      %816 = vrot.lane.b32.xlu0 %v423, 8
      %v817 = vpop.permute.xlu0 %816
      %818 = vrot.lane.b32.xlu0 %v424, 8
      %v819 = vpop.permute.xlu0 %818
      %820 = vrot.lane.b32.xlu0 %v425, 8
      %v821 = vpop.permute.xlu0 %820
      %822 = vrot.lane.b32.xlu0 %v426, 8
      %v823 = vpop.permute.xlu0 %822
      %824 = vrot.lane.b32.xlu0 %v427, 8
      %v825 = vpop.permute.xlu0 %824
      %826 = vrot.lane.b32.xlu0 %v428, 8
      %v827 = vpop.permute.xlu0 %826
      %828 = vrot.lane.b32.xlu0 %v429, 8
      %v829 = vpop.permute.xlu0 %828
      %830 = vrot.lane.b32.xlu0 %v430, 8
      %v831 = vpop.permute.xlu0 %830
      %832 = vrot.lane.b32.xlu0 %v431, 8
      %v833 = vpop.permute.xlu0 %832
      %834 = vrot.lane.b32.xlu0 %v432, 8
      %v835 = vpop.permute.xlu0 %834
      %836 = vrot.lane.b32.xlu0 %v433, 8
      %v837 = vpop.permute.xlu0 %836
      %838 = vrot.lane.b32.xlu0 %v434, 8
      %v839 = vpop.permute.xlu0 %838
      %840 = vrot.lane.b32.xlu0 %v435, 8
      %v841 = vpop.permute.xlu0 %840
      %842 = vrot.lane.b32.xlu0 %v436, 8
      %v843 = vpop.permute.xlu0 %842
      %844 = vrot.lane.b32.xlu0 %v437, 8
      %v845 = vpop.permute.xlu0 %844
      %846 = vrot.lane.b32.xlu0 %v438, 8
      %v847 = vpop.permute.xlu0 %846
      %848 = vrot.lane.b32.xlu0 %v439, 8
      %v849 = vpop.permute.xlu0 %848
      %850 = vrot.lane.b32.xlu0 %v440, 8
      %v851 = vpop.permute.xlu0 %850
      %852 = vrot.lane.b32.xlu0 %v441, 8
      %v853 = vpop.permute.xlu0 %852
      %854 = vrot.lane.b32.xlu0 %v442, 8
      %v855 = vpop.permute.xlu0 %854
      %856 = vrot.lane.b32.xlu0 %v443, 8
      %v857 = vpop.permute.xlu0 %856
      %858 = vrot.lane.b32.xlu0 %v444, 8
      %v859 = vpop.permute.xlu0 %858
      %860 = vrot.lane.b32.xlu0 %v445, 8
      %v861 = vpop.permute.xlu0 %860
      %862 = vrot.lane.b32.xlu0 %v446, 8
      %v863 = vpop.permute.xlu0 %862
      %928 = vrot.lane.b32.xlu0 %v447, 12
      %v929 = vpop.permute.xlu0 %928
      %930 = vrot.lane.b32.xlu0 %v448, 12
      %v931 = vpop.permute.xlu0 %930
      %932 = vrot.lane.b32.xlu0 %v449, 12
      %v933 = vpop.permute.xlu0 %932
      %934 = vrot.lane.b32.xlu0 %v450, 12
      %v935 = vpop.permute.xlu0 %934
      %936 = vrot.lane.b32.xlu0 %v451, 12
      %v937 = vpop.permute.xlu0 %936
      %938 = vrot.lane.b32.xlu0 %v452, 12
      %v939 = vpop.permute.xlu0 %938
      %940 = vrot.lane.b32.xlu0 %v453, 12
      %v941 = vpop.permute.xlu0 %940
      %942 = vrot.lane.b32.xlu0 %v454, 12
      %v943 = vpop.permute.xlu0 %942
      %944 = vrot.lane.b32.xlu0 %v455, 12
      %v945 = vpop.permute.xlu0 %944
      %946 = vrot.lane.b32.xlu0 %v456, 12
      %v947 = vpop.permute.xlu0 %946
      %948 = vrot.lane.b32.xlu0 %v457, 12
      %v949 = vpop.permute.xlu0 %948
      %950 = vrot.lane.b32.xlu0 %v458, 12
      %v951 = vpop.permute.xlu0 %950
      %952 = vrot.lane.b32.xlu0 %v459, 12
      %v953 = vpop.permute.xlu0 %952
      %954 = vrot.lane.b32.xlu0 %v460, 12
      %v955 = vpop.permute.xlu0 %954
      %956 = vrot.lane.b32.xlu0 %v461, 12
      %v957 = vpop.permute.xlu0 %956
      %958 = vrot.lane.b32.xlu0 %v462, 12
      %v959 = vpop.permute.xlu0 %958
      %960 = vrot.lane.b32.xlu0 %v463, 12
      %v961 = vpop.permute.xlu0 %960
      %962 = vrot.lane.b32.xlu0 %v464, 12
      %v963 = vpop.permute.xlu0 %962
      %964 = vrot.lane.b32.xlu0 %v465, 12
      %v965 = vpop.permute.xlu0 %964
      %966 = vrot.lane.b32.xlu0 %v466, 12
      %v967 = vpop.permute.xlu0 %966
      %968 = vrot.lane.b32.xlu0 %v467, 12
      %v969 = vpop.permute.xlu0 %968
      %970 = vrot.lane.b32.xlu0 %v468, 12
      %v971 = vpop.permute.xlu0 %970
      %972 = vrot.lane.b32.xlu0 %v469, 12
      %v973 = vpop.permute.xlu0 %972
      %974 = vrot.lane.b32.xlu0 %v470, 12
      %v975 = vpop.permute.xlu0 %974
      %976 = vrot.lane.b32.xlu0 %v471, 12
      %v977 = vpop.permute.xlu0 %976
      %978 = vrot.lane.b32.xlu0 %v472, 12
      %v979 = vpop.permute.xlu0 %978
      %980 = vrot.lane.b32.xlu0 %v473, 12
      %v981 = vpop.permute.xlu0 %980
      %982 = vrot.lane.b32.xlu0 %v474, 12
      %v983 = vpop.permute.xlu0 %982
      %984 = vrot.lane.b32.xlu0 %v475, 12
      %v985 = vpop.permute.xlu0 %984
      %986 = vrot.lane.b32.xlu0 %v476, 12
      %v987 = vpop.permute.xlu0 %986
      %988 = vrot.lane.b32.xlu0 %v477, 12
      %v989 = vpop.permute.xlu0 %988
      %990 = vrot.lane.b32.xlu0 %v478, 12
      %v991 = vpop.permute.xlu0 %990
      %1056 = vrot.lane.b32.xlu0 %v479, 16
      %v1057 = vpop.permute.xlu0 %1056
      %1058 = vrot.lane.b32.xlu0 %v480, 16
      %v1059 = vpop.permute.xlu0 %1058
      %1060 = vrot.lane.b32.xlu0 %v481, 16
      %v1061 = vpop.permute.xlu0 %1060
      %1062 = vrot.lane.b32.xlu0 %v482, 16
      %v1063 = vpop.permute.xlu0 %1062
      %1064 = vrot.lane.b32.xlu0 %v483, 16
      %v1065 = vpop.permute.xlu0 %1064
      %1066 = vrot.lane.b32.xlu0 %v484, 16
      %v1067 = vpop.permute.xlu0 %1066
      %1068 = vrot.lane.b32.xlu0 %v485, 16
      %v1069 = vpop.permute.xlu0 %1068
      %1070 = vrot.lane.b32.xlu0 %v486, 16
      %v1071 = vpop.permute.xlu0 %1070
      %1072 = vrot.lane.b32.xlu0 %v487, 16
      %v1073 = vpop.permute.xlu0 %1072
      %1074 = vrot.lane.b32.xlu0 %v488, 16
      %v1075 = vpop.permute.xlu0 %1074
      %1076 = vrot.lane.b32.xlu0 %v489, 16
      %v1077 = vpop.permute.xlu0 %1076
      %1078 = vrot.lane.b32.xlu0 %v490, 16
      %v1079 = vpop.permute.xlu0 %1078
      %1080 = vrot.lane.b32.xlu0 %v491, 16
      %v1081 = vpop.permute.xlu0 %1080
      %1082 = vrot.lane.b32.xlu0 %v492, 16
      %v1083 = vpop.permute.xlu0 %1082
      %1084 = vrot.lane.b32.xlu0 %v493, 16
      %v1085 = vpop.permute.xlu0 %1084
      %1086 = vrot.lane.b32.xlu0 %v494, 16
      %v1087 = vpop.permute.xlu0 %1086
      %1088 = vrot.lane.b32.xlu0 %v495, 16
      %v1089 = vpop.permute.xlu0 %1088
      %1090 = vrot.lane.b32.xlu0 %v496, 16
      %v1091 = vpop.permute.xlu0 %1090
      %1092 = vrot.lane.b32.xlu0 %v497, 16
      %v1093 = vpop.permute.xlu0 %1092
      %1094 = vrot.lane.b32.xlu0 %v498, 16
      %v1095 = vpop.permute.xlu0 %1094
      %1096 = vrot.lane.b32.xlu0 %v499, 16
      %v1097 = vpop.permute.xlu0 %1096
      %1098 = vrot.lane.b32.xlu0 %v500, 16
      %v1099 = vpop.permute.xlu0 %1098
      %1100 = vrot.lane.b32.xlu0 %v501, 16
      %v1101 = vpop.permute.xlu0 %1100
      %1102 = vrot.lane.b32.xlu0 %v502, 16
      %v1103 = vpop.permute.xlu0 %1102
      %1104 = vrot.lane.b32.xlu0 %v503, 16
      %v1105 = vpop.permute.xlu0 %1104
      %1106 = vrot.lane.b32.xlu0 %v504, 16
      %v1107 = vpop.permute.xlu0 %1106
      %1108 = vrot.lane.b32.xlu0 %v505, 16
      %v1109 = vpop.permute.xlu0 %1108
      %1110 = vrot.lane.b32.xlu0 %v506, 16
      %v1111 = vpop.permute.xlu0 %1110
      %1112 = vrot.lane.b32.xlu0 %v507, 16
      %v1113 = vpop.permute.xlu0 %1112
      %1114 = vrot.lane.b32.xlu0 %v508, 16
      %v1115 = vpop.permute.xlu0 %1114
      %1116 = vrot.lane.b32.xlu0 %v509, 16
      %v1117 = vpop.permute.xlu0 %1116
      %1118 = vrot.lane.b32.xlu0 %v510, 16
      %v1119 = vpop.permute.xlu0 %1118
      %1184 = vrot.lane.b32.xlu0 %v511, 20
      %v1185 = vpop.permute.xlu0 %1184
      %1186 = vrot.lane.b32.xlu0 %v512, 20
      %v1187 = vpop.permute.xlu0 %1186
      %1188 = vrot.lane.b32.xlu0 %v513, 20
      %v1189 = vpop.permute.xlu0 %1188
      %1190 = vrot.lane.b32.xlu0 %v514, 20
      %v1191 = vpop.permute.xlu0 %1190
      %1192 = vrot.lane.b32.xlu0 %v515, 20
      %v1193 = vpop.permute.xlu0 %1192
      %1194 = vrot.lane.b32.xlu0 %v516, 20
      %v1195 = vpop.permute.xlu0 %1194
      %1196 = vrot.lane.b32.xlu0 %v517, 20
      %v1197 = vpop.permute.xlu0 %1196
      %1198 = vrot.lane.b32.xlu0 %v518, 20
      %v1199 = vpop.permute.xlu0 %1198
      %1200 = vrot.lane.b32.xlu0 %v519, 20
      %v1201 = vpop.permute.xlu0 %1200
      %1202 = vrot.lane.b32.xlu0 %v520, 20
      %v1203 = vpop.permute.xlu0 %1202
      %1204 = vrot.lane.b32.xlu0 %v521, 20
      %v1205 = vpop.permute.xlu0 %1204
      %1206 = vrot.lane.b32.xlu0 %v522, 20
      %v1207 = vpop.permute.xlu0 %1206
      %1208 = vrot.lane.b32.xlu0 %v523, 20
      %v1209 = vpop.permute.xlu0 %1208
      %1210 = vrot.lane.b32.xlu0 %v524, 20
      %v1211 = vpop.permute.xlu0 %1210
      %1212 = vrot.lane.b32.xlu0 %v525, 20
      %v1213 = vpop.permute.xlu0 %1212
      %1214 = vrot.lane.b32.xlu0 %v526, 20
      %v1215 = vpop.permute.xlu0 %1214
      %1216 = vrot.lane.b32.xlu0 %v527, 20
      %v1217 = vpop.permute.xlu0 %1216
      %1218 = vrot.lane.b32.xlu0 %v528, 20
      %v1219 = vpop.permute.xlu0 %1218
      %1220 = vrot.lane.b32.xlu0 %v529, 20
      %v1221 = vpop.permute.xlu0 %1220
      %1222 = vrot.lane.b32.xlu0 %v530, 20
      %v1223 = vpop.permute.xlu0 %1222
      %1224 = vrot.lane.b32.xlu0 %v531, 20
      %v1225 = vpop.permute.xlu0 %1224
      %1226 = vrot.lane.b32.xlu0 %v532, 20
      %v1227 = vpop.permute.xlu0 %1226
      %1228 = vrot.lane.b32.xlu0 %v533, 20
      %v1229 = vpop.permute.xlu0 %1228
      %1230 = vrot.lane.b32.xlu0 %v534, 20
      %v1231 = vpop.permute.xlu0 %1230
      %1232 = vrot.lane.b32.xlu0 %v535, 20
      %v1233 = vpop.permute.xlu0 %1232
      %1234 = vrot.lane.b32.xlu0 %v536, 20
      %v1235 = vpop.permute.xlu0 %1234
      %1236 = vrot.lane.b32.xlu0 %v537, 20
      %v1237 = vpop.permute.xlu0 %1236
      %1238 = vrot.lane.b32.xlu0 %v538, 20
      %v1239 = vpop.permute.xlu0 %1238
      %1240 = vrot.lane.b32.xlu0 %v539, 20
      %v1241 = vpop.permute.xlu0 %1240
      %1242 = vrot.lane.b32.xlu0 %v540, 20
      %v1243 = vpop.permute.xlu0 %1242
      %1244 = vrot.lane.b32.xlu0 %v541, 20
      %v1245 = vpop.permute.xlu0 %1244
      %1246 = vrot.lane.b32.xlu0 %v542, 20
      %v1247 = vpop.permute.xlu0 %1246
      %1312 = vrot.lane.b32.xlu0 %v544, 24
      %v1313 = vpop.permute.xlu0 %1312
      %1314 = vrot.lane.b32.xlu0 %v545, 24
      %v1315 = vpop.permute.xlu0 %1314
      %1316 = vrot.lane.b32.xlu0 %v546, 24
      %v1317 = vpop.permute.xlu0 %1316
      %1318 = vrot.lane.b32.xlu0 %v547, 24
      %v1319 = vpop.permute.xlu0 %1318
      %1320 = vrot.lane.b32.xlu0 %v548, 24
      %v1321 = vpop.permute.xlu0 %1320
      %1322 = vrot.lane.b32.xlu0 %v549, 24
      %v1323 = vpop.permute.xlu0 %1322
      %1324 = vrot.lane.b32.xlu0 %v550, 24
      %v1325 = vpop.permute.xlu0 %1324
      %1326 = vrot.lane.b32.xlu0 %v551, 24
      %v1327 = vpop.permute.xlu0 %1326
      %1328 = vrot.lane.b32.xlu0 %v552, 24
      %v1329 = vpop.permute.xlu0 %1328
      %1330 = vrot.lane.b32.xlu0 %v553, 24
      %v1331 = vpop.permute.xlu0 %1330
      %1332 = vrot.lane.b32.xlu0 %v554, 24
      %v1333 = vpop.permute.xlu0 %1332
      %1334 = vrot.lane.b32.xlu0 %v555, 24
      %v1335 = vpop.permute.xlu0 %1334
      %1336 = vrot.lane.b32.xlu0 %v556, 24
      %v1337 = vpop.permute.xlu0 %1336
      %1338 = vrot.lane.b32.xlu0 %v557, 24
      %v1339 = vpop.permute.xlu0 %1338
      %1340 = vrot.lane.b32.xlu0 %v558, 24
      %v1341 = vpop.permute.xlu0 %1340
      %1342 = vrot.lane.b32.xlu0 %v559, 24
      %v1343 = vpop.permute.xlu0 %1342
      %1344 = vrot.lane.b32.xlu0 %v560, 24
      %v1345 = vpop.permute.xlu0 %1344
      %1346 = vrot.lane.b32.xlu0 %v561, 24
      %v1347 = vpop.permute.xlu0 %1346
      %1348 = vrot.lane.b32.xlu0 %v562, 24
      %v1349 = vpop.permute.xlu0 %1348
      %1350 = vrot.lane.b32.xlu0 %v563, 24
      %v1351 = vpop.permute.xlu0 %1350
      %1352 = vrot.lane.b32.xlu0 %v564, 24
      %v1353 = vpop.permute.xlu0 %1352
      %1354 = vrot.lane.b32.xlu0 %v565, 24
      %v1355 = vpop.permute.xlu0 %1354
      %1356 = vrot.lane.b32.xlu0 %v566, 24
      %v1357 = vpop.permute.xlu0 %1356
      %1358 = vrot.lane.b32.xlu0 %v567, 24
      %v1359 = vpop.permute.xlu0 %1358
      %1360 = vrot.lane.b32.xlu0 %v568, 24
      %v1361 = vpop.permute.xlu0 %1360
      %1362 = vrot.lane.b32.xlu0 %v569, 24
      %v1363 = vpop.permute.xlu0 %1362
      %1364 = vrot.lane.b32.xlu0 %v570, 24
      %v1365 = vpop.permute.xlu0 %1364
      %1366 = vrot.lane.b32.xlu0 %v571, 24
      %v1367 = vpop.permute.xlu0 %1366
      %1368 = vrot.lane.b32.xlu0 %v572, 24
      %v1369 = vpop.permute.xlu0 %1368
      %1370 = vrot.lane.b32.xlu0 %v573, 24
      %v1371 = vpop.permute.xlu0 %1370
      %1372 = vrot.lane.b32.xlu0 %v574, 24
      %v1373 = vpop.permute.xlu0 %1372
      %1374 = vrot.lane.b32.xlu0 %v575, 24
      %v1375 = vpop.permute.xlu0 %1374
      %1440 = vrot.lane.b32.xlu0 %v576, 28
      %v1441 = vpop.permute.xlu0 %1440
      %1442 = vrot.lane.b32.xlu0 %v577, 28
      %v1443 = vpop.permute.xlu0 %1442
      %1444 = vrot.lane.b32.xlu0 %v578, 28
      %v1445 = vpop.permute.xlu0 %1444
      %1446 = vrot.lane.b32.xlu0 %v579, 28
      %v1447 = vpop.permute.xlu0 %1446
      %1448 = vrot.lane.b32.xlu0 %v580, 28
      %v1449 = vpop.permute.xlu0 %1448
      %1450 = vrot.lane.b32.xlu0 %v581, 28
      %v1451 = vpop.permute.xlu0 %1450
      %1452 = vrot.lane.b32.xlu0 %v582, 28
      %v1453 = vpop.permute.xlu0 %1452
      %1454 = vrot.lane.b32.xlu0 %v583, 28
      %v1455 = vpop.permute.xlu0 %1454
      %1456 = vrot.lane.b32.xlu0 %v584, 28
      %v1457 = vpop.permute.xlu0 %1456
      %1458 = vrot.lane.b32.xlu0 %v585, 28
      %v1459 = vpop.permute.xlu0 %1458
      %1460 = vrot.lane.b32.xlu0 %v586, 28
      %v1461 = vpop.permute.xlu0 %1460
      %1462 = vrot.lane.b32.xlu0 %v587, 28
      %v1463 = vpop.permute.xlu0 %1462
      %1464 = vrot.lane.b32.xlu0 %v588, 28
      %v1465 = vpop.permute.xlu0 %1464
      %1466 = vrot.lane.b32.xlu0 %v589, 28
      %v1467 = vpop.permute.xlu0 %1466
      %1468 = vrot.lane.b32.xlu0 %v590, 28
      %v1469 = vpop.permute.xlu0 %1468
      %1470 = vrot.lane.b32.xlu0 %v591, 28
      %v1471 = vpop.permute.xlu0 %1470
      %1472 = vrot.lane.b32.xlu0 %v592, 28
      %v1473 = vpop.permute.xlu0 %1472
      %1474 = vrot.lane.b32.xlu0 %v593, 28
      %v1475 = vpop.permute.xlu0 %1474
      %1476 = vrot.lane.b32.xlu0 %v594, 28
      %v1477 = vpop.permute.xlu0 %1476
      %1478 = vrot.lane.b32.xlu0 %v595, 28
      %v1479 = vpop.permute.xlu0 %1478
      %1480 = vrot.lane.b32.xlu0 %v596, 28
      %v1481 = vpop.permute.xlu0 %1480
      %1482 = vrot.lane.b32.xlu0 %v597, 28
      %v1483 = vpop.permute.xlu0 %1482
      %1484 = vrot.lane.b32.xlu0 %v598, 28
      %v1485 = vpop.permute.xlu0 %1484
      %1486 = vrot.lane.b32.xlu0 %v599, 28
      %v1487 = vpop.permute.xlu0 %1486
      %1488 = vrot.lane.b32.xlu0 %v600, 28
      %v1489 = vpop.permute.xlu0 %1488
      %1490 = vrot.lane.b32.xlu0 %v601, 28
      %v1491 = vpop.permute.xlu0 %1490
      %1492 = vrot.lane.b32.xlu0 %v602, 28
      %v1493 = vpop.permute.xlu0 %1492
      %1494 = vrot.lane.b32.xlu0 %v603, 28
      %v1495 = vpop.permute.xlu0 %1494
      %1496 = vrot.lane.b32.xlu0 %v604, 28
      %v1497 = vpop.permute.xlu0 %1496
      %1498 = vrot.lane.b32.xlu0 %v605, 28
      %v1499 = vpop.permute.xlu0 %1498
      %1500 = vrot.lane.b32.xlu0 %v606, 28
      %v1501 = vpop.permute.xlu0 %1500
      %1502 = vrot.lane.b32.xlu0 %v607, 28
      %v1503 = vpop.permute.xlu0 %1502
      %1568 = vrot.lane.b32.xlu0 %v608, 32
      %v1569 = vpop.permute.xlu0 %1568
      %1570 = vrot.lane.b32.xlu0 %v609, 32
      %v1571 = vpop.permute.xlu0 %1570
      %1572 = vrot.lane.b32.xlu0 %v610, 32
      %v1573 = vpop.permute.xlu0 %1572
      %1574 = vrot.lane.b32.xlu0 %v611, 32
      %v1575 = vpop.permute.xlu0 %1574
      %1576 = vrot.lane.b32.xlu0 %v612, 32
      %v1577 = vpop.permute.xlu0 %1576
      %1578 = vrot.lane.b32.xlu0 %v613, 32
      %v1579 = vpop.permute.xlu0 %1578
      %1580 = vrot.lane.b32.xlu0 %v614, 32
      %v1581 = vpop.permute.xlu0 %1580
      %1582 = vrot.lane.b32.xlu0 %v615, 32
      %v1583 = vpop.permute.xlu0 %1582
      %1584 = vrot.lane.b32.xlu0 %v616, 32
      %v1585 = vpop.permute.xlu0 %1584
      %1586 = vrot.lane.b32.xlu0 %v617, 32
      %v1587 = vpop.permute.xlu0 %1586
      %1588 = vrot.lane.b32.xlu0 %v618, 32
      %v1589 = vpop.permute.xlu0 %1588
      %1590 = vrot.lane.b32.xlu0 %v619, 32
      %v1591 = vpop.permute.xlu0 %1590
      %1592 = vrot.lane.b32.xlu0 %v620, 32
      %v1593 = vpop.permute.xlu0 %1592
      %1594 = vrot.lane.b32.xlu0 %v621, 32
      %v1595 = vpop.permute.xlu0 %1594
      %1596 = vrot.lane.b32.xlu0 %v622, 32
      %v1597 = vpop.permute.xlu0 %1596
      %1598 = vrot.lane.b32.xlu0 %v623, 32
      %v1599 = vpop.permute.xlu0 %1598
      %1600 = vrot.lane.b32.xlu0 %v624, 32
      %v1601 = vpop.permute.xlu0 %1600
      %1602 = vrot.lane.b32.xlu0 %v625, 32
      %v1603 = vpop.permute.xlu0 %1602
      %1604 = vrot.lane.b32.xlu0 %v626, 32
      %v1605 = vpop.permute.xlu0 %1604
      %1606 = vrot.lane.b32.xlu0 %v627, 32
      %v1607 = vpop.permute.xlu0 %1606
      %1608 = vrot.lane.b32.xlu0 %v628, 32
      %v1609 = vpop.permute.xlu0 %1608
      %1610 = vrot.lane.b32.xlu0 %v629, 32
      %v1611 = vpop.permute.xlu0 %1610
      %1612 = vrot.lane.b32.xlu0 %v630, 32
      %v1613 = vpop.permute.xlu0 %1612
      %1614 = vrot.lane.b32.xlu0 %v631, 32
      %v1615 = vpop.permute.xlu0 %1614
      %1616 = vrot.lane.b32.xlu0 %v632, 32
      %v1617 = vpop.permute.xlu0 %1616
      %1618 = vrot.lane.b32.xlu0 %v633, 32
      %v1619 = vpop.permute.xlu0 %1618
      %1620 = vrot.lane.b32.xlu0 %v634, 32
      %v1621 = vpop.permute.xlu0 %1620
      %1622 = vrot.lane.b32.xlu0 %v635, 32
      %v1623 = vpop.permute.xlu0 %1622
      %1624 = vrot.lane.b32.xlu0 %v636, 32
      %v1625 = vpop.permute.xlu0 %1624
      %1626 = vrot.lane.b32.xlu0 %v637, 32
      %v1627 = vpop.permute.xlu0 %1626
      %1628 = vrot.lane.b32.xlu0 %v638, 32
      %v1629 = vpop.permute.xlu0 %1628
      %1630 = vrot.lane.b32.xlu0 %v639, 32
      %v1631 = vpop.permute.xlu0 %1630
      %v1664 = vsel %vm225, %v351, %v673
      %v1665 = vsel %vm225, %v352, %v675
      %v1666 = vsel %vm225, %v353, %v677
      %v1667 = vsel %vm225, %v354, %v679
      %v1668 = vsel %vm225, %v355, %v681
      %v1669 = vsel %vm225, %v356, %v683
      %v1670 = vsel %vm225, %v357, %v685
      %v1671 = vsel %vm225, %v358, %v687
      %v1672 = vsel %vm225, %v359, %v689
      %v1673 = vsel %vm225, %v360, %v691
      %v1674 = vsel %vm225, %v361, %v693
      %v1675 = vsel %vm225, %v362, %v695
      %v1676 = vsel %vm225, %v363, %v697
      %v1677 = vsel %vm225, %v364, %v699
      %v1678 = vsel %vm225, %v365, %v701
      %v1679 = vsel %vm225, %v366, %v703
      %v1680 = vsel %vm225, %v367, %v705
      %v1681 = vsel %vm225, %v368, %v707
      %v1682 = vsel %vm225, %v369, %v709
      %v1683 = vsel %vm225, %v370, %v711
      %v1684 = vsel %vm225, %v371, %v713
      %v1685 = vsel %vm225, %v372, %v715
      %v1686 = vsel %vm225, %v373, %v717
      %v1687 = vsel %vm225, %v374, %v719
      %v1688 = vsel %vm225, %v375, %v721
      %v1689 = vsel %vm225, %v376, %v723
      %v1690 = vsel %vm225, %v377, %v725
      %v1691 = vsel %vm225, %v378, %v727
      %v1692 = vsel %vm225, %v379, %v729
      %v1693 = vsel %vm225, %v380, %v731
      %v1694 = vsel %vm225, %v381, %v733
      %v1695 = vsel %vm225, %v382, %v735
      %vm1696 = vcmask 64512
      %v1697 = vsel %vm1696, %v1664, %v801
      %v1698 = vsel %vm1696, %v1665, %v803
      %v1699 = vsel %vm1696, %v1666, %v805
      %v1700 = vsel %vm1696, %v1667, %v807
      %v1701 = vsel %vm1696, %v1668, %v809
      %v1702 = vsel %vm1696, %v1669, %v811
      %v1703 = vsel %vm1696, %v1670, %v813
      %v1704 = vsel %vm1696, %v1671, %v815
      %v1705 = vsel %vm1696, %v1672, %v817
      %v1706 = vsel %vm1696, %v1673, %v819
      %v1707 = vsel %vm1696, %v1674, %v821
      %v1708 = vsel %vm1696, %v1675, %v823
      %v1709 = vsel %vm1696, %v1676, %v825
      %v1710 = vsel %vm1696, %v1677, %v827
      %v1711 = vsel %vm1696, %v1678, %v829
      %v1712 = vsel %vm1696, %v1679, %v831
      %v1713 = vsel %vm1696, %v1680, %v833
      %v1714 = vsel %vm1696, %v1681, %v835
      %v1715 = vsel %vm1696, %v1682, %v837
      %v1716 = vsel %vm1696, %v1683, %v839
      %v1717 = vsel %vm1696, %v1684, %v841
      %v1718 = vsel %vm1696, %v1685, %v843
      %v1719 = vsel %vm1696, %v1686, %v845
      %v1720 = vsel %vm1696, %v1687, %v847
      %v1721 = vsel %vm1696, %v1688, %v849
      %v1722 = vsel %vm1696, %v1689, %v851
      %v1723 = vsel %vm1696, %v1690, %v853
      %v1724 = vsel %vm1696, %v1691, %v855
      %v1725 = vsel %vm1696, %v1692, %v857
      %v1726 = vsel %vm1696, %v1693, %v859
      %v1727 = vsel %vm1696, %v1694, %v861
      %v1728 = vsel %vm1696, %v1695, %v863
      %vm1729 = vcmask 97280
      %v1730 = vsel %vm1729, %v1697, %v929
      %v1731 = vsel %vm1729, %v1698, %v931
      %v1732 = vsel %vm1729, %v1699, %v933
      %v1733 = vsel %vm1729, %v1700, %v935
      %v1734 = vsel %vm1729, %v1701, %v937
      %v1735 = vsel %vm1729, %v1702, %v939
      %v1736 = vsel %vm1729, %v1703, %v941
      %v1737 = vsel %vm1729, %v1704, %v943
      %v1738 = vsel %vm1729, %v1705, %v945
      %v1739 = vsel %vm1729, %v1706, %v947
      %v1740 = vsel %vm1729, %v1707, %v949
      %v1741 = vsel %vm1729, %v1708, %v951
      %v1742 = vsel %vm1729, %v1709, %v953
      %v1743 = vsel %vm1729, %v1710, %v955
      %v1744 = vsel %vm1729, %v1711, %v957
      %v1745 = vsel %vm1729, %v1712, %v959
      %v1746 = vsel %vm1729, %v1713, %v961
      %v1747 = vsel %vm1729, %v1714, %v963
      %v1748 = vsel %vm1729, %v1715, %v965
      %v1749 = vsel %vm1729, %v1716, %v967
      %v1750 = vsel %vm1729, %v1717, %v969
      %v1751 = vsel %vm1729, %v1718, %v971
      %v1752 = vsel %vm1729, %v1719, %v973
      %v1753 = vsel %vm1729, %v1720, %v975
      %v1754 = vsel %vm1729, %v1721, %v977
      %v1755 = vsel %vm1729, %v1722, %v979
      %v1756 = vsel %vm1729, %v1723, %v981
      %v1757 = vsel %vm1729, %v1724, %v983
      %v1758 = vsel %vm1729, %v1725, %v985
      %v1759 = vsel %vm1729, %v1726, %v987
      %v1760 = vsel %vm1729, %v1727, %v989
      %v1761 = vsel %vm1729, %v1728, %v991
      %vm1762 = vcmask 130048
      %v1763 = vsel %vm1762, %v1730, %v1057
      %v1764 = vsel %vm1762, %v1731, %v1059
      %v1765 = vsel %vm1762, %v1732, %v1061
      %v1766 = vsel %vm1762, %v1733, %v1063
      %v1767 = vsel %vm1762, %v1734, %v1065
      %v1768 = vsel %vm1762, %v1735, %v1067
      %v1769 = vsel %vm1762, %v1736, %v1069
      %v1770 = vsel %vm1762, %v1737, %v1071
      %v1771 = vsel %vm1762, %v1738, %v1073
      %v1772 = vsel %vm1762, %v1739, %v1075
      %v1773 = vsel %vm1762, %v1740, %v1077
      %v1774 = vsel %vm1762, %v1741, %v1079
      %v1775 = vsel %vm1762, %v1742, %v1081
      %v1776 = vsel %vm1762, %v1743, %v1083
      %v1777 = vsel %vm1762, %v1744, %v1085
      %v1778 = vsel %vm1762, %v1745, %v1087
      %v1779 = vsel %vm1762, %v1746, %v1089
      %v1780 = vsel %vm1762, %v1747, %v1091
      %v1781 = vsel %vm1762, %v1748, %v1093
      %v1782 = vsel %vm1762, %v1749, %v1095
      %v1783 = vsel %vm1762, %v1750, %v1097
      %v1784 = vsel %vm1762, %v1751, %v1099
      %v1785 = vsel %vm1762, %v1752, %v1101
      %v1786 = vsel %vm1762, %v1753, %v1103
      %v1787 = vsel %vm1762, %v1754, %v1105
      %v1788 = vsel %vm1762, %v1755, %v1107
      %v1789 = vsel %vm1762, %v1756, %v1109
      %v1790 = vsel %vm1762, %v1757, %v1111
      %v1791 = vsel %vm1762, %v1758, %v1113
      %v1792 = vsel %vm1762, %v1759, %v1115
      %v1793 = vsel %vm1762, %v1760, %v1117
      %v1794 = vsel %vm1762, %v1761, %v1119
      %vm1795 = vcmask 162816
      %v1796 = vsel %vm1795, %v1763, %v1185
      %v1797 = vsel %vm1795, %v1764, %v1187
      %v1798 = vsel %vm1795, %v1765, %v1189
      %v1799 = vsel %vm1795, %v1766, %v1191
      %v1800 = vsel %vm1795, %v1767, %v1193
      %v1801 = vsel %vm1795, %v1768, %v1195
      %v1802 = vsel %vm1795, %v1769, %v1197
      %v1803 = vsel %vm1795, %v1770, %v1199
      %v1804 = vsel %vm1795, %v1771, %v1201
      %v1805 = vsel %vm1795, %v1772, %v1203
      %v1806 = vsel %vm1795, %v1773, %v1205
      %v1807 = vsel %vm1795, %v1774, %v1207
      %v1808 = vsel %vm1795, %v1775, %v1209
      %v1809 = vsel %vm1795, %v1776, %v1211
      %v1810 = vsel %vm1795, %v1777, %v1213
      %v1811 = vsel %vm1795, %v1778, %v1215
      %v1812 = vsel %vm1795, %v1779, %v1217
      %v1813 = vsel %vm1795, %v1780, %v1219
      %v1814 = vsel %vm1795, %v1781, %v1221
      %v1815 = vsel %vm1795, %v1782, %v1223
      %v1816 = vsel %vm1795, %v1783, %v1225
      %v1817 = vsel %vm1795, %v1784, %v1227
      %v1818 = vsel %vm1795, %v1785, %v1229
      %v1819 = vsel %vm1795, %v1786, %v1231
      %v1820 = vsel %vm1795, %v1787, %v1233
      %v1821 = vsel %vm1795, %v1788, %v1235
      %v1822 = vsel %vm1795, %v1789, %v1237
      %v1823 = vsel %vm1795, %v1790, %v1239
      %v1824 = vsel %vm1795, %v1791, %v1241
      %v1825 = vsel %vm1795, %v1792, %v1243
      %v1826 = vsel %vm1795, %v1793, %v1245
      %v1827 = vsel %vm1795, %v1794, %v1247
      %vm1828 = vcmask 195584
      %v1829 = vsel %vm1828, %v1796, %v1313
      %v1830 = vsel %vm1828, %v1797, %v1315
      %v1831 = vsel %vm1828, %v1798, %v1317
      %v1832 = vsel %vm1828, %v1799, %v1319
      %v1833 = vsel %vm1828, %v1800, %v1321
      %v1834 = vsel %vm1828, %v1801, %v1323
      %v1835 = vsel %vm1828, %v1802, %v1325
      %v1836 = vsel %vm1828, %v1803, %v1327
      %v1837 = vsel %vm1828, %v1804, %v1329
      %v1838 = vsel %vm1828, %v1805, %v1331
      %v1839 = vsel %vm1828, %v1806, %v1333
      %v1840 = vsel %vm1828, %v1807, %v1335
      %v1841 = vsel %vm1828, %v1808, %v1337
      %v1842 = vsel %vm1828, %v1809, %v1339
      %v1843 = vsel %vm1828, %v1810, %v1341
      %v1844 = vsel %vm1828, %v1811, %v1343
      %v1845 = vsel %vm1828, %v1812, %v1345
      %v1846 = vsel %vm1828, %v1813, %v1347
      %v1847 = vsel %vm1828, %v1814, %v1349
      %v1848 = vsel %vm1828, %v1815, %v1351
      %v1849 = vsel %vm1828, %v1816, %v1353
      %v1850 = vsel %vm1828, %v1817, %v1355
      %v1851 = vsel %vm1828, %v1818, %v1357
      %v1852 = vsel %vm1828, %v1819, %v1359
      %v1853 = vsel %vm1828, %v1820, %v1361
      %v1854 = vsel %vm1828, %v1821, %v1363
      %v1855 = vsel %vm1828, %v1822, %v1365
      %v1856 = vsel %vm1828, %v1823, %v1367
      %v1857 = vsel %vm1828, %v1824, %v1369
      %v1858 = vsel %vm1828, %v1825, %v1371
      %v1859 = vsel %vm1828, %v1826, %v1373
      %v1860 = vsel %vm1828, %v1827, %v1375
      %vm1861 = vcmask 228352
      %v1862 = vsel %vm1861, %v1829, %v1441
      %v1863 = vsel %vm1861, %v1830, %v1443
      %v1864 = vsel %vm1861, %v1831, %v1445
      %v1865 = vsel %vm1861, %v1832, %v1447
      %v1866 = vsel %vm1861, %v1833, %v1449
      %v1867 = vsel %vm1861, %v1834, %v1451
      %v1868 = vsel %vm1861, %v1835, %v1453
      %v1869 = vsel %vm1861, %v1836, %v1455
      %v1870 = vsel %vm1861, %v1837, %v1457
      %v1871 = vsel %vm1861, %v1838, %v1459
      %v1872 = vsel %vm1861, %v1839, %v1461
      %v1873 = vsel %vm1861, %v1840, %v1463
      %v1874 = vsel %vm1861, %v1841, %v1465
      %v1875 = vsel %vm1861, %v1842, %v1467
      %v1876 = vsel %vm1861, %v1843, %v1469
      %v1877 = vsel %vm1861, %v1844, %v1471
      %v1878 = vsel %vm1861, %v1845, %v1473
      %v1879 = vsel %vm1861, %v1846, %v1475
      %v1880 = vsel %vm1861, %v1847, %v1477
      %v1881 = vsel %vm1861, %v1848, %v1479
      %v1882 = vsel %vm1861, %v1849, %v1481
      %v1883 = vsel %vm1861, %v1850, %v1483
      %v1884 = vsel %vm1861, %v1851, %v1485
      %v1885 = vsel %vm1861, %v1852, %v1487
      %v1886 = vsel %vm1861, %v1853, %v1489
      %v1887 = vsel %vm1861, %v1854, %v1491
      %v1888 = vsel %vm1861, %v1855, %v1493
      %v1889 = vsel %vm1861, %v1856, %v1495
      %v1890 = vsel %vm1861, %v1857, %v1497
      %v1891 = vsel %vm1861, %v1858, %v1499
      %v1892 = vsel %vm1861, %v1859, %v1501
      %v1893 = vsel %vm1861, %v1860, %v1503
      %vm1894 = vcmask 261120
      %v1895 = vsel %vm1894, %v1862, %v1569
      %v1896 = vsel %vm1894, %v1863, %v1571
      %v1897 = vsel %vm1894, %v1864, %v1573
      %v1898 = vsel %vm1894, %v1865, %v1575
      %v1899 = vsel %vm1894, %v1866, %v1577
      %v1900 = vsel %vm1894, %v1867, %v1579
      %v1901 = vsel %vm1894, %v1868, %v1581
      %v1902 = vsel %vm1894, %v1869, %v1583
      %v1903 = vsel %vm1894, %v1870, %v1585
      %v1904 = vsel %vm1894, %v1871, %v1587
      %v1905 = vsel %vm1894, %v1872, %v1589
      %v1906 = vsel %vm1894, %v1873, %v1591
      %v1907 = vsel %vm1894, %v1874, %v1593
      %v1908 = vsel %vm1894, %v1875, %v1595
      %v1909 = vsel %vm1894, %v1876, %v1597
      %v1910 = vsel %vm1894, %v1877, %v1599
      %v1911 = vsel %vm1894, %v1878, %v1601
      %v1912 = vsel %vm1894, %v1879, %v1603
      %v1913 = vsel %vm1894, %v1880, %v1605
      %v1914 = vsel %vm1894, %v1881, %v1607
      %v1915 = vsel %vm1894, %v1882, %v1609
      %v1916 = vsel %vm1894, %v1883, %v1611
      %v1917 = vsel %vm1894, %v1884, %v1613
      %v1918 = vsel %vm1894, %v1885, %v1615
      %v1919 = vsel %vm1894, %v1886, %v1617
      %v1920 = vsel %vm1894, %v1887, %v1619
      %v1921 = vsel %vm1894, %v1888, %v1621
      %v1922 = vsel %vm1894, %v1889, %v1623
      %v1923 = vsel %vm1894, %v1890, %v1625
      %v1924 = vsel %vm1894, %v1891, %v1627
      %v1925 = vsel %vm1894, %v1892, %v1629
      %v1926 = vsel %vm1894, %v1893, %v1631
      %v1927 = vld [vmem:[%s2] sm:$0x1]
      %v1929 = vperm.slane %v1927, 0
      %vm1931 = vcmask 293888
      %v1933 = vsel %vm1931, %v1895, 0
      %v1936 = vsel %vm1931, %v1896, 0
      %v1939 = vsel %vm1931, %v1897, 0
      %v1942 = vsel %vm1931, %v1898, 0
      %v1945 = vsel %vm1931, %v1899, 0
      %v1948 = vsel %vm1931, %v1900, 0
      %v1951 = vsel %vm1931, %v1901, 0
      %v1954 = vsel %vm1931, %v1902, 0
      %v1957 = vsel %vm1931, %v1903, 0
      %v1960 = vsel %vm1931, %v1904, 0
      %v1963 = vsel %vm1931, %v1905, 0
      %v1966 = vsel %vm1931, %v1906, 0
      %v1969 = vsel %vm1931, %v1907, 0
      %v1972 = vsel %vm1931, %v1908, 0
      %v1975 = vsel %vm1931, %v1909, 0
      %v1978 = vsel %vm1931, %v1910, 0
      %v1981 = vsel %vm1931, %v1911, 0
      %v1984 = vsel %vm1931, %v1912, 0
      %v1987 = vsel %vm1931, %v1913, 0
      %v1990 = vsel %vm1931, %v1914, 0
      %v1993 = vsel %vm1931, %v1915, 0
      %v1996 = vsel %vm1931, %v1916, 0
      %v1999 = vsel %vm1931, %v1917, 0
      %v2002 = vsel %vm1931, %v1918, 0
      %v2005 = vsel %vm1931, %v1919, 0
      %v2008 = vsel %vm1931, %v1920, 0
      %v2011 = vsel %vm1931, %v1921, 0
      %v2014 = vsel %vm1931, %v1922, 0
      %v2017 = vsel %vm1931, %v1923, 0
      %v2020 = vsel %vm1931, %v1924, 0
      %v2023 = vsel %vm1931, %v1925, 0
      %v2026 = vsel %vm1931, %v1926, 0
      %vm2028 = vcmask 1043456
      %v2030 = vsel %vm2028, %v350, 0
      %2032 = vmatpush.msra.mxu0 0.0
      %2033 = vmatpush.msra.mxu0 0.0
      %2034 = vmatpush.msra.mxu0 0.0
      %2035 = vmatpush.msra.mxu0 0.0
      %2036 = vmatpush.msra.mxu0 0.0
      %2037 = vmatpush.msra.mxu0 0.0
      %2038 = vmatpush.msra.mxu0 0.0
      %2039 = vmatpush.msra.mxu0 0.0
      %2040 = vmatpush.msra.mxu0 0.0
      %2041 = vmatpush.msra.mxu0 0.0
      %2042 = vmatpush.msra.mxu0 0.0
      %2043 = vmatpush.msra.mxu0 %v2030
      %2044 = vmatpush.msra.mxu0 %v349
      %2045 = vmatpush.msra.mxu0 %v348
      %2046 = vmatpush.msra.mxu0 %v347
      %2047 = vmatpush.msra.mxu0 %v346
      %2048 = vmatmul.f32.gmra.mxu0 %v1933
      %v2049 = vpop.f32.mrf.mxu0
      %v2050 = vadd.f32 %v1929, %v2049
      %2051 = vmatmul.f32.gmra.mxu0 %v1936
      %v2052 = vpop.f32.mrf.mxu0
      %v2053 = vadd.f32 %v1929, %v2052
      %2054 = vmatmul.f32.gmra.mxu0 %v1939
      %v2055 = vpop.f32.mrf.mxu0
      %v2056 = vadd.f32 %v1929, %v2055
      %2057 = vmatmul.f32.gmra.mxu0 %v1942
      %v2058 = vpop.f32.mrf.mxu0
      %v2059 = vadd.f32 %v1929, %v2058
      %2060 = vmatmul.f32.gmra.mxu0 %v1945
      %v2061 = vpop.f32.mrf.mxu0
      %v2062 = vadd.f32 %v1929, %v2061
      %2063 = vmatmul.f32.gmra.mxu0 %v1948
      %v2064 = vpop.f32.mrf.mxu0
      %v2065 = vadd.f32 %v1929, %v2064
      %2066 = vmatmul.f32.gmra.mxu0 %v1951
      %v2067 = vpop.f32.mrf.mxu0
      %v2068 = vadd.f32 %v1929, %v2067
      %2069 = vmatmul.f32.gmra.mxu0 %v1954
      %v2070 = vpop.f32.mrf.mxu0
      %v2071 = vadd.f32 %v1929, %v2070
      %2072 = vmatmul.f32.gmra.mxu0 %v1957
      %v2073 = vpop.f32.mrf.mxu0
      %v2074 = vadd.f32 %v1929, %v2073
      %2075 = vmatmul.f32.gmra.mxu0 %v1960
      %v2076 = vpop.f32.mrf.mxu0
      %v2077 = vadd.f32 %v1929, %v2076
      %2078 = vmatmul.f32.gmra.mxu0 %v1963
      %v2079 = vpop.f32.mrf.mxu0
      %v2080 = vadd.f32 %v1929, %v2079
      %2081 = vmatmul.f32.gmra.mxu0 %v1966
      %v2082 = vpop.f32.mrf.mxu0
      %v2083 = vadd.f32 %v1929, %v2082
      %2084 = vmatmul.f32.gmra.mxu0 %v1969
      %v2085 = vpop.f32.mrf.mxu0
      %v2086 = vadd.f32 %v1929, %v2085
      %2087 = vmatmul.f32.gmra.mxu0 %v1972
      %v2088 = vpop.f32.mrf.mxu0
      %v2089 = vadd.f32 %v1929, %v2088
      %2090 = vmatmul.f32.gmra.mxu0 %v1975
      %v2091 = vpop.f32.mrf.mxu0
      %v2092 = vadd.f32 %v1929, %v2091
      %2093 = vmatmul.f32.gmra.mxu0 %v1978
      %v2094 = vpop.f32.mrf.mxu0
      %v2095 = vadd.f32 %v1929, %v2094
      %2096 = vmatmul.f32.gmra.mxu0 %v1981
      %v2097 = vpop.f32.mrf.mxu0
      %v2098 = vadd.f32 %v1929, %v2097
      %2099 = vmatmul.f32.gmra.mxu0 %v1984
      %v2100 = vpop.f32.mrf.mxu0
      %v2101 = vadd.f32 %v1929, %v2100
      %2102 = vmatmul.f32.gmra.mxu0 %v1987
      %v2103 = vpop.f32.mrf.mxu0
      %v2104 = vadd.f32 %v1929, %v2103
      %2105 = vmatmul.f32.gmra.mxu0 %v1990
      %v2106 = vpop.f32.mrf.mxu0
      %v2107 = vadd.f32 %v1929, %v2106
      %2108 = vmatmul.f32.gmra.mxu0 %v1993
      %v2109 = vpop.f32.mrf.mxu0
      %v2110 = vadd.f32 %v1929, %v2109
      %2111 = vmatmul.f32.gmra.mxu0 %v1996
      %v2112 = vpop.f32.mrf.mxu0
      %v2113 = vadd.f32 %v1929, %v2112
      %2114 = vmatmul.f32.gmra.mxu0 %v1999
      %v2115 = vpop.f32.mrf.mxu0
      %v2116 = vadd.f32 %v1929, %v2115
      %2117 = vmatmul.f32.gmra.mxu0 %v2002
      %v2118 = vpop.f32.mrf.mxu0
      %v2119 = vadd.f32 %v1929, %v2118
      %2120 = vmatmul.f32.gmra.mxu0 %v2005
      %v2121 = vpop.f32.mrf.mxu0
      %v2122 = vadd.f32 %v1929, %v2121
      %2123 = vmatmul.f32.gmra.mxu0 %v2008
      %v2124 = vpop.f32.mrf.mxu0
      %v2125 = vadd.f32 %v1929, %v2124
      %2126 = vmatmul.f32.gmra.mxu0 %v2011
      %v2127 = vpop.f32.mrf.mxu0
      %v2128 = vadd.f32 %v1929, %v2127
      %2129 = vmatmul.f32.gmra.mxu0 %v2014
      %v2130 = vpop.f32.mrf.mxu0
      %v2131 = vadd.f32 %v1929, %v2130
      %2132 = vmatmul.f32.gmra.mxu0 %v2017
      %v2133 = vpop.f32.mrf.mxu0
      %v2134 = vadd.f32 %v1929, %v2133
      %2135 = vmatmul.f32.gmra.mxu0 %v2020
      %v2136 = vpop.f32.mrf.mxu0
      %v2137 = vadd.f32 %v1929, %v2136
      %2138 = vmatmul.f32.gmra.mxu0 %v2023
      %v2139 = vpop.f32.mrf.mxu0
      %v2140 = vadd.f32 %v1929, %v2139
      %2141 = vmatmul.f32.gmra.mxu0 %v2026
      %v2142 = vpop.f32.mrf.mxu0
      %v2143 = vadd.f32 %v1929, %v2142
      %2144 = vdwg.mxu0
      %v2145 = vmax.f32 %v2050, 0.0
      %v2146 = vmax.f32 %v2053, 0.0
      %v2147 = vmax.f32 %v2056, 0.0
      %v2148 = vmax.f32 %v2059, 0.0
      %v2149 = vmax.f32 %v2062, 0.0
      %v2150 = vmax.f32 %v2065, 0.0
      %v2151 = vmax.f32 %v2068, 0.0
      %v2152 = vmax.f32 %v2071, 0.0
      %v2153 = vmax.f32 %v2074, 0.0
      %v2154 = vmax.f32 %v2077, 0.0
      %v2155 = vmax.f32 %v2080, 0.0
      %v2156 = vmax.f32 %v2083, 0.0
      %v2157 = vmax.f32 %v2086, 0.0
      %v2158 = vmax.f32 %v2089, 0.0
      %v2159 = vmax.f32 %v2092, 0.0
      %v2160 = vmax.f32 %v2095, 0.0
      %v2161 = vmax.f32 %v2098, 0.0
      %v2162 = vmax.f32 %v2101, 0.0
      %v2163 = vmax.f32 %v2104, 0.0
      %v2164 = vmax.f32 %v2107, 0.0
      %v2165 = vmax.f32 %v2110, 0.0
      %v2166 = vmax.f32 %v2113, 0.0
      %v2167 = vmax.f32 %v2116, 0.0
      %v2168 = vmax.f32 %v2119, 0.0
      %v2169 = vmax.f32 %v2122, 0.0
      %v2170 = vmax.f32 %v2125, 0.0
      %v2171 = vmax.f32 %v2128, 0.0
      %v2172 = vmax.f32 %v2131, 0.0
      %v2173 = vmax.f32 %v2134, 0.0
      %v2174 = vmax.f32 %v2137, 0.0
      %v2175 = vmax.f32 %v2140, 0.0
      %v2176 = vmax.f32 %v2143, 0.0
      %v2177 = vmin.f32 %v2145, 20.0
      %v2178 = vmin.f32 %v2146, 20.0
      %v2179 = vmin.f32 %v2147, 20.0
      %v2180 = vmin.f32 %v2148, 20.0
      %v2181 = vmin.f32 %v2149, 20.0
      %v2182 = vmin.f32 %v2150, 20.0
      %v2183 = vmin.f32 %v2151, 20.0
      %v2184 = vmin.f32 %v2152, 20.0
      %v2185 = vmin.f32 %v2153, 20.0
      %v2186 = vmin.f32 %v2154, 20.0
      %v2187 = vmin.f32 %v2155, 20.0
      %v2188 = vmin.f32 %v2156, 20.0
      %v2189 = vmin.f32 %v2157, 20.0
      %v2190 = vmin.f32 %v2158, 20.0
      %v2191 = vmin.f32 %v2159, 20.0
      %v2192 = vmin.f32 %v2160, 20.0
      %v2193 = vmin.f32 %v2161, 20.0
      %v2194 = vmin.f32 %v2162, 20.0
      %v2195 = vmin.f32 %v2163, 20.0
      %v2196 = vmin.f32 %v2164, 20.0
      %v2197 = vmin.f32 %v2165, 20.0
      %v2198 = vmin.f32 %v2166, 20.0
      %v2199 = vmin.f32 %v2167, 20.0
      %v2200 = vmin.f32 %v2168, 20.0
      %v2201 = vmin.f32 %v2169, 20.0
      %v2202 = vmin.f32 %v2170, 20.0
      %v2203 = vmin.f32 %v2171, 20.0
      %v2204 = vmin.f32 %v2172, 20.0
      %v2205 = vmin.f32 %v2173, 20.0
      %v2206 = vmin.f32 %v2174, 20.0
      %v2207 = vmin.f32 %v2175, 20.0
      %v2208 = vmin.f32 %v2176, 20.0
      %2209 = vst.msk [vmem:[%s313 + $0x1] sm:$0xff] %vm225, %v2177
      %2210 = vst.msk [vmem:[%s313 + $0x9] sm:$0xff] %vm225, %v2178
      %2211 = vst.msk [vmem:[%s313 + $0x19] sm:$0xff] %vm225, %v2179
      %2212 = vst.msk [vmem:[%s313 + $0x21] sm:$0xff] %vm225, %v2180
      %2213 = vst.msk [vmem:[%s313 + $0x31] sm:$0xff] %vm225, %v2181
      %2214 = vst.msk [vmem:[%s313 + $0x39] sm:$0xff] %vm225, %v2182
      %2215 = vst.msk [vmem:[%s313 + $0x49] sm:$0xff] %vm225, %v2183
      %2216 = vst.msk [vmem:[%s313 + $0x51] sm:$0xff] %vm225, %v2184
      %2217 = vst.msk [vmem:[%s313 + $0x61] sm:$0xff] %vm225, %v2185
      %2218 = vst.msk [vmem:[%s313 + $0x69] sm:$0xff] %vm225, %v2186
      %2219 = vst.msk [vmem:[%s313 + $0x79] sm:$0xff] %vm225, %v2187
      %2220 = vst.msk [vmem:[%s313 + $0x81] sm:$0xff] %vm225, %v2188
      %2221 = vst.msk [vmem:[%s313 + $0x91] sm:$0xff] %vm225, %v2189
      %2222 = vst.msk [vmem:[%s313 + $0x99] sm:$0xff] %vm225, %v2190
      %2223 = vst.msk [vmem:[%s313 + $0xa9] sm:$0xff] %vm225, %v2191
      %2224 = vst.msk [vmem:[%s313 + $0xb1] sm:$0xff] %vm225, %v2192
      %2225 = vst.msk [vmem:[%s313 + $0xc1] sm:$0xff] %vm225, %v2193
      %2226 = vst.msk [vmem:[%s313 + $0xc9] sm:$0xff] %vm225, %v2194
      %2227 = vst.msk [vmem:[%s313 + $0xd9] sm:$0xff] %vm225, %v2195
      %2228 = vst.msk [vmem:[%s313 + $0xe1] sm:$0xff] %vm225, %v2196
      %2229 = vst.msk [vmem:[%s313 + $0xf1] sm:$0xff] %vm225, %v2197
      %2230 = vst.msk [vmem:[%s313 + $0xf9] sm:$0xff] %vm225, %v2198
      %2231 = vst.msk [vmem:[%s313 + $0x109] sm:$0xff] %vm225, %v2199
      %2232 = vst.msk [vmem:[%s313 + $0x111] sm:$0xff] %vm225, %v2200
      %2233 = vst.msk [vmem:[%s313 + $0x121] sm:$0xff] %vm225, %v2201
      %2234 = vst.msk [vmem:[%s313 + $0x129] sm:$0xff] %vm225, %v2202
      %2235 = vst.msk [vmem:[%s313 + $0x139] sm:$0xff] %vm225, %v2203
      %2236 = vst.msk [vmem:[%s313 + $0x141] sm:$0xff] %vm225, %v2204
      %2237 = vst.msk [vmem:[%s313 + $0x151] sm:$0xff] %vm225, %v2205
      %2238 = vst.msk [vmem:[%s313 + $0x159] sm:$0xff] %vm225, %v2206
      %2239 = vst.msk [vmem:[%s313 + $0x169] sm:$0xff] %vm225, %v2207
      %2240 = vst.msk [vmem:[%s313 + $0x171] sm:$0xff] %vm225, %v2208
      %v2241 = vld [vmem:[%s3] sm:$0xff]
      %v2242 = vld [vmem:[%s3 + $0x8] sm:$0xff]
      %v2243 = vld [vmem:[%s3 + $0x10] sm:$0xff]
      %v2244 = vld [vmem:[%s3 + $0x18] sm:$0xff]
      %v2245 = vld [vmem:[%s3 + $0x20] sm:$0xf]
      %v2246 = vld [vmem:[#allocation2] sm:$0xff]
      %v2247 = vld [vmem:[#allocation2 + $0x8] sm:$0xff]
      %v2248 = vld [vmem:[#allocation2 + $0x18] sm:$0xff]
      %v2249 = vld [vmem:[#allocation2 + $0x20] sm:$0xff]
      %v2250 = vld [vmem:[#allocation2 + $0x30] sm:$0xff]
      %v2251 = vld [vmem:[#allocation2 + $0x38] sm:$0xff]
      %v2252 = vld [vmem:[#allocation2 + $0x48] sm:$0xff]
      %v2253 = vld [vmem:[#allocation2 + $0x50] sm:$0xff]
      %v2254 = vld [vmem:[#allocation2 + $0x60] sm:$0xff]
      %v2255 = vld [vmem:[#allocation2 + $0x68] sm:$0xff]
      %v2256 = vld [vmem:[#allocation2 + $0x78] sm:$0xff]
      %v2257 = vld [vmem:[#allocation2 + $0x80] sm:$0xff]
      %v2258 = vld [vmem:[#allocation2 + $0x90] sm:$0xff]
      %v2259 = vld [vmem:[#allocation2 + $0x98] sm:$0xff]
      %v2260 = vld [vmem:[#allocation2 + $0xa8] sm:$0xff]
      %v2261 = vld [vmem:[#allocation2 + $0xb0] sm:$0xff]
      %v2262 = vld [vmem:[#allocation2 + $0xc0] sm:$0xff]
      %v2263 = vld [vmem:[#allocation2 + $0xc8] sm:$0xff]
      %v2264 = vld [vmem:[#allocation2 + $0xd8] sm:$0xff]
      %v2265 = vld [vmem:[#allocation2 + $0xe0] sm:$0xff]
      %v2266 = vld [vmem:[#allocation2 + $0xf0] sm:$0xff]
      %v2267 = vld [vmem:[#allocation2 + $0xf8] sm:$0xff]
      %v2268 = vld [vmem:[#allocation2 + $0x108] sm:$0xff]
      %v2269 = vld [vmem:[#allocation2 + $0x110] sm:$0xff]
      %v2270 = vld [vmem:[#allocation2 + $0x120] sm:$0xff]
      %v2271 = vld [vmem:[#allocation2 + $0x128] sm:$0xff]
      %v2272 = vld [vmem:[#allocation2 + $0x138] sm:$0xff]
      %v2273 = vld [vmem:[#allocation2 + $0x140] sm:$0xff]
      %v2274 = vld [vmem:[#allocation2 + $0x150] sm:$0xff]
      %v2275 = vld [vmem:[#allocation2 + $0x158] sm:$0xff]
      %v2276 = vld [vmem:[#allocation2 + $0x168] sm:$0xff]
      %v2277 = vld [vmem:[#allocation2 + $0x170] sm:$0xff]
      %v2278 = vld [vmem:[#allocation2 + $0x1] sm:$0xff]
      %v2279 = vld [vmem:[#allocation2 + $0x9] sm:$0xff]
      %v2280 = vld [vmem:[#allocation2 + $0x19] sm:$0xff]
      %v2281 = vld [vmem:[#allocation2 + $0x21] sm:$0xff]
      %v2282 = vld [vmem:[#allocation2 + $0x31] sm:$0xff]
      %v2283 = vld [vmem:[#allocation2 + $0x39] sm:$0xff]
      %v2284 = vld [vmem:[#allocation2 + $0x49] sm:$0xff]
      %v2285 = vld [vmem:[#allocation2 + $0x51] sm:$0xff]
      %v2286 = vld [vmem:[#allocation2 + $0x61] sm:$0xff]
      %v2287 = vld [vmem:[#allocation2 + $0x69] sm:$0xff]
      %v2288 = vld [vmem:[#allocation2 + $0x79] sm:$0xff]
      %v2289 = vld [vmem:[#allocation2 + $0x81] sm:$0xff]
      %v2290 = vld [vmem:[#allocation2 + $0x91] sm:$0xff]
      %v2291 = vld [vmem:[#allocation2 + $0x99] sm:$0xff]
      %v2292 = vld [vmem:[#allocation2 + $0xa9] sm:$0xff]
      %v2293 = vld [vmem:[#allocation2 + $0xb1] sm:$0xff]
      %v2294 = vld [vmem:[#allocation2 + $0xc1] sm:$0xff]
      %v2295 = vld [vmem:[#allocation2 + $0xc9] sm:$0xff]
      %v2296 = vld [vmem:[#allocation2 + $0xd9] sm:$0xff]
      %v2297 = vld [vmem:[#allocation2 + $0xe1] sm:$0xff]
      %v2298 = vld [vmem:[#allocation2 + $0xf1] sm:$0xff]
      %v2299 = vld [vmem:[#allocation2 + $0xf9] sm:$0xff]
      %v2300 = vld [vmem:[#allocation2 + $0x109] sm:$0xff]
      %v2301 = vld [vmem:[#allocation2 + $0x111] sm:$0xff]
      %v2302 = vld [vmem:[#allocation2 + $0x121] sm:$0xff]
      %v2303 = vld [vmem:[#allocation2 + $0x129] sm:$0xff]
      %v2304 = vld [vmem:[#allocation2 + $0x139] sm:$0xff]
      %v2305 = vld [vmem:[#allocation2 + $0x141] sm:$0xff]
      %v2306 = vld [vmem:[#allocation2 + $0x151] sm:$0xff]
      %v2307 = vld [vmem:[#allocation2 + $0x159] sm:$0xff]
      %v2308 = vld [vmem:[#allocation2 + $0x169] sm:$0xff]
      %v2309 = vld [vmem:[#allocation2 + $0x171] sm:$0xff]
      %v2310 = vld [vmem:[#allocation2 + $0x2] sm:$0xff]
      %v2311 = vld [vmem:[#allocation2 + $0xa] sm:$0xff]
      %v2312 = vld [vmem:[#allocation2 + $0x1a] sm:$0xff]
      %v2313 = vld [vmem:[#allocation2 + $0x22] sm:$0xff]
      %v2314 = vld [vmem:[#allocation2 + $0x32] sm:$0xff]
      %v2315 = vld [vmem:[#allocation2 + $0x3a] sm:$0xff]
      %v2316 = vld [vmem:[#allocation2 + $0x4a] sm:$0xff]
      %v2317 = vld [vmem:[#allocation2 + $0x52] sm:$0xff]
      %v2318 = vld [vmem:[#allocation2 + $0x62] sm:$0xff]
      %v2319 = vld [vmem:[#allocation2 + $0x6a] sm:$0xff]
      %v2320 = vld [vmem:[#allocation2 + $0x7a] sm:$0xff]
      %v2321 = vld [vmem:[#allocation2 + $0x82] sm:$0xff]
      %v2322 = vld [vmem:[#allocation2 + $0x92] sm:$0xff]
      %v2323 = vld [vmem:[#allocation2 + $0x9a] sm:$0xff]
      %v2324 = vld [vmem:[#allocation2 + $0xaa] sm:$0xff]
      %v2325 = vld [vmem:[#allocation2 + $0xb2] sm:$0xff]
      %v2326 = vld [vmem:[#allocation2 + $0xc2] sm:$0xff]
      %v2327 = vld [vmem:[#allocation2 + $0xca] sm:$0xff]
      %v2328 = vld [vmem:[#allocation2 + $0xda] sm:$0xff]
      %v2329 = vld [vmem:[#allocation2 + $0xe2] sm:$0xff]
      %v2330 = vld [vmem:[#allocation2 + $0xf2] sm:$0xff]
      %v2331 = vld [vmem:[#allocation2 + $0xfa] sm:$0xff]
      %v2332 = vld [vmem:[#allocation2 + $0x10a] sm:$0xff]
      %v2333 = vld [vmem:[#allocation2 + $0x112] sm:$0xff]
      %v2334 = vld [vmem:[#allocation2 + $0x122] sm:$0xff]
      %v2335 = vld [vmem:[#allocation2 + $0x12a] sm:$0xff]
      %v2336 = vld [vmem:[#allocation2 + $0x13a] sm:$0xff]
      %v2337 = vld [vmem:[#allocation2 + $0x142] sm:$0xff]
      %v2338 = vld [vmem:[#allocation2 + $0x152] sm:$0xff]
      %v2339 = vld [vmem:[#allocation2 + $0x15a] sm:$0xff]
      %v2340 = vld [vmem:[#allocation2 + $0x16a] sm:$0xff]
      %v2341 = vld [vmem:[#allocation2 + $0x172] sm:$0xff]
      %v2342 = vld [vmem:[%s313] sm:$0xff]
      %v2343 = vld [vmem:[%s313 + $0x8] sm:$0xff]
      %v2344 = vld [vmem:[%s313 + $0x18] sm:$0xff]
      %v2345 = vld [vmem:[%s313 + $0x20] sm:$0xff]
      %v2346 = vld [vmem:[%s313 + $0x30] sm:$0xff]
      %v2347 = vld [vmem:[%s313 + $0x38] sm:$0xff]
      %v2348 = vld [vmem:[%s313 + $0x48] sm:$0xff]
      %v2349 = vld [vmem:[%s313 + $0x50] sm:$0xff]
      %v2350 = vld [vmem:[%s313 + $0x60] sm:$0xff]
      %v2351 = vld [vmem:[%s313 + $0x68] sm:$0xff]
      %v2352 = vld [vmem:[%s313 + $0x78] sm:$0xff]
      %v2353 = vld [vmem:[%s313 + $0x80] sm:$0xff]
      %v2354 = vld [vmem:[%s313 + $0x90] sm:$0xff]
      %v2355 = vld [vmem:[%s313 + $0x98] sm:$0xff]
      %v2356 = vld [vmem:[%s313 + $0xa8] sm:$0xff]
      %v2357 = vld [vmem:[%s313 + $0xb0] sm:$0xff]
      %v2358 = vld [vmem:[%s313 + $0xc0] sm:$0xff]
      %v2359 = vld [vmem:[%s313 + $0xc8] sm:$0xff]
      %v2360 = vld [vmem:[%s313 + $0xd8] sm:$0xff]
      %v2361 = vld [vmem:[%s313 + $0xe0] sm:$0xff]
      %v2362 = vld [vmem:[%s313 + $0xf0] sm:$0xff]
      %v2363 = vld [vmem:[%s313 + $0xf8] sm:$0xff]
      %v2364 = vld [vmem:[%s313 + $0x108] sm:$0xff]
      %v2365 = vld [vmem:[%s313 + $0x110] sm:$0xff]
      %v2366 = vld [vmem:[%s313 + $0x120] sm:$0xff]
      %v2367 = vld [vmem:[%s313 + $0x128] sm:$0xff]
      %v2368 = vld [vmem:[%s313 + $0x138] sm:$0xff]
      %v2369 = vld [vmem:[%s313 + $0x140] sm:$0xff]
      %v2370 = vld [vmem:[%s313 + $0x150] sm:$0xff]
      %v2371 = vld [vmem:[%s313 + $0x158] sm:$0xff]
      %v2372 = vld [vmem:[%s313 + $0x168] sm:$0xff]
      %v2373 = vld [vmem:[%s313 + $0x170] sm:$0xff]
      %v2374 = vld [vmem:[%s313 + $0x1] sm:$0xff]
      %v2375 = vld [vmem:[%s313 + $0x9] sm:$0xff]
      %v2376 = vld [vmem:[%s313 + $0x19] sm:$0xff]
      %v2377 = vld [vmem:[%s313 + $0x21] sm:$0xff]
      %v2378 = vld [vmem:[%s313 + $0x31] sm:$0xff]
      %v2379 = vld [vmem:[%s313 + $0x39] sm:$0xff]
      %v2380 = vld [vmem:[%s313 + $0x49] sm:$0xff]
      %v2381 = vld [vmem:[%s313 + $0x51] sm:$0xff]
      %v2382 = vld [vmem:[%s313 + $0x61] sm:$0xff]
      %v2383 = vld [vmem:[%s313 + $0x69] sm:$0xff]
      %v2384 = vld [vmem:[%s313 + $0x79] sm:$0xff]
      %v2385 = vld [vmem:[%s313 + $0x81] sm:$0xff]
      %v2386 = vld [vmem:[%s313 + $0x91] sm:$0xff]
      %v2387 = vld [vmem:[%s313 + $0x99] sm:$0xff]
      %v2388 = vld [vmem:[%s313 + $0xa9] sm:$0xff]
      %v2389 = vld [vmem:[%s313 + $0xb1] sm:$0xff]
      %v2390 = vld [vmem:[%s313 + $0xc1] sm:$0xff]
      %v2391 = vld [vmem:[%s313 + $0xc9] sm:$0xff]
      %v2392 = vld [vmem:[%s313 + $0xd9] sm:$0xff]
      %v2393 = vld [vmem:[%s313 + $0xe1] sm:$0xff]
      %v2394 = vld [vmem:[%s313 + $0xf1] sm:$0xff]
      %v2395 = vld [vmem:[%s313 + $0xf9] sm:$0xff]
      %v2396 = vld [vmem:[%s313 + $0x109] sm:$0xff]
      %v2397 = vld [vmem:[%s313 + $0x111] sm:$0xff]
      %v2398 = vld [vmem:[%s313 + $0x121] sm:$0xff]
      %v2399 = vld [vmem:[%s313 + $0x129] sm:$0xff]
      %v2400 = vld [vmem:[%s313 + $0x139] sm:$0xff]
      %v2401 = vld [vmem:[%s313 + $0x141] sm:$0xff]
      %v2402 = vld [vmem:[%s313 + $0x151] sm:$0xff]
      %v2403 = vld [vmem:[%s313 + $0x159] sm:$0xff]
      %v2404 = vld [vmem:[%s313 + $0x169] sm:$0xff]
      %v2405 = vld [vmem:[%s313 + $0x171] sm:$0xff]
      %v2406 = vld [vmem:[%s313 + $0x2] sm:$0xff]
      %v2407 = vld [vmem:[%s313 + $0xa] sm:$0xff]
      %v2408 = vld [vmem:[%s313 + $0x1a] sm:$0xff]
      %v2409 = vld [vmem:[%s313 + $0x22] sm:$0xff]
      %v2410 = vld [vmem:[%s313 + $0x32] sm:$0xff]
      %v2411 = vld [vmem:[%s313 + $0x3a] sm:$0xff]
      %v2412 = vld [vmem:[%s313 + $0x4a] sm:$0xff]
      %v2413 = vld [vmem:[%s313 + $0x52] sm:$0xff]
      %v2414 = vld [vmem:[%s313 + $0x62] sm:$0xff]
      %v2415 = vld [vmem:[%s313 + $0x6a] sm:$0xff]
      %v2416 = vld [vmem:[%s313 + $0x7a] sm:$0xff]
      %v2417 = vld [vmem:[%s313 + $0x82] sm:$0xff]
      %v2418 = vld [vmem:[%s313 + $0x92] sm:$0xff]
      %v2419 = vld [vmem:[%s313 + $0x9a] sm:$0xff]
      %v2420 = vld [vmem:[%s313 + $0xaa] sm:$0xff]
      %v2421 = vld [vmem:[%s313 + $0xb2] sm:$0xff]
      %v2422 = vld [vmem:[%s313 + $0xc2] sm:$0xff]
      %v2423 = vld [vmem:[%s313 + $0xca] sm:$0xff]
      %v2424 = vld [vmem:[%s313 + $0xda] sm:$0xff]
      %v2425 = vld [vmem:[%s313 + $0xe2] sm:$0xff]
      %v2426 = vld [vmem:[%s313 + $0xf2] sm:$0xff]
      %v2427 = vld [vmem:[%s313 + $0xfa] sm:$0xff]
      %v2428 = vld [vmem:[%s313 + $0x10a] sm:$0xff]
      %v2429 = vld [vmem:[%s313 + $0x112] sm:$0xff]
      %v2430 = vld [vmem:[%s313 + $0x122] sm:$0xff]
      %v2431 = vld [vmem:[%s313 + $0x12a] sm:$0xff]
      %v2432 = vld [vmem:[%s313 + $0x13a] sm:$0xff]
      %v2433 = vld [vmem:[%s313 + $0x142] sm:$0xff]
      %v2434 = vld [vmem:[%s313 + $0x152] sm:$0xff]
      %v2435 = vld [vmem:[%s313 + $0x15a] sm:$0xff]
      %v2436 = vld [vmem:[%s313 + $0x16a] sm:$0xff]
      %v2437 = vld [vmem:[%s313 + $0x172] sm:$0xff]
      %v2438 = vld [vmem:[%s543] sm:$0xff]
      %v2439 = vld [vmem:[%s543 + $0x8] sm:$0xff]
      %v2440 = vld [vmem:[%s543 + $0x18] sm:$0xff]
      %v2441 = vld [vmem:[%s543 + $0x20] sm:$0xff]
      %v2442 = vld [vmem:[%s543 + $0x30] sm:$0xff]
      %v2443 = vld [vmem:[%s543 + $0x38] sm:$0xff]
      %v2444 = vld [vmem:[%s543 + $0x48] sm:$0xff]
      %v2445 = vld [vmem:[%s543 + $0x50] sm:$0xff]
      %v2446 = vld [vmem:[%s543 + $0x60] sm:$0xff]
      %v2447 = vld [vmem:[%s543 + $0x68] sm:$0xff]
      %v2448 = vld [vmem:[%s543 + $0x78] sm:$0xff]
      %v2449 = vld [vmem:[%s543 + $0x80] sm:$0xff]
      %v2450 = vld [vmem:[%s543 + $0x90] sm:$0xff]
      %v2451 = vld [vmem:[%s543 + $0x98] sm:$0xff]
      %v2452 = vld [vmem:[%s543 + $0xa8] sm:$0xff]
      %v2453 = vld [vmem:[%s543 + $0xb0] sm:$0xff]
      %v2454 = vld [vmem:[%s543 + $0xc0] sm:$0xff]
      %v2455 = vld [vmem:[%s543 + $0xc8] sm:$0xff]
      %v2456 = vld [vmem:[%s543 + $0xd8] sm:$0xff]
      %v2457 = vld [vmem:[%s543 + $0xe0] sm:$0xff]
      %v2458 = vld [vmem:[%s543 + $0xf0] sm:$0xff]
      %v2459 = vld [vmem:[%s543 + $0xf8] sm:$0xff]
      %v2460 = vld [vmem:[%s543 + $0x108] sm:$0xff]
      %v2461 = vld [vmem:[%s543 + $0x110] sm:$0xff]
      %v2462 = vld [vmem:[%s543 + $0x120] sm:$0xff]
      %v2463 = vld [vmem:[%s543 + $0x128] sm:$0xff]
      %v2464 = vld [vmem:[%s543 + $0x138] sm:$0xff]
      %v2465 = vld [vmem:[%s543 + $0x140] sm:$0xff]
      %v2466 = vld [vmem:[%s543 + $0x150] sm:$0xff]
      %v2467 = vld [vmem:[%s543 + $0x158] sm:$0xff]
      %v2468 = vld [vmem:[%s543 + $0x168] sm:$0xff]
      %v2469 = vld [vmem:[%s543 + $0x170] sm:$0xff]
      %v2470 = vld [vmem:[%s543 + $0x1] sm:$0xff]
      %v2471 = vld [vmem:[%s543 + $0x9] sm:$0xff]
      %v2472 = vld [vmem:[%s543 + $0x19] sm:$0xff]
      %v2473 = vld [vmem:[%s543 + $0x21] sm:$0xff]
      %v2474 = vld [vmem:[%s543 + $0x31] sm:$0xff]
      %v2475 = vld [vmem:[%s543 + $0x39] sm:$0xff]
      %v2476 = vld [vmem:[%s543 + $0x49] sm:$0xff]
      %v2477 = vld [vmem:[%s543 + $0x51] sm:$0xff]
      %v2478 = vld [vmem:[%s543 + $0x61] sm:$0xff]
      %v2479 = vld [vmem:[%s543 + $0x69] sm:$0xff]
      %v2480 = vld [vmem:[%s543 + $0x79] sm:$0xff]
      %v2481 = vld [vmem:[%s543 + $0x81] sm:$0xff]
      %v2482 = vld [vmem:[%s543 + $0x91] sm:$0xff]
      %v2483 = vld [vmem:[%s543 + $0x99] sm:$0xff]
      %v2484 = vld [vmem:[%s543 + $0xa9] sm:$0xff]
      %v2485 = vld [vmem:[%s543 + $0xb1] sm:$0xff]
      %v2486 = vld [vmem:[%s543 + $0xc1] sm:$0xff]
      %v2487 = vld [vmem:[%s543 + $0xc9] sm:$0xff]
      %v2488 = vld [vmem:[%s543 + $0xd9] sm:$0xff]
      %v2489 = vld [vmem:[%s543 + $0xe1] sm:$0xff]
      %v2490 = vld [vmem:[%s543 + $0xf1] sm:$0xff]
      %v2491 = vld [vmem:[%s543 + $0xf9] sm:$0xff]
      %v2492 = vld [vmem:[%s543 + $0x109] sm:$0xff]
      %v2493 = vld [vmem:[%s543 + $0x111] sm:$0xff]
      %v2494 = vld [vmem:[%s543 + $0x121] sm:$0xff]
      %v2495 = vld [vmem:[%s543 + $0x129] sm:$0xff]
      %v2496 = vld [vmem:[%s543 + $0x139] sm:$0xff]
      %v2497 = vld [vmem:[%s543 + $0x141] sm:$0xff]
      %v2498 = vld [vmem:[%s543 + $0x151] sm:$0xff]
      %v2499 = vld [vmem:[%s543 + $0x159] sm:$0xff]
      %v2500 = vld [vmem:[%s543 + $0x169] sm:$0xff]
      %v2501 = vld [vmem:[%s543 + $0x171] sm:$0xff]
      %v2502 = vld [vmem:[%s543 + $0x2] sm:$0xff]
      %v2503 = vld [vmem:[%s543 + $0xa] sm:$0xff]
      %v2504 = vld [vmem:[%s543 + $0x1a] sm:$0xff]
      %v2505 = vld [vmem:[%s543 + $0x22] sm:$0xff]
      %v2506 = vld [vmem:[%s543 + $0x32] sm:$0xff]
      %v2507 = vld [vmem:[%s543 + $0x3a] sm:$0xff]
      %v2508 = vld [vmem:[%s543 + $0x4a] sm:$0xff]
      %v2509 = vld [vmem:[%s543 + $0x52] sm:$0xff]
      %v2510 = vld [vmem:[%s543 + $0x62] sm:$0xff]
      %v2511 = vld [vmem:[%s543 + $0x6a] sm:$0xff]
      %v2512 = vld [vmem:[%s543 + $0x7a] sm:$0xff]
      %v2513 = vld [vmem:[%s543 + $0x82] sm:$0xff]
      %v2514 = vld [vmem:[%s543 + $0x92] sm:$0xff]
      %v2515 = vld [vmem:[%s543 + $0x9a] sm:$0xff]
      %v2516 = vld [vmem:[%s543 + $0xaa] sm:$0xff]
      %v2517 = vld [vmem:[%s543 + $0xb2] sm:$0xff]
      %v2518 = vld [vmem:[%s543 + $0xc2] sm:$0xff]
      %v2519 = vld [vmem:[%s543 + $0xca] sm:$0xff]
      %v2520 = vld [vmem:[%s543 + $0xda] sm:$0xff]
      %v2521 = vld [vmem:[%s543 + $0xe2] sm:$0xff]
      %v2522 = vld [vmem:[%s543 + $0xf2] sm:$0xff]
      %v2523 = vld [vmem:[%s543 + $0xfa] sm:$0xff]
      %v2524 = vld [vmem:[%s543 + $0x10a] sm:$0xff]
      %v2525 = vld [vmem:[%s543 + $0x112] sm:$0xff]
      %v2526 = vld [vmem:[%s543 + $0x122] sm:$0xff]
      %v2527 = vld [vmem:[%s543 + $0x12a] sm:$0xff]
      %v2528 = vld [vmem:[%s543 + $0x13a] sm:$0xff]
      %v2529 = vld [vmem:[%s543 + $0x142] sm:$0xff]
      %v2530 = vld [vmem:[%s543 + $0x152] sm:$0xff]
      %v2531 = vld [vmem:[%s543 + $0x15a] sm:$0xff]
      %v2532 = vld [vmem:[%s543 + $0x16a] sm:$0xff]
      %v2533 = vld [vmem:[%s543 + $0x172] sm:$0xff]
      %2566 = vrot.lane.b32.xlu0 %v2278, 4
      %v2567 = vpop.permute.xlu0 %2566
      %2568 = vrot.lane.b32.xlu0 %v2279, 4
      %v2569 = vpop.permute.xlu0 %2568
      %2570 = vrot.lane.b32.xlu0 %v2280, 4
      %v2571 = vpop.permute.xlu0 %2570
      %2572 = vrot.lane.b32.xlu0 %v2281, 4
      %v2573 = vpop.permute.xlu0 %2572
      %2574 = vrot.lane.b32.xlu0 %v2282, 4
      %v2575 = vpop.permute.xlu0 %2574
      %2576 = vrot.lane.b32.xlu0 %v2283, 4
      %v2577 = vpop.permute.xlu0 %2576
      %2578 = vrot.lane.b32.xlu0 %v2284, 4
      %v2579 = vpop.permute.xlu0 %2578
      %2580 = vrot.lane.b32.xlu0 %v2285, 4
      %v2581 = vpop.permute.xlu0 %2580
      %2582 = vrot.lane.b32.xlu0 %v2286, 4
      %v2583 = vpop.permute.xlu0 %2582
      %2584 = vrot.lane.b32.xlu0 %v2287, 4
      %v2585 = vpop.permute.xlu0 %2584
      %2586 = vrot.lane.b32.xlu0 %v2288, 4
      %v2587 = vpop.permute.xlu0 %2586
      %2588 = vrot.lane.b32.xlu0 %v2289, 4
      %v2589 = vpop.permute.xlu0 %2588
      %2590 = vrot.lane.b32.xlu0 %v2290, 4
      %v2591 = vpop.permute.xlu0 %2590
      %2592 = vrot.lane.b32.xlu0 %v2291, 4
      %v2593 = vpop.permute.xlu0 %2592
      %2594 = vrot.lane.b32.xlu0 %v2292, 4
      %v2595 = vpop.permute.xlu0 %2594
      %2596 = vrot.lane.b32.xlu0 %v2293, 4
      %v2597 = vpop.permute.xlu0 %2596
      %2598 = vrot.lane.b32.xlu0 %v2294, 4
      %v2599 = vpop.permute.xlu0 %2598
      %2600 = vrot.lane.b32.xlu0 %v2295, 4
      %v2601 = vpop.permute.xlu0 %2600
      %2602 = vrot.lane.b32.xlu0 %v2296, 4
      %v2603 = vpop.permute.xlu0 %2602
      %2604 = vrot.lane.b32.xlu0 %v2297, 4
      %v2605 = vpop.permute.xlu0 %2604
      %2606 = vrot.lane.b32.xlu0 %v2298, 4
      %v2607 = vpop.permute.xlu0 %2606
      %2608 = vrot.lane.b32.xlu0 %v2299, 4
      %v2609 = vpop.permute.xlu0 %2608
      %2610 = vrot.lane.b32.xlu0 %v2300, 4
      %v2611 = vpop.permute.xlu0 %2610
      %2612 = vrot.lane.b32.xlu0 %v2301, 4
      %v2613 = vpop.permute.xlu0 %2612
      %2614 = vrot.lane.b32.xlu0 %v2302, 4
      %v2615 = vpop.permute.xlu0 %2614
      %2616 = vrot.lane.b32.xlu0 %v2303, 4
      %v2617 = vpop.permute.xlu0 %2616
      %2618 = vrot.lane.b32.xlu0 %v2304, 4
      %v2619 = vpop.permute.xlu0 %2618
      %2620 = vrot.lane.b32.xlu0 %v2305, 4
      %v2621 = vpop.permute.xlu0 %2620
      %2622 = vrot.lane.b32.xlu0 %v2306, 4
      %v2623 = vpop.permute.xlu0 %2622
      %2624 = vrot.lane.b32.xlu0 %v2307, 4
      %v2625 = vpop.permute.xlu0 %2624
      %2626 = vrot.lane.b32.xlu0 %v2308, 4
      %v2627 = vpop.permute.xlu0 %2626
      %2628 = vrot.lane.b32.xlu0 %v2309, 4
      %v2629 = vpop.permute.xlu0 %2628
      %2694 = vrot.lane.b32.xlu0 %v2310, 8
      %v2695 = vpop.permute.xlu0 %2694
      %2696 = vrot.lane.b32.xlu0 %v2311, 8
      %v2697 = vpop.permute.xlu0 %2696
      %2698 = vrot.lane.b32.xlu0 %v2312, 8
      %v2699 = vpop.permute.xlu0 %2698
      %2700 = vrot.lane.b32.xlu0 %v2313, 8
      %v2701 = vpop.permute.xlu0 %2700
      %2702 = vrot.lane.b32.xlu0 %v2314, 8
      %v2703 = vpop.permute.xlu0 %2702
      %2704 = vrot.lane.b32.xlu0 %v2315, 8
      %v2705 = vpop.permute.xlu0 %2704
      %2706 = vrot.lane.b32.xlu0 %v2316, 8
      %v2707 = vpop.permute.xlu0 %2706
      %2708 = vrot.lane.b32.xlu0 %v2317, 8
      %v2709 = vpop.permute.xlu0 %2708
      %2710 = vrot.lane.b32.xlu0 %v2318, 8
      %v2711 = vpop.permute.xlu0 %2710
      %2712 = vrot.lane.b32.xlu0 %v2319, 8
      %v2713 = vpop.permute.xlu0 %2712
      %2714 = vrot.lane.b32.xlu0 %v2320, 8
      %v2715 = vpop.permute.xlu0 %2714
      %2716 = vrot.lane.b32.xlu0 %v2321, 8
      %v2717 = vpop.permute.xlu0 %2716
      %2718 = vrot.lane.b32.xlu0 %v2322, 8
      %v2719 = vpop.permute.xlu0 %2718
      %2720 = vrot.lane.b32.xlu0 %v2323, 8
      %v2721 = vpop.permute.xlu0 %2720
      %2722 = vrot.lane.b32.xlu0 %v2324, 8
      %v2723 = vpop.permute.xlu0 %2722
      %2724 = vrot.lane.b32.xlu0 %v2325, 8
      %v2725 = vpop.permute.xlu0 %2724
      %2726 = vrot.lane.b32.xlu0 %v2326, 8
      %v2727 = vpop.permute.xlu0 %2726
      %2728 = vrot.lane.b32.xlu0 %v2327, 8
      %v2729 = vpop.permute.xlu0 %2728
      %2730 = vrot.lane.b32.xlu0 %v2328, 8
      %v2731 = vpop.permute.xlu0 %2730
      %2732 = vrot.lane.b32.xlu0 %v2329, 8
      %v2733 = vpop.permute.xlu0 %2732
      %2734 = vrot.lane.b32.xlu0 %v2330, 8
      %v2735 = vpop.permute.xlu0 %2734
      %2736 = vrot.lane.b32.xlu0 %v2331, 8
      %v2737 = vpop.permute.xlu0 %2736
      %2738 = vrot.lane.b32.xlu0 %v2332, 8
      %v2739 = vpop.permute.xlu0 %2738
      %2740 = vrot.lane.b32.xlu0 %v2333, 8
      %v2741 = vpop.permute.xlu0 %2740
      %2742 = vrot.lane.b32.xlu0 %v2334, 8
      %v2743 = vpop.permute.xlu0 %2742
      %2744 = vrot.lane.b32.xlu0 %v2335, 8
      %v2745 = vpop.permute.xlu0 %2744
      %2746 = vrot.lane.b32.xlu0 %v2336, 8
      %v2747 = vpop.permute.xlu0 %2746
      %2748 = vrot.lane.b32.xlu0 %v2337, 8
      %v2749 = vpop.permute.xlu0 %2748
      %2750 = vrot.lane.b32.xlu0 %v2338, 8
      %v2751 = vpop.permute.xlu0 %2750
      %2752 = vrot.lane.b32.xlu0 %v2339, 8
      %v2753 = vpop.permute.xlu0 %2752
      %2754 = vrot.lane.b32.xlu0 %v2340, 8
      %v2755 = vpop.permute.xlu0 %2754
      %2756 = vrot.lane.b32.xlu0 %v2341, 8
      %v2757 = vpop.permute.xlu0 %2756
      %2822 = vrot.lane.b32.xlu0 %v2342, 12
      %v2823 = vpop.permute.xlu0 %2822
      %2824 = vrot.lane.b32.xlu0 %v2343, 12
      %v2825 = vpop.permute.xlu0 %2824
      %2826 = vrot.lane.b32.xlu0 %v2344, 12
      %v2827 = vpop.permute.xlu0 %2826
      %2828 = vrot.lane.b32.xlu0 %v2345, 12
      %v2829 = vpop.permute.xlu0 %2828
      %2830 = vrot.lane.b32.xlu0 %v2346, 12
      %v2831 = vpop.permute.xlu0 %2830
      %2832 = vrot.lane.b32.xlu0 %v2347, 12
      %v2833 = vpop.permute.xlu0 %2832
      %2834 = vrot.lane.b32.xlu0 %v2348, 12
      %v2835 = vpop.permute.xlu0 %2834
      %2836 = vrot.lane.b32.xlu0 %v2349, 12
      %v2837 = vpop.permute.xlu0 %2836
      %2838 = vrot.lane.b32.xlu0 %v2350, 12
      %v2839 = vpop.permute.xlu0 %2838
      %2840 = vrot.lane.b32.xlu0 %v2351, 12
      %v2841 = vpop.permute.xlu0 %2840
      %2842 = vrot.lane.b32.xlu0 %v2352, 12
      %v2843 = vpop.permute.xlu0 %2842
      %2844 = vrot.lane.b32.xlu0 %v2353, 12
      %v2845 = vpop.permute.xlu0 %2844
      %2846 = vrot.lane.b32.xlu0 %v2354, 12
      %v2847 = vpop.permute.xlu0 %2846
      %2848 = vrot.lane.b32.xlu0 %v2355, 12
      %v2849 = vpop.permute.xlu0 %2848
      %2850 = vrot.lane.b32.xlu0 %v2356, 12
      %v2851 = vpop.permute.xlu0 %2850
      %2852 = vrot.lane.b32.xlu0 %v2357, 12
      %v2853 = vpop.permute.xlu0 %2852
      %2854 = vrot.lane.b32.xlu0 %v2358, 12
      %v2855 = vpop.permute.xlu0 %2854
      %2856 = vrot.lane.b32.xlu0 %v2359, 12
      %v2857 = vpop.permute.xlu0 %2856
      %2858 = vrot.lane.b32.xlu0 %v2360, 12
      %v2859 = vpop.permute.xlu0 %2858
      %2860 = vrot.lane.b32.xlu0 %v2361, 12
      %v2861 = vpop.permute.xlu0 %2860
      %2862 = vrot.lane.b32.xlu0 %v2362, 12
      %v2863 = vpop.permute.xlu0 %2862
      %2864 = vrot.lane.b32.xlu0 %v2363, 12
      %v2865 = vpop.permute.xlu0 %2864
      %2866 = vrot.lane.b32.xlu0 %v2364, 12
      %v2867 = vpop.permute.xlu0 %2866
      %2868 = vrot.lane.b32.xlu0 %v2365, 12
      %v2869 = vpop.permute.xlu0 %2868
      %2870 = vrot.lane.b32.xlu0 %v2366, 12
      %v2871 = vpop.permute.xlu0 %2870
      %2872 = vrot.lane.b32.xlu0 %v2367, 12
      %v2873 = vpop.permute.xlu0 %2872
      %2874 = vrot.lane.b32.xlu0 %v2368, 12
      %v2875 = vpop.permute.xlu0 %2874
      %2876 = vrot.lane.b32.xlu0 %v2369, 12
      %v2877 = vpop.permute.xlu0 %2876
      %2878 = vrot.lane.b32.xlu0 %v2370, 12
      %v2879 = vpop.permute.xlu0 %2878
      %2880 = vrot.lane.b32.xlu0 %v2371, 12
      %v2881 = vpop.permute.xlu0 %2880
      %2882 = vrot.lane.b32.xlu0 %v2372, 12
      %v2883 = vpop.permute.xlu0 %2882
      %2884 = vrot.lane.b32.xlu0 %v2373, 12
      %v2885 = vpop.permute.xlu0 %2884
      %2950 = vrot.lane.b32.xlu0 %v2374, 16
      %v2951 = vpop.permute.xlu0 %2950
      %2952 = vrot.lane.b32.xlu0 %v2375, 16
      %v2953 = vpop.permute.xlu0 %2952
      %2954 = vrot.lane.b32.xlu0 %v2376, 16
      %v2955 = vpop.permute.xlu0 %2954
      %2956 = vrot.lane.b32.xlu0 %v2377, 16
      %v2957 = vpop.permute.xlu0 %2956
      %2958 = vrot.lane.b32.xlu0 %v2378, 16
      %v2959 = vpop.permute.xlu0 %2958
      %2960 = vrot.lane.b32.xlu0 %v2379, 16
      %v2961 = vpop.permute.xlu0 %2960
      %2962 = vrot.lane.b32.xlu0 %v2380, 16
      %v2963 = vpop.permute.xlu0 %2962
      %2964 = vrot.lane.b32.xlu0 %v2381, 16
      %v2965 = vpop.permute.xlu0 %2964
      %2966 = vrot.lane.b32.xlu0 %v2382, 16
      %v2967 = vpop.permute.xlu0 %2966
      %2968 = vrot.lane.b32.xlu0 %v2383, 16
      %v2969 = vpop.permute.xlu0 %2968
      %2970 = vrot.lane.b32.xlu0 %v2384, 16
      %v2971 = vpop.permute.xlu0 %2970
      %2972 = vrot.lane.b32.xlu0 %v2385, 16
      %v2973 = vpop.permute.xlu0 %2972
      %2974 = vrot.lane.b32.xlu0 %v2386, 16
      %v2975 = vpop.permute.xlu0 %2974
      %2976 = vrot.lane.b32.xlu0 %v2387, 16
      %v2977 = vpop.permute.xlu0 %2976
      %2978 = vrot.lane.b32.xlu0 %v2388, 16
      %v2979 = vpop.permute.xlu0 %2978
      %2980 = vrot.lane.b32.xlu0 %v2389, 16
      %v2981 = vpop.permute.xlu0 %2980
      %2982 = vrot.lane.b32.xlu0 %v2390, 16
      %v2983 = vpop.permute.xlu0 %2982
      %2984 = vrot.lane.b32.xlu0 %v2391, 16
      %v2985 = vpop.permute.xlu0 %2984
      %2986 = vrot.lane.b32.xlu0 %v2392, 16
      %v2987 = vpop.permute.xlu0 %2986
      %2988 = vrot.lane.b32.xlu0 %v2393, 16
      %v2989 = vpop.permute.xlu0 %2988
      %2990 = vrot.lane.b32.xlu0 %v2394, 16
      %v2991 = vpop.permute.xlu0 %2990
      %2992 = vrot.lane.b32.xlu0 %v2395, 16
      %v2993 = vpop.permute.xlu0 %2992
      %2994 = vrot.lane.b32.xlu0 %v2396, 16
      %v2995 = vpop.permute.xlu0 %2994
      %2996 = vrot.lane.b32.xlu0 %v2397, 16
      %v2997 = vpop.permute.xlu0 %2996
      %2998 = vrot.lane.b32.xlu0 %v2398, 16
      %v2999 = vpop.permute.xlu0 %2998
      %3000 = vrot.lane.b32.xlu0 %v2399, 16
      %v3001 = vpop.permute.xlu0 %3000
      %3002 = vrot.lane.b32.xlu0 %v2400, 16
      %v3003 = vpop.permute.xlu0 %3002
      %3004 = vrot.lane.b32.xlu0 %v2401, 16
      %v3005 = vpop.permute.xlu0 %3004
      %3006 = vrot.lane.b32.xlu0 %v2402, 16
      %v3007 = vpop.permute.xlu0 %3006
      %3008 = vrot.lane.b32.xlu0 %v2403, 16
      %v3009 = vpop.permute.xlu0 %3008
      %3010 = vrot.lane.b32.xlu0 %v2404, 16
      %v3011 = vpop.permute.xlu0 %3010
      %3012 = vrot.lane.b32.xlu0 %v2405, 16
      %v3013 = vpop.permute.xlu0 %3012
      %3078 = vrot.lane.b32.xlu0 %v2406, 20
      %v3079 = vpop.permute.xlu0 %3078
      %3080 = vrot.lane.b32.xlu0 %v2407, 20
      %v3081 = vpop.permute.xlu0 %3080
      %3082 = vrot.lane.b32.xlu0 %v2408, 20
      %v3083 = vpop.permute.xlu0 %3082
      %3084 = vrot.lane.b32.xlu0 %v2409, 20
      %v3085 = vpop.permute.xlu0 %3084
      %3086 = vrot.lane.b32.xlu0 %v2410, 20
      %v3087 = vpop.permute.xlu0 %3086
      %3088 = vrot.lane.b32.xlu0 %v2411, 20
      %v3089 = vpop.permute.xlu0 %3088
      %3090 = vrot.lane.b32.xlu0 %v2412, 20
      %v3091 = vpop.permute.xlu0 %3090
      %3092 = vrot.lane.b32.xlu0 %v2413, 20
      %v3093 = vpop.permute.xlu0 %3092
      %3094 = vrot.lane.b32.xlu0 %v2414, 20
      %v3095 = vpop.permute.xlu0 %3094
      %3096 = vrot.lane.b32.xlu0 %v2415, 20
      %v3097 = vpop.permute.xlu0 %3096
      %3098 = vrot.lane.b32.xlu0 %v2416, 20
      %v3099 = vpop.permute.xlu0 %3098
      %3100 = vrot.lane.b32.xlu0 %v2417, 20
      %v3101 = vpop.permute.xlu0 %3100
      %3102 = vrot.lane.b32.xlu0 %v2418, 20
      %v3103 = vpop.permute.xlu0 %3102
      %3104 = vrot.lane.b32.xlu0 %v2419, 20
      %v3105 = vpop.permute.xlu0 %3104
      %3106 = vrot.lane.b32.xlu0 %v2420, 20
      %v3107 = vpop.permute.xlu0 %3106
      %3108 = vrot.lane.b32.xlu0 %v2421, 20
      %v3109 = vpop.permute.xlu0 %3108
      %3110 = vrot.lane.b32.xlu0 %v2422, 20
      %v3111 = vpop.permute.xlu0 %3110
      %3112 = vrot.lane.b32.xlu0 %v2423, 20
      %v3113 = vpop.permute.xlu0 %3112
      %3114 = vrot.lane.b32.xlu0 %v2424, 20
      %v3115 = vpop.permute.xlu0 %3114
      %3116 = vrot.lane.b32.xlu0 %v2425, 20
      %v3117 = vpop.permute.xlu0 %3116
      %3118 = vrot.lane.b32.xlu0 %v2426, 20
      %v3119 = vpop.permute.xlu0 %3118
      %3120 = vrot.lane.b32.xlu0 %v2427, 20
      %v3121 = vpop.permute.xlu0 %3120
      %3122 = vrot.lane.b32.xlu0 %v2428, 20
      %v3123 = vpop.permute.xlu0 %3122
      %3124 = vrot.lane.b32.xlu0 %v2429, 20
      %v3125 = vpop.permute.xlu0 %3124
      %3126 = vrot.lane.b32.xlu0 %v2430, 20
      %v3127 = vpop.permute.xlu0 %3126
      %3128 = vrot.lane.b32.xlu0 %v2431, 20
      %v3129 = vpop.permute.xlu0 %3128
      %3130 = vrot.lane.b32.xlu0 %v2432, 20
      %v3131 = vpop.permute.xlu0 %3130
      %3132 = vrot.lane.b32.xlu0 %v2433, 20
      %v3133 = vpop.permute.xlu0 %3132
      %3134 = vrot.lane.b32.xlu0 %v2434, 20
      %v3135 = vpop.permute.xlu0 %3134
      %3136 = vrot.lane.b32.xlu0 %v2435, 20
      %v3137 = vpop.permute.xlu0 %3136
      %3138 = vrot.lane.b32.xlu0 %v2436, 20
      %v3139 = vpop.permute.xlu0 %3138
      %3140 = vrot.lane.b32.xlu0 %v2437, 20
      %v3141 = vpop.permute.xlu0 %3140
      %3206 = vrot.lane.b32.xlu0 %v2438, 24
      %v3207 = vpop.permute.xlu0 %3206
      %3208 = vrot.lane.b32.xlu0 %v2439, 24
      %v3209 = vpop.permute.xlu0 %3208
      %3210 = vrot.lane.b32.xlu0 %v2440, 24
      %v3211 = vpop.permute.xlu0 %3210
      %3212 = vrot.lane.b32.xlu0 %v2441, 24
      %v3213 = vpop.permute.xlu0 %3212
      %3214 = vrot.lane.b32.xlu0 %v2442, 24
      %v3215 = vpop.permute.xlu0 %3214
      %3216 = vrot.lane.b32.xlu0 %v2443, 24
      %v3217 = vpop.permute.xlu0 %3216
      %3218 = vrot.lane.b32.xlu0 %v2444, 24
      %v3219 = vpop.permute.xlu0 %3218
      %3220 = vrot.lane.b32.xlu0 %v2445, 24
      %v3221 = vpop.permute.xlu0 %3220
      %3222 = vrot.lane.b32.xlu0 %v2446, 24
      %v3223 = vpop.permute.xlu0 %3222
      %3224 = vrot.lane.b32.xlu0 %v2447, 24
      %v3225 = vpop.permute.xlu0 %3224
      %3226 = vrot.lane.b32.xlu0 %v2448, 24
      %v3227 = vpop.permute.xlu0 %3226
      %3228 = vrot.lane.b32.xlu0 %v2449, 24
      %v3229 = vpop.permute.xlu0 %3228
      %3230 = vrot.lane.b32.xlu0 %v2450, 24
      %v3231 = vpop.permute.xlu0 %3230
      %3232 = vrot.lane.b32.xlu0 %v2451, 24
      %v3233 = vpop.permute.xlu0 %3232
      %3234 = vrot.lane.b32.xlu0 %v2452, 24
      %v3235 = vpop.permute.xlu0 %3234
      %3236 = vrot.lane.b32.xlu0 %v2453, 24
      %v3237 = vpop.permute.xlu0 %3236
      %3238 = vrot.lane.b32.xlu0 %v2454, 24
      %v3239 = vpop.permute.xlu0 %3238
      %3240 = vrot.lane.b32.xlu0 %v2455, 24
      %v3241 = vpop.permute.xlu0 %3240
      %3242 = vrot.lane.b32.xlu0 %v2456, 24
      %v3243 = vpop.permute.xlu0 %3242
      %3244 = vrot.lane.b32.xlu0 %v2457, 24
      %v3245 = vpop.permute.xlu0 %3244
      %3246 = vrot.lane.b32.xlu0 %v2458, 24
      %v3247 = vpop.permute.xlu0 %3246
      %3248 = vrot.lane.b32.xlu0 %v2459, 24
      %v3249 = vpop.permute.xlu0 %3248
      %3250 = vrot.lane.b32.xlu0 %v2460, 24
      %v3251 = vpop.permute.xlu0 %3250
      %3252 = vrot.lane.b32.xlu0 %v2461, 24
      %v3253 = vpop.permute.xlu0 %3252
      %3254 = vrot.lane.b32.xlu0 %v2462, 24
      %v3255 = vpop.permute.xlu0 %3254
      %3256 = vrot.lane.b32.xlu0 %v2463, 24
      %v3257 = vpop.permute.xlu0 %3256
      %3258 = vrot.lane.b32.xlu0 %v2464, 24
      %v3259 = vpop.permute.xlu0 %3258
      %3260 = vrot.lane.b32.xlu0 %v2465, 24
      %v3261 = vpop.permute.xlu0 %3260
      %3262 = vrot.lane.b32.xlu0 %v2466, 24
      %v3263 = vpop.permute.xlu0 %3262
      %3264 = vrot.lane.b32.xlu0 %v2467, 24
      %v3265 = vpop.permute.xlu0 %3264
      %3266 = vrot.lane.b32.xlu0 %v2468, 24
      %v3267 = vpop.permute.xlu0 %3266
      %3268 = vrot.lane.b32.xlu0 %v2469, 24
      %v3269 = vpop.permute.xlu0 %3268
      %3334 = vrot.lane.b32.xlu0 %v2470, 28
      %v3335 = vpop.permute.xlu0 %3334
      %3336 = vrot.lane.b32.xlu0 %v2471, 28
      %v3337 = vpop.permute.xlu0 %3336
      %3338 = vrot.lane.b32.xlu0 %v2472, 28
      %v3339 = vpop.permute.xlu0 %3338
      %3340 = vrot.lane.b32.xlu0 %v2473, 28
      %v3341 = vpop.permute.xlu0 %3340
      %3342 = vrot.lane.b32.xlu0 %v2474, 28
      %v3343 = vpop.permute.xlu0 %3342
      %3344 = vrot.lane.b32.xlu0 %v2475, 28
      %v3345 = vpop.permute.xlu0 %3344
      %3346 = vrot.lane.b32.xlu0 %v2476, 28
      %v3347 = vpop.permute.xlu0 %3346
      %3348 = vrot.lane.b32.xlu0 %v2477, 28
      %v3349 = vpop.permute.xlu0 %3348
      %3350 = vrot.lane.b32.xlu0 %v2478, 28
      %v3351 = vpop.permute.xlu0 %3350
      %3352 = vrot.lane.b32.xlu0 %v2479, 28
      %v3353 = vpop.permute.xlu0 %3352
      %3354 = vrot.lane.b32.xlu0 %v2480, 28
      %v3355 = vpop.permute.xlu0 %3354
      %3356 = vrot.lane.b32.xlu0 %v2481, 28
      %v3357 = vpop.permute.xlu0 %3356
      %3358 = vrot.lane.b32.xlu0 %v2482, 28
      %v3359 = vpop.permute.xlu0 %3358
      %3360 = vrot.lane.b32.xlu0 %v2483, 28
      %v3361 = vpop.permute.xlu0 %3360
      %3362 = vrot.lane.b32.xlu0 %v2484, 28
      %v3363 = vpop.permute.xlu0 %3362
      %3364 = vrot.lane.b32.xlu0 %v2485, 28
      %v3365 = vpop.permute.xlu0 %3364
      %3366 = vrot.lane.b32.xlu0 %v2486, 28
      %v3367 = vpop.permute.xlu0 %3366
      %3368 = vrot.lane.b32.xlu0 %v2487, 28
      %v3369 = vpop.permute.xlu0 %3368
      %3370 = vrot.lane.b32.xlu0 %v2488, 28
      %v3371 = vpop.permute.xlu0 %3370
      %3372 = vrot.lane.b32.xlu0 %v2489, 28
      %v3373 = vpop.permute.xlu0 %3372
      %3374 = vrot.lane.b32.xlu0 %v2490, 28
      %v3375 = vpop.permute.xlu0 %3374
      %3376 = vrot.lane.b32.xlu0 %v2491, 28
      %v3377 = vpop.permute.xlu0 %3376
      %3378 = vrot.lane.b32.xlu0 %v2492, 28
      %v3379 = vpop.permute.xlu0 %3378
      %3380 = vrot.lane.b32.xlu0 %v2493, 28
      %v3381 = vpop.permute.xlu0 %3380
      %3382 = vrot.lane.b32.xlu0 %v2494, 28
      %v3383 = vpop.permute.xlu0 %3382
      %3384 = vrot.lane.b32.xlu0 %v2495, 28
      %v3385 = vpop.permute.xlu0 %3384
      %3386 = vrot.lane.b32.xlu0 %v2496, 28
      %v3387 = vpop.permute.xlu0 %3386
      %3388 = vrot.lane.b32.xlu0 %v2497, 28
      %v3389 = vpop.permute.xlu0 %3388
      %3390 = vrot.lane.b32.xlu0 %v2498, 28
      %v3391 = vpop.permute.xlu0 %3390
      %3392 = vrot.lane.b32.xlu0 %v2499, 28
      %v3393 = vpop.permute.xlu0 %3392
      %3394 = vrot.lane.b32.xlu0 %v2500, 28
      %v3395 = vpop.permute.xlu0 %3394
      %3396 = vrot.lane.b32.xlu0 %v2501, 28
      %v3397 = vpop.permute.xlu0 %3396
      %3462 = vrot.lane.b32.xlu0 %v2502, 32
      %v3463 = vpop.permute.xlu0 %3462
      %3464 = vrot.lane.b32.xlu0 %v2503, 32
      %v3465 = vpop.permute.xlu0 %3464
      %3466 = vrot.lane.b32.xlu0 %v2504, 32
      %v3467 = vpop.permute.xlu0 %3466
      %3468 = vrot.lane.b32.xlu0 %v2505, 32
      %v3469 = vpop.permute.xlu0 %3468
      %3470 = vrot.lane.b32.xlu0 %v2506, 32
      %v3471 = vpop.permute.xlu0 %3470
      %3472 = vrot.lane.b32.xlu0 %v2507, 32
      %v3473 = vpop.permute.xlu0 %3472
      %3474 = vrot.lane.b32.xlu0 %v2508, 32
      %v3475 = vpop.permute.xlu0 %3474
      %3476 = vrot.lane.b32.xlu0 %v2509, 32
      %v3477 = vpop.permute.xlu0 %3476
      %3478 = vrot.lane.b32.xlu0 %v2510, 32
      %v3479 = vpop.permute.xlu0 %3478
      %3480 = vrot.lane.b32.xlu0 %v2511, 32
      %v3481 = vpop.permute.xlu0 %3480
      %3482 = vrot.lane.b32.xlu0 %v2512, 32
      %v3483 = vpop.permute.xlu0 %3482
      %3484 = vrot.lane.b32.xlu0 %v2513, 32
      %v3485 = vpop.permute.xlu0 %3484
      %3486 = vrot.lane.b32.xlu0 %v2514, 32
      %v3487 = vpop.permute.xlu0 %3486
      %3488 = vrot.lane.b32.xlu0 %v2515, 32
      %v3489 = vpop.permute.xlu0 %3488
      %3490 = vrot.lane.b32.xlu0 %v2516, 32
      %v3491 = vpop.permute.xlu0 %3490
      %3492 = vrot.lane.b32.xlu0 %v2517, 32
      %v3493 = vpop.permute.xlu0 %3492
      %3494 = vrot.lane.b32.xlu0 %v2518, 32
      %v3495 = vpop.permute.xlu0 %3494
      %3496 = vrot.lane.b32.xlu0 %v2519, 32
      %v3497 = vpop.permute.xlu0 %3496
      %3498 = vrot.lane.b32.xlu0 %v2520, 32
      %v3499 = vpop.permute.xlu0 %3498
      %3500 = vrot.lane.b32.xlu0 %v2521, 32
      %v3501 = vpop.permute.xlu0 %3500
      %3502 = vrot.lane.b32.xlu0 %v2522, 32
      %v3503 = vpop.permute.xlu0 %3502
      %3504 = vrot.lane.b32.xlu0 %v2523, 32
      %v3505 = vpop.permute.xlu0 %3504
      %3506 = vrot.lane.b32.xlu0 %v2524, 32
      %v3507 = vpop.permute.xlu0 %3506
      %3508 = vrot.lane.b32.xlu0 %v2525, 32
      %v3509 = vpop.permute.xlu0 %3508
      %3510 = vrot.lane.b32.xlu0 %v2526, 32
      %v3511 = vpop.permute.xlu0 %3510
      %3512 = vrot.lane.b32.xlu0 %v2527, 32
      %v3513 = vpop.permute.xlu0 %3512
      %3514 = vrot.lane.b32.xlu0 %v2528, 32
      %v3515 = vpop.permute.xlu0 %3514
      %3516 = vrot.lane.b32.xlu0 %v2529, 32
      %v3517 = vpop.permute.xlu0 %3516
      %3518 = vrot.lane.b32.xlu0 %v2530, 32
      %v3519 = vpop.permute.xlu0 %3518
      %3520 = vrot.lane.b32.xlu0 %v2531, 32
      %v3521 = vpop.permute.xlu0 %3520
      %3522 = vrot.lane.b32.xlu0 %v2532, 32
      %v3523 = vpop.permute.xlu0 %3522
      %3524 = vrot.lane.b32.xlu0 %v2533, 32
      %v3525 = vpop.permute.xlu0 %3524
      %v3558 = vsel %vm225, %v2246, %v2567
      %v3559 = vsel %vm225, %v2247, %v2569
      %v3560 = vsel %vm225, %v2248, %v2571
      %v3561 = vsel %vm225, %v2249, %v2573
      %v3562 = vsel %vm225, %v2250, %v2575
      %v3563 = vsel %vm225, %v2251, %v2577
      %v3564 = vsel %vm225, %v2252, %v2579
      %v3565 = vsel %vm225, %v2253, %v2581
      %v3566 = vsel %vm225, %v2254, %v2583
      %v3567 = vsel %vm225, %v2255, %v2585
      %v3568 = vsel %vm225, %v2256, %v2587
      %v3569 = vsel %vm225, %v2257, %v2589
      %v3570 = vsel %vm225, %v2258, %v2591
      %v3571 = vsel %vm225, %v2259, %v2593
      %v3572 = vsel %vm225, %v2260, %v2595
      %v3573 = vsel %vm225, %v2261, %v2597
      %v3574 = vsel %vm225, %v2262, %v2599
      %v3575 = vsel %vm225, %v2263, %v2601
      %v3576 = vsel %vm225, %v2264, %v2603
      %v3577 = vsel %vm225, %v2265, %v2605
      %v3578 = vsel %vm225, %v2266, %v2607
      %v3579 = vsel %vm225, %v2267, %v2609
      %v3580 = vsel %vm225, %v2268, %v2611
      %v3581 = vsel %vm225, %v2269, %v2613
      %v3582 = vsel %vm225, %v2270, %v2615
      %v3583 = vsel %vm225, %v2271, %v2617
      %v3584 = vsel %vm225, %v2272, %v2619
      %v3585 = vsel %vm225, %v2273, %v2621
      %v3586 = vsel %vm225, %v2274, %v2623
      %v3587 = vsel %vm225, %v2275, %v2625
      %v3588 = vsel %vm225, %v2276, %v2627
      %v3589 = vsel %vm225, %v2277, %v2629
      %v3590 = vsel %vm1696, %v3558, %v2695
      %v3591 = vsel %vm1696, %v3559, %v2697
      %v3592 = vsel %vm1696, %v3560, %v2699
      %v3593 = vsel %vm1696, %v3561, %v2701
      %v3594 = vsel %vm1696, %v3562, %v2703
      %v3595 = vsel %vm1696, %v3563, %v2705
      %v3596 = vsel %vm1696, %v3564, %v2707
      %v3597 = vsel %vm1696, %v3565, %v2709
      %v3598 = vsel %vm1696, %v3566, %v2711
      %v3599 = vsel %vm1696, %v3567, %v2713
      %v3600 = vsel %vm1696, %v3568, %v2715
      %v3601 = vsel %vm1696, %v3569, %v2717
      %v3602 = vsel %vm1696, %v3570, %v2719
      %v3603 = vsel %vm1696, %v3571, %v2721
      %v3604 = vsel %vm1696, %v3572, %v2723
      %v3605 = vsel %vm1696, %v3573, %v2725
      %v3606 = vsel %vm1696, %v3574, %v2727
      %v3607 = vsel %vm1696, %v3575, %v2729
      %v3608 = vsel %vm1696, %v3576, %v2731
      %v3609 = vsel %vm1696, %v3577, %v2733
      %v3610 = vsel %vm1696, %v3578, %v2735
      %v3611 = vsel %vm1696, %v3579, %v2737
      %v3612 = vsel %vm1696, %v3580, %v2739
      %v3613 = vsel %vm1696, %v3581, %v2741
      %v3614 = vsel %vm1696, %v3582, %v2743
      %v3615 = vsel %vm1696, %v3583, %v2745
      %v3616 = vsel %vm1696, %v3584, %v2747
      %v3617 = vsel %vm1696, %v3585, %v2749
      %v3618 = vsel %vm1696, %v3586, %v2751
      %v3619 = vsel %vm1696, %v3587, %v2753
      %v3620 = vsel %vm1696, %v3588, %v2755
      %v3621 = vsel %vm1696, %v3589, %v2757
      %v3622 = vsel %vm1729, %v3590, %v2823
      %v3623 = vsel %vm1729, %v3591, %v2825
      %v3624 = vsel %vm1729, %v3592, %v2827
      %v3625 = vsel %vm1729, %v3593, %v2829
      %v3626 = vsel %vm1729, %v3594, %v2831
      %v3627 = vsel %vm1729, %v3595, %v2833
      %v3628 = vsel %vm1729, %v3596, %v2835
      %v3629 = vsel %vm1729, %v3597, %v2837
      %v3630 = vsel %vm1729, %v3598, %v2839
      %v3631 = vsel %vm1729, %v3599, %v2841
      %v3632 = vsel %vm1729, %v3600, %v2843
      %v3633 = vsel %vm1729, %v3601, %v2845
      %v3634 = vsel %vm1729, %v3602, %v2847
      %v3635 = vsel %vm1729, %v3603, %v2849
      %v3636 = vsel %vm1729, %v3604, %v2851
      %v3637 = vsel %vm1729, %v3605, %v2853
      %v3638 = vsel %vm1729, %v3606, %v2855
      %v3639 = vsel %vm1729, %v3607, %v2857
      %v3640 = vsel %vm1729, %v3608, %v2859
      %v3641 = vsel %vm1729, %v3609, %v2861
      %v3642 = vsel %vm1729, %v3610, %v2863
      %v3643 = vsel %vm1729, %v3611, %v2865
      %v3644 = vsel %vm1729, %v3612, %v2867
      %v3645 = vsel %vm1729, %v3613, %v2869
      %v3646 = vsel %vm1729, %v3614, %v2871
      %v3647 = vsel %vm1729, %v3615, %v2873
      %v3648 = vsel %vm1729, %v3616, %v2875
      %v3649 = vsel %vm1729, %v3617, %v2877
      %v3650 = vsel %vm1729, %v3618, %v2879
      %v3651 = vsel %vm1729, %v3619, %v2881
      %v3652 = vsel %vm1729, %v3620, %v2883
      %v3653 = vsel %vm1729, %v3621, %v2885
      %v3654 = vsel %vm1762, %v3622, %v2951
      %v3655 = vsel %vm1762, %v3623, %v2953
      %v3656 = vsel %vm1762, %v3624, %v2955
      %v3657 = vsel %vm1762, %v3625, %v2957
      %v3658 = vsel %vm1762, %v3626, %v2959
      %v3659 = vsel %vm1762, %v3627, %v2961
      %v3660 = vsel %vm1762, %v3628, %v2963
      %v3661 = vsel %vm1762, %v3629, %v2965
      %v3662 = vsel %vm1762, %v3630, %v2967
      %v3663 = vsel %vm1762, %v3631, %v2969
      %v3664 = vsel %vm1762, %v3632, %v2971
      %v3665 = vsel %vm1762, %v3633, %v2973
      %v3666 = vsel %vm1762, %v3634, %v2975
      %v3667 = vsel %vm1762, %v3635, %v2977
      %v3668 = vsel %vm1762, %v3636, %v2979
      %v3669 = vsel %vm1762, %v3637, %v2981
      %v3670 = vsel %vm1762, %v3638, %v2983
      %v3671 = vsel %vm1762, %v3639, %v2985
      %v3672 = vsel %vm1762, %v3640, %v2987
      %v3673 = vsel %vm1762, %v3641, %v2989
      %v3674 = vsel %vm1762, %v3642, %v2991
      %v3675 = vsel %vm1762, %v3643, %v2993
      %v3676 = vsel %vm1762, %v3644, %v2995
      %v3677 = vsel %vm1762, %v3645, %v2997
      %v3678 = vsel %vm1762, %v3646, %v2999
      %v3679 = vsel %vm1762, %v3647, %v3001
      %v3680 = vsel %vm1762, %v3648, %v3003
      %v3681 = vsel %vm1762, %v3649, %v3005
      %v3682 = vsel %vm1762, %v3650, %v3007
      %v3683 = vsel %vm1762, %v3651, %v3009
      %v3684 = vsel %vm1762, %v3652, %v3011
      %v3685 = vsel %vm1762, %v3653, %v3013
      %v3686 = vsel %vm1795, %v3654, %v3079
      %v3687 = vsel %vm1795, %v3655, %v3081
      %v3688 = vsel %vm1795, %v3656, %v3083
      %v3689 = vsel %vm1795, %v3657, %v3085
      %v3690 = vsel %vm1795, %v3658, %v3087
      %v3691 = vsel %vm1795, %v3659, %v3089
      %v3692 = vsel %vm1795, %v3660, %v3091
      %v3693 = vsel %vm1795, %v3661, %v3093
      %v3694 = vsel %vm1795, %v3662, %v3095
      %v3695 = vsel %vm1795, %v3663, %v3097
      %v3696 = vsel %vm1795, %v3664, %v3099
      %v3697 = vsel %vm1795, %v3665, %v3101
      %v3698 = vsel %vm1795, %v3666, %v3103
      %v3699 = vsel %vm1795, %v3667, %v3105
      %v3700 = vsel %vm1795, %v3668, %v3107
      %v3701 = vsel %vm1795, %v3669, %v3109
      %v3702 = vsel %vm1795, %v3670, %v3111
      %v3703 = vsel %vm1795, %v3671, %v3113
      %v3704 = vsel %vm1795, %v3672, %v3115
      %v3705 = vsel %vm1795, %v3673, %v3117
      %v3706 = vsel %vm1795, %v3674, %v3119
      %v3707 = vsel %vm1795, %v3675, %v3121
      %v3708 = vsel %vm1795, %v3676, %v3123
      %v3709 = vsel %vm1795, %v3677, %v3125
      %v3710 = vsel %vm1795, %v3678, %v3127
      %v3711 = vsel %vm1795, %v3679, %v3129
      %v3712 = vsel %vm1795, %v3680, %v3131
      %v3713 = vsel %vm1795, %v3681, %v3133
      %v3714 = vsel %vm1795, %v3682, %v3135
      %v3715 = vsel %vm1795, %v3683, %v3137
      %v3716 = vsel %vm1795, %v3684, %v3139
      %v3717 = vsel %vm1795, %v3685, %v3141
      %v3718 = vsel %vm1828, %v3686, %v3207
      %v3719 = vsel %vm1828, %v3687, %v3209
      %v3720 = vsel %vm1828, %v3688, %v3211
      %v3721 = vsel %vm1828, %v3689, %v3213
      %v3722 = vsel %vm1828, %v3690, %v3215
      %v3723 = vsel %vm1828, %v3691, %v3217
      %v3724 = vsel %vm1828, %v3692, %v3219
      %v3725 = vsel %vm1828, %v3693, %v3221
      %v3726 = vsel %vm1828, %v3694, %v3223
      %v3727 = vsel %vm1828, %v3695, %v3225
      %v3728 = vsel %vm1828, %v3696, %v3227
      %v3729 = vsel %vm1828, %v3697, %v3229
      %v3730 = vsel %vm1828, %v3698, %v3231
      %v3731 = vsel %vm1828, %v3699, %v3233
      %v3732 = vsel %vm1828, %v3700, %v3235
      %v3733 = vsel %vm1828, %v3701, %v3237
      %v3734 = vsel %vm1828, %v3702, %v3239
      %v3735 = vsel %vm1828, %v3703, %v3241
      %v3736 = vsel %vm1828, %v3704, %v3243
      %v3737 = vsel %vm1828, %v3705, %v3245
      %v3738 = vsel %vm1828, %v3706, %v3247
      %v3739 = vsel %vm1828, %v3707, %v3249
      %v3740 = vsel %vm1828, %v3708, %v3251
      %v3741 = vsel %vm1828, %v3709, %v3253
      %v3742 = vsel %vm1828, %v3710, %v3255
      %v3743 = vsel %vm1828, %v3711, %v3257
      %v3744 = vsel %vm1828, %v3712, %v3259
      %v3745 = vsel %vm1828, %v3713, %v3261
      %v3746 = vsel %vm1828, %v3714, %v3263
      %v3747 = vsel %vm1828, %v3715, %v3265
      %v3748 = vsel %vm1828, %v3716, %v3267
      %v3749 = vsel %vm1828, %v3717, %v3269
      %v3750 = vsel %vm1861, %v3718, %v3335
      %v3751 = vsel %vm1861, %v3719, %v3337
      %v3752 = vsel %vm1861, %v3720, %v3339
      %v3753 = vsel %vm1861, %v3721, %v3341
      %v3754 = vsel %vm1861, %v3722, %v3343
      %v3755 = vsel %vm1861, %v3723, %v3345
      %v3756 = vsel %vm1861, %v3724, %v3347
      %v3757 = vsel %vm1861, %v3725, %v3349
      %v3758 = vsel %vm1861, %v3726, %v3351
      %v3759 = vsel %vm1861, %v3727, %v3353
      %v3760 = vsel %vm1861, %v3728, %v3355
      %v3761 = vsel %vm1861, %v3729, %v3357
      %v3762 = vsel %vm1861, %v3730, %v3359
      %v3763 = vsel %vm1861, %v3731, %v3361
      %v3764 = vsel %vm1861, %v3732, %v3363
      %v3765 = vsel %vm1861, %v3733, %v3365
      %v3766 = vsel %vm1861, %v3734, %v3367
      %v3767 = vsel %vm1861, %v3735, %v3369
      %v3768 = vsel %vm1861, %v3736, %v3371
      %v3769 = vsel %vm1861, %v3737, %v3373
      %v3770 = vsel %vm1861, %v3738, %v3375
      %v3771 = vsel %vm1861, %v3739, %v3377
      %v3772 = vsel %vm1861, %v3740, %v3379
      %v3773 = vsel %vm1861, %v3741, %v3381
      %v3774 = vsel %vm1861, %v3742, %v3383
      %v3775 = vsel %vm1861, %v3743, %v3385
      %v3776 = vsel %vm1861, %v3744, %v3387
      %v3777 = vsel %vm1861, %v3745, %v3389
      %v3778 = vsel %vm1861, %v3746, %v3391
      %v3779 = vsel %vm1861, %v3747, %v3393
      %v3780 = vsel %vm1861, %v3748, %v3395
      %v3781 = vsel %vm1861, %v3749, %v3397
      %v3782 = vsel %vm1894, %v3750, %v3463
      %v3783 = vsel %vm1894, %v3751, %v3465
      %v3784 = vsel %vm1894, %v3752, %v3467
      %v3785 = vsel %vm1894, %v3753, %v3469
      %v3786 = vsel %vm1894, %v3754, %v3471
      %v3787 = vsel %vm1894, %v3755, %v3473
      %v3788 = vsel %vm1894, %v3756, %v3475
      %v3789 = vsel %vm1894, %v3757, %v3477
      %v3790 = vsel %vm1894, %v3758, %v3479
      %v3791 = vsel %vm1894, %v3759, %v3481
      %v3792 = vsel %vm1894, %v3760, %v3483
      %v3793 = vsel %vm1894, %v3761, %v3485
      %v3794 = vsel %vm1894, %v3762, %v3487
      %v3795 = vsel %vm1894, %v3763, %v3489
      %v3796 = vsel %vm1894, %v3764, %v3491
      %v3797 = vsel %vm1894, %v3765, %v3493
      %v3798 = vsel %vm1894, %v3766, %v3495
      %v3799 = vsel %vm1894, %v3767, %v3497
      %v3800 = vsel %vm1894, %v3768, %v3499
      %v3801 = vsel %vm1894, %v3769, %v3501
      %v3802 = vsel %vm1894, %v3770, %v3503
      %v3803 = vsel %vm1894, %v3771, %v3505
      %v3804 = vsel %vm1894, %v3772, %v3507
      %v3805 = vsel %vm1894, %v3773, %v3509
      %v3806 = vsel %vm1894, %v3774, %v3511
      %v3807 = vsel %vm1894, %v3775, %v3513
      %v3808 = vsel %vm1894, %v3776, %v3515
      %v3809 = vsel %vm1894, %v3777, %v3517
      %v3810 = vsel %vm1894, %v3778, %v3519
      %v3811 = vsel %vm1894, %v3779, %v3521
      %v3812 = vsel %vm1894, %v3780, %v3523
      %v3813 = vsel %vm1894, %v3781, %v3525
      %v3814 = vld [vmem:[%s4] sm:$0x1]
      %v3816 = vperm.slane %v3814, 0
      %v3819 = vsel %vm1931, %v3782, 0
      %v3822 = vsel %vm1931, %v3783, 0
      %v3825 = vsel %vm1931, %v3784, 0
      %v3828 = vsel %vm1931, %v3785, 0
      %v3831 = vsel %vm1931, %v3786, 0
      %v3834 = vsel %vm1931, %v3787, 0
      %v3837 = vsel %vm1931, %v3788, 0
      %v3840 = vsel %vm1931, %v3789, 0
      %v3843 = vsel %vm1931, %v3790, 0
      %v3846 = vsel %vm1931, %v3791, 0
      %v3849 = vsel %vm1931, %v3792, 0
      %v3852 = vsel %vm1931, %v3793, 0
      %v3855 = vsel %vm1931, %v3794, 0
      %v3858 = vsel %vm1931, %v3795, 0
      %v3861 = vsel %vm1931, %v3796, 0
      %v3864 = vsel %vm1931, %v3797, 0
      %v3867 = vsel %vm1931, %v3798, 0
      %v3870 = vsel %vm1931, %v3799, 0
      %v3873 = vsel %vm1931, %v3800, 0
      %v3876 = vsel %vm1931, %v3801, 0
      %v3879 = vsel %vm1931, %v3802, 0
      %v3882 = vsel %vm1931, %v3803, 0
      %v3885 = vsel %vm1931, %v3804, 0
      %v3888 = vsel %vm1931, %v3805, 0
      %v3891 = vsel %vm1931, %v3806, 0
      %v3894 = vsel %vm1931, %v3807, 0
      %v3897 = vsel %vm1931, %v3808, 0
      %v3900 = vsel %vm1931, %v3809, 0
      %v3903 = vsel %vm1931, %v3810, 0
      %v3906 = vsel %vm1931, %v3811, 0
      %v3909 = vsel %vm1931, %v3812, 0
      %v3912 = vsel %vm1931, %v3813, 0
      %v3915 = vsel %vm2028, %v2245, 0
      %3917 = vmatpush.msra.mxu0 0.0
      %3918 = vmatpush.msra.mxu0 0.0
      %3919 = vmatpush.msra.mxu0 0.0
      %3920 = vmatpush.msra.mxu0 0.0
      %3921 = vmatpush.msra.mxu0 0.0
      %3922 = vmatpush.msra.mxu0 0.0
      %3923 = vmatpush.msra.mxu0 0.0
      %3924 = vmatpush.msra.mxu0 0.0
      %3925 = vmatpush.msra.mxu0 0.0
      %3926 = vmatpush.msra.mxu0 0.0
      %3927 = vmatpush.msra.mxu0 0.0
      %3928 = vmatpush.msra.mxu0 %v3915
      %3929 = vmatpush.msra.mxu0 %v2244
      %3930 = vmatpush.msra.mxu0 %v2243
      %3931 = vmatpush.msra.mxu0 %v2242
      %3932 = vmatpush.msra.mxu0 %v2241
      %3933 = vmatmul.f32.gmra.mxu0 %v3819
      %v3934 = vpop.f32.mrf.mxu0
      %v3935 = vadd.f32 %v3816, %v3934
      %3936 = vmatmul.f32.gmra.mxu0 %v3822
      %v3937 = vpop.f32.mrf.mxu0
      %v3938 = vadd.f32 %v3816, %v3937
      %3939 = vmatmul.f32.gmra.mxu0 %v3825
      %v3940 = vpop.f32.mrf.mxu0
      %v3941 = vadd.f32 %v3816, %v3940
      %3942 = vmatmul.f32.gmra.mxu0 %v3828
      %v3943 = vpop.f32.mrf.mxu0
      %v3944 = vadd.f32 %v3816, %v3943
      %3945 = vmatmul.f32.gmra.mxu0 %v3831
      %v3946 = vpop.f32.mrf.mxu0
      %v3947 = vadd.f32 %v3816, %v3946
      %3948 = vmatmul.f32.gmra.mxu0 %v3834
      %v3949 = vpop.f32.mrf.mxu0
      %v3950 = vadd.f32 %v3816, %v3949
      %3951 = vmatmul.f32.gmra.mxu0 %v3837
      %v3952 = vpop.f32.mrf.mxu0
      %v3953 = vadd.f32 %v3816, %v3952
      %3954 = vmatmul.f32.gmra.mxu0 %v3840
      %v3955 = vpop.f32.mrf.mxu0
      %v3956 = vadd.f32 %v3816, %v3955
      %3957 = vmatmul.f32.gmra.mxu0 %v3843
      %v3958 = vpop.f32.mrf.mxu0
      %v3959 = vadd.f32 %v3816, %v3958
      %3960 = vmatmul.f32.gmra.mxu0 %v3846
      %v3961 = vpop.f32.mrf.mxu0
      %v3962 = vadd.f32 %v3816, %v3961
      %3963 = vmatmul.f32.gmra.mxu0 %v3849
      %v3964 = vpop.f32.mrf.mxu0
      %v3965 = vadd.f32 %v3816, %v3964
      %3966 = vmatmul.f32.gmra.mxu0 %v3852
      %v3967 = vpop.f32.mrf.mxu0
      %v3968 = vadd.f32 %v3816, %v3967
      %3969 = vmatmul.f32.gmra.mxu0 %v3855
      %v3970 = vpop.f32.mrf.mxu0
      %v3971 = vadd.f32 %v3816, %v3970
      %3972 = vmatmul.f32.gmra.mxu0 %v3858
      %v3973 = vpop.f32.mrf.mxu0
      %v3974 = vadd.f32 %v3816, %v3973
      %3975 = vmatmul.f32.gmra.mxu0 %v3861
      %v3976 = vpop.f32.mrf.mxu0
      %v3977 = vadd.f32 %v3816, %v3976
      %3978 = vmatmul.f32.gmra.mxu0 %v3864
      %v3979 = vpop.f32.mrf.mxu0
      %v3980 = vadd.f32 %v3816, %v3979
      %3981 = vmatmul.f32.gmra.mxu0 %v3867
      %v3982 = vpop.f32.mrf.mxu0
      %v3983 = vadd.f32 %v3816, %v3982
      %3984 = vmatmul.f32.gmra.mxu0 %v3870
      %v3985 = vpop.f32.mrf.mxu0
      %v3986 = vadd.f32 %v3816, %v3985
      %3987 = vmatmul.f32.gmra.mxu0 %v3873
      %v3988 = vpop.f32.mrf.mxu0
      %v3989 = vadd.f32 %v3816, %v3988
      %3990 = vmatmul.f32.gmra.mxu0 %v3876
      %v3991 = vpop.f32.mrf.mxu0
      %v3992 = vadd.f32 %v3816, %v3991
      %3993 = vmatmul.f32.gmra.mxu0 %v3879
      %v3994 = vpop.f32.mrf.mxu0
      %v3995 = vadd.f32 %v3816, %v3994
      %3996 = vmatmul.f32.gmra.mxu0 %v3882
      %v3997 = vpop.f32.mrf.mxu0
      %v3998 = vadd.f32 %v3816, %v3997
      %3999 = vmatmul.f32.gmra.mxu0 %v3885
      %v4000 = vpop.f32.mrf.mxu0
      %v4001 = vadd.f32 %v3816, %v4000
      %4002 = vmatmul.f32.gmra.mxu0 %v3888
      %v4003 = vpop.f32.mrf.mxu0
      %v4004 = vadd.f32 %v3816, %v4003
      %4005 = vmatmul.f32.gmra.mxu0 %v3891
      %v4006 = vpop.f32.mrf.mxu0
      %v4007 = vadd.f32 %v3816, %v4006
      %4008 = vmatmul.f32.gmra.mxu0 %v3894
      %v4009 = vpop.f32.mrf.mxu0
      %v4010 = vadd.f32 %v3816, %v4009
      %4011 = vmatmul.f32.gmra.mxu0 %v3897
      %v4012 = vpop.f32.mrf.mxu0
      %v4013 = vadd.f32 %v3816, %v4012
      %4014 = vmatmul.f32.gmra.mxu0 %v3900
      %v4015 = vpop.f32.mrf.mxu0
      %v4016 = vadd.f32 %v3816, %v4015
      %4017 = vmatmul.f32.gmra.mxu0 %v3903
      %v4018 = vpop.f32.mrf.mxu0
      %v4019 = vadd.f32 %v3816, %v4018
      %4020 = vmatmul.f32.gmra.mxu0 %v3906
      %v4021 = vpop.f32.mrf.mxu0
      %v4022 = vadd.f32 %v3816, %v4021
      %4023 = vmatmul.f32.gmra.mxu0 %v3909
      %v4024 = vpop.f32.mrf.mxu0
      %v4025 = vadd.f32 %v3816, %v4024
      %4026 = vmatmul.f32.gmra.mxu0 %v3912
      %v4027 = vpop.f32.mrf.mxu0
      %v4028 = vadd.f32 %v3816, %v4027
      %4029 = vdwg.mxu0
      %v4030 = vadd.f32 %v3935, %v281
      %v4031 = vadd.f32 %v3938, %v282
      %v4032 = vadd.f32 %v3941, %v283
      %v4033 = vadd.f32 %v3944, %v284
      %v4034 = vadd.f32 %v3947, %v285
      %v4035 = vadd.f32 %v3950, %v286
      %v4036 = vadd.f32 %v3953, %v287
      %v4037 = vadd.f32 %v3956, %v288
      %v4038 = vadd.f32 %v3959, %v289
      %v4039 = vadd.f32 %v3962, %v290
      %v4040 = vadd.f32 %v3965, %v291
      %v4041 = vadd.f32 %v3968, %v292
      %v4042 = vadd.f32 %v3971, %v293
      %v4043 = vadd.f32 %v3974, %v294
      %v4044 = vadd.f32 %v3977, %v295
      %v4045 = vadd.f32 %v3980, %v296
      %v4046 = vadd.f32 %v3983, %v297
      %v4047 = vadd.f32 %v3986, %v298
      %v4048 = vadd.f32 %v3989, %v299
      %v4049 = vadd.f32 %v3992, %v300
      %v4050 = vadd.f32 %v3995, %v301
      %v4051 = vadd.f32 %v3998, %v302
      %v4052 = vadd.f32 %v4001, %v303
      %v4053 = vadd.f32 %v4004, %v304
      %v4054 = vadd.f32 %v4007, %v305
      %v4055 = vadd.f32 %v4010, %v306
      %v4056 = vadd.f32 %v4013, %v307
      %v4057 = vadd.f32 %v4016, %v308
      %v4058 = vadd.f32 %v4019, %v309
      %v4059 = vadd.f32 %v4022, %v310
      %v4060 = vadd.f32 %v4025, %v311
      %v4061 = vadd.f32 %v4028, %v312
      %v4062 = vmax.f32 %v4030, 0.0
      %v4063 = vmax.f32 %v4031, 0.0
      %v4064 = vmax.f32 %v4032, 0.0
      %v4065 = vmax.f32 %v4033, 0.0
      %v4066 = vmax.f32 %v4034, 0.0
      %v4067 = vmax.f32 %v4035, 0.0
      %v4068 = vmax.f32 %v4036, 0.0
      %v4069 = vmax.f32 %v4037, 0.0
      %v4070 = vmax.f32 %v4038, 0.0
      %v4071 = vmax.f32 %v4039, 0.0
      %v4072 = vmax.f32 %v4040, 0.0
      %v4073 = vmax.f32 %v4041, 0.0
      %v4074 = vmax.f32 %v4042, 0.0
      %v4075 = vmax.f32 %v4043, 0.0
      %v4076 = vmax.f32 %v4044, 0.0
      %v4077 = vmax.f32 %v4045, 0.0
      %v4078 = vmax.f32 %v4046, 0.0
      %v4079 = vmax.f32 %v4047, 0.0
      %v4080 = vmax.f32 %v4048, 0.0
      %v4081 = vmax.f32 %v4049, 0.0
      %v4082 = vmax.f32 %v4050, 0.0
      %v4083 = vmax.f32 %v4051, 0.0
      %v4084 = vmax.f32 %v4052, 0.0
      %v4085 = vmax.f32 %v4053, 0.0
      %v4086 = vmax.f32 %v4054, 0.0
      %v4087 = vmax.f32 %v4055, 0.0
      %v4088 = vmax.f32 %v4056, 0.0
      %v4089 = vmax.f32 %v4057, 0.0
      %v4090 = vmax.f32 %v4058, 0.0
      %v4091 = vmax.f32 %v4059, 0.0
      %v4092 = vmax.f32 %v4060, 0.0
      %v4093 = vmax.f32 %v4061, 0.0
      %v4094 = vmin.f32 %v4062, 20.0
      %v4095 = vmin.f32 %v4063, 20.0
      %v4096 = vmin.f32 %v4064, 20.0
      %v4097 = vmin.f32 %v4065, 20.0
      %v4098 = vmin.f32 %v4066, 20.0
      %v4099 = vmin.f32 %v4067, 20.0
      %v4100 = vmin.f32 %v4068, 20.0
      %v4101 = vmin.f32 %v4069, 20.0
      %v4102 = vmin.f32 %v4070, 20.0
      %v4103 = vmin.f32 %v4071, 20.0
      %v4104 = vmin.f32 %v4072, 20.0
      %v4105 = vmin.f32 %v4073, 20.0
      %v4106 = vmin.f32 %v4074, 20.0
      %v4107 = vmin.f32 %v4075, 20.0
      %v4108 = vmin.f32 %v4076, 20.0
      %v4109 = vmin.f32 %v4077, 20.0
      %v4110 = vmin.f32 %v4078, 20.0
      %v4111 = vmin.f32 %v4079, 20.0
      %v4112 = vmin.f32 %v4080, 20.0
      %v4113 = vmin.f32 %v4081, 20.0
      %v4114 = vmin.f32 %v4082, 20.0
      %v4115 = vmin.f32 %v4083, 20.0
      %v4116 = vmin.f32 %v4084, 20.0
      %v4117 = vmin.f32 %v4085, 20.0
      %v4118 = vmin.f32 %v4086, 20.0
      %v4119 = vmin.f32 %v4087, 20.0
      %v4120 = vmin.f32 %v4088, 20.0
      %v4121 = vmin.f32 %v4089, 20.0
      %v4122 = vmin.f32 %v4090, 20.0
      %v4123 = vmin.f32 %v4091, 20.0
      %v4124 = vmin.f32 %v4092, 20.0
      %v4125 = vmin.f32 %v4093, 20.0
      %4126 = vst.msk [vmem:[%s224] sm:$0xff] %vm225, %v4094
      %4127 = vst.msk [vmem:[%s224 + $0x8] sm:$0xff] %vm225, %v4095
      %4128 = vst.msk [vmem:[%s224 + $0x10] sm:$0xff] %vm225, %v4096
      %4129 = vst.msk [vmem:[%s224 + $0x18] sm:$0xff] %vm225, %v4097
      %4130 = vst.msk [vmem:[%s224 + $0x20] sm:$0xff] %vm225, %v4098
      %4131 = vst.msk [vmem:[%s224 + $0x28] sm:$0xff] %vm225, %v4099
      %4132 = vst.msk [vmem:[%s224 + $0x30] sm:$0xff] %vm225, %v4100
      %4133 = vst.msk [vmem:[%s224 + $0x38] sm:$0xff] %vm225, %v4101
      %4134 = vst.msk [vmem:[%s224 + $0x40] sm:$0xff] %vm225, %v4102
      %4135 = vst.msk [vmem:[%s224 + $0x48] sm:$0xff] %vm225, %v4103
      %4136 = vst.msk [vmem:[%s224 + $0x50] sm:$0xff] %vm225, %v4104
      %4137 = vst.msk [vmem:[%s224 + $0x58] sm:$0xff] %vm225, %v4105
      %4138 = vst.msk [vmem:[%s224 + $0x60] sm:$0xff] %vm225, %v4106
      %4139 = vst.msk [vmem:[%s224 + $0x68] sm:$0xff] %vm225, %v4107
      %4140 = vst.msk [vmem:[%s224 + $0x70] sm:$0xff] %vm225, %v4108
      %4141 = vst.msk [vmem:[%s224 + $0x78] sm:$0xff] %vm225, %v4109
      %4142 = vst.msk [vmem:[%s224 + $0x80] sm:$0xff] %vm225, %v4110
      %4143 = vst.msk [vmem:[%s224 + $0x88] sm:$0xff] %vm225, %v4111
      %4144 = vst.msk [vmem:[%s224 + $0x90] sm:$0xff] %vm225, %v4112
      %4145 = vst.msk [vmem:[%s224 + $0x98] sm:$0xff] %vm225, %v4113
      %4146 = vst.msk [vmem:[%s224 + $0xa0] sm:$0xff] %vm225, %v4114
      %4147 = vst.msk [vmem:[%s224 + $0xa8] sm:$0xff] %vm225, %v4115
      %4148 = vst.msk [vmem:[%s224 + $0xb0] sm:$0xff] %vm225, %v4116
      %4149 = vst.msk [vmem:[%s224 + $0xb8] sm:$0xff] %vm225, %v4117
      %4150 = vst.msk [vmem:[%s224 + $0xc0] sm:$0xff] %vm225, %v4118
      %4151 = vst.msk [vmem:[%s224 + $0xc8] sm:$0xff] %vm225, %v4119
      %4152 = vst.msk [vmem:[%s224 + $0xd0] sm:$0xff] %vm225, %v4120
      %4153 = vst.msk [vmem:[%s224 + $0xd8] sm:$0xff] %vm225, %v4121
      %4154 = vst.msk [vmem:[%s224 + $0xe0] sm:$0xff] %vm225, %v4122
      %4155 = vst.msk [vmem:[%s224 + $0xe8] sm:$0xff] %vm225, %v4123
      %4156 = vst.msk [vmem:[%s224 + $0xf0] sm:$0xff] %vm225, %v4124
      %4157 = vst.msk [vmem:[%s224 + $0xf8] sm:$0xff] %vm225, %v4125
      %p4158 = scmp.lt.s32.totalorder %s16, 1
      %s4159 = scalar_select %p4158, %s16, 1
      %s4160 = smul.addr %s4159, 32
      %s4161 = smul.addr %s4160, 8
      %s4162 = scalar_lea.vmem %s5, %s4161
      // Predicated region
      $region41: #{tpu_custom_call.1} parent=39 // pred_check
        %p4163 = pneg %p144
      $region42: #{tpu_custom_call.1} parent=39 // pred_check_branch
        %4165 = sbr.rel (%p4163) target = $region44
      $region43: #{tpu_custom_call.1} parent=39 // pred_region
        _
      $region44: #{tpu_custom_call.1} parent=39 // pred_fallthru
        _
    $region40: #{tpu_custom_call.1} parent=5 // pred_fallthru
      _
    %p4166 = scmp.le.s32.totalorder 2, %s11
    // Predicated region
    $region45: #{tpu_custom_call.1} parent=5 // pred_check
      %p4167 = pneg %p4166
    $region46: #{tpu_custom_call.1} parent=5 // pred_check_branch
      %4169 = sbr.rel (%p4167) target = $region48
    $region47: #{tpu_custom_call.1} parent=5 // pred_region
      %s4170 = ssub.s32 %s11, 2
      // Predicated region
      $region49: #{tpu_custom_call.1} parent=47 // pred_check
        %p4171 = pneg %p150
      $region50: #{tpu_custom_call.1} parent=47 // pred_check_branch
        %4173 = sbr.rel (%p4171) target = $region52
      $region51: #{tpu_custom_call.1} parent=47 // pred_region
        %p4174 = scmp.lt.s32.totalorder %s17, 1
        %s4175 = scalar_select %p4174, %s17, 1
        %s4176 = smul.addr %s4175, 32
        %s4177 = smul.addr %s4176, 8
        %s4178 = scalar_lea.vmem %s5, %s4177
      $region52: #{tpu_custom_call.1} parent=47 // pred_fallthru
        _
    $region48: #{tpu_custom_call.1} parent=5 // pred_fallthru
      _
  $region6: #{tpu_custom_call.1} parent=0 // loop_footer
    %s15 = sadd.s32 1, %s11
  $region7: #{tpu_custom_call.1} parent=0 // loop_footer_branch
    %10 = sbr.rel target = $region3
  $region8: #{tpu_custom_call.1} parent=0 // loop_exit
    _

</llo_original>
